<compile_context>
chip_gen: v7x
topology: tpu7x:2x2x1
jax: 0.10.0
libtpu: 0.0.40
codegen_flags: <defaults>
</compile_context>

<pallas_src>
import functools

import jax
import jax.numpy as jnp
from jax.experimental import pallas as pl
from jax.experimental.pallas import tpu as pltpu

EPS = 1e-5          # nn.InstanceNorm2d default eps
NEG_SLOPE = 0.2     # LeakyReLU negative slope

_DECONV_CFG = [
    # (cin, cout, kernel, stride, pad)
    (128, 32, 4, 2, 0),
    (32, 16, 4, 2, 0),
    (16, 8, 4, 2, 0),
    (8, 3, 4, 2, 1),
]


# ---------------------------------------------------------------------------
# Pallas kernels
# ---------------------------------------------------------------------------
def _fc_deconv1_kernel(s_ref, c_ref, ws_ref, wc_ref, bs_ref, bc_ref,
                       w1s_ref, w1c_ref, pool_ref, bcast_ref, o_ref):
    """FC(style)+FC(class)+LeakyReLU + folded deconv-1 + InstanceNorm + LeakyReLU.

    s_ref:(N,SD) bf16, c_ref:(N,CD) bf16, ws/wc:(SD/CD,256) bf16, bs/bc:(1,256) f32,
    w1s/w1c:(256,1152) bf16 (dense layer-1 map split into style/class halves),
    pool:(1152,32) f32 (per-channel mean pooling), bcast:(32,1152) f32,
    o_ref:(N,1152) bf16  (NCHW-flat (32,6,6) per sample).
    """
    ys = jnp.dot(s_ref[...], ws_ref[...], preferred_element_type=jnp.float32) + bs_ref[...]
    yc = jnp.dot(c_ref[...], wc_ref[...], preferred_element_type=jnp.float32) + bc_ref[...]
    ys = jnp.where(ys >= 0.0, ys, NEG_SLOPE * ys)
    yc = jnp.where(yc >= 0.0, yc, NEG_SLOPE * yc)
    # Layer-1 ConvTranspose folded as a dense matmul (2x2 input == full receptive field).
    # Its bias cancels exactly under the InstanceNorm mean subtraction -> omitted.
    h = (jnp.dot(ys.astype(jnp.bfloat16), w1s_ref[...], preferred_element_type=jnp.float32)
         + jnp.dot(yc.astype(jnp.bfloat16), w1c_ref[...], preferred_element_type=jnp.float32))
    # InstanceNorm over each 36-wide per-channel lane segment via pooling matmuls.
    mean = jnp.dot(h, pool_ref[...], preferred_element_type=jnp.float32)       # (N, 32)
    msq = jnp.dot(h * h, pool_ref[...], preferred_element_type=jnp.float32)    # (N, 32)
    var = jnp.maximum(msq - mean * mean, 0.0)
    inv = jax.lax.rsqrt(var + EPS)
    meanb = jnp.dot(mean, bcast_ref[...], preferred_element_type=jnp.float32)  # (N, 1152)
    invb = jnp.dot(inv, bcast_ref[...], preferred_element_type=jnp.float32)    # (N, 1152)
    yn = (h - meanb) * invb
    o_ref[...] = jnp.where(yn >= 0.0, yn, NEG_SLOPE * yn).astype(o_ref.dtype)


def _phase_deconv_in_lrelu_kernel(p_ref, w_ref, o_ref, *, nb, ppad, p_real, cout):
    """4-phase transposed conv (one wide matmul) + InstanceNorm + LeakyReLU.

    p_ref: (1, Cin*4, nb*ppad) bf16 - lane-concatenated per-sample im2col patches.
    w_ref: (4*Cout, Cin*4)     bf16 - phase-stacked 2x2 sub-kernels.
    o_ref: (1, 4*Cout, nb*ppad) bf16 - phase-planar output (conv bias omitted: cancels).
    """
    y = jnp.dot(w_ref[...], p_ref[0], preferred_element_type=jnp.float32)  # (4*Cout, nb*ppad)
    inv_cnt = 1.0 / (4.0 * p_real)
    for i in range(nb):                                     # static, small
        yi = y[:, i * ppad:(i + 1) * ppad]                  # lane-aligned slice (4*Cout, ppad)
        parts = [yi[ph * cout:(ph + 1) * cout, :] for ph in range(4)]
        # Single-pass stats in f32; zero-padded lanes contribute exactly 0 to the sums.
        s1 = sum(jnp.sum(p_, axis=1, keepdims=True) for p_ in parts)        # (Cout, 1)
        s2 = sum(jnp.sum(p_ * p_, axis=1, keepdims=True) for p_ in parts)   # (Cout, 1)
        mean = s1 * inv_cnt
        var = jnp.maximum(s2 * inv_cnt - mean * mean, 0.0)
        inv = jax.lax.rsqrt(var + EPS)
        outs = []
        for ph in range(4):
            yn = (parts[ph] - mean) * inv
            outs.append(jnp.where(yn >= 0.0, yn, NEG_SLOPE * yn))
        o_ref[0, :, i * ppad:(i + 1) * ppad] = (
            jnp.concatenate(outs, axis=0).astype(o_ref.dtype))


def _phase_deconv_bias_sigmoid_kernel(p_ref, w_ref, b_ref, o_ref):
    """Final 4-phase transposed conv + bias + sigmoid (one wide matmul)."""
    y = jnp.dot(w_ref[...], p_ref[0], preferred_element_type=jnp.float32) + b_ref[...]
    o_ref[0] = pl.reciprocal(1.0 + jnp.exp(-y), approx=True)


# ---------------------------------------------------------------------------
# Wrappers
# ---------------------------------------------------------------------------
def fc_deconv1(style_emb, class_emb, params):
    """style (N,SD), class (N,CD) -> (N, 32, 6, 6) bf16 (post IN + LeakyReLU)."""
    n, sd = style_emb.shape
    cd = class_emb.shape[1]
    w1 = params["deconvs"][0][0]              # (128, 32, 4, 4) PyTorch ConvTranspose layout
    cin, cout = w1.shape[0], w1.shape[1]      # 128, 32 ; output spatial is 6x6

    # Dense layer-1 map: row = ci*4 + ih*2 + iw (matches the (N,128,2,2) view of the concat),
    # col = co*36 + oy*6 + ox.  y[co,oy,ox] = sum x[ci,ih,iw] * w1[ci,co,oy-2ih,ox-2iw].
    mats = []
    for ih in range(2):
        for iw in range(2):
            mats.append(jnp.pad(
                w1, ((0, 0), (0, 0), (2 * ih, 2 - 2 * ih), (2 * iw, 2 - 2 * iw))))
    w1_dense = (jnp.stack(mats, axis=1)                    # (Cin, 4, Cout, 6, 6)
                .reshape(cin * 4, cout * 36)
                .astype(jnp.bfloat16))                     # (512, 1152)
    w1s, w1c = w1_dense[:256], w1_dense[256:]

    # Per-channel (36-wide) pooling / broadcast matrices for the InstanceNorm stats.
    ch_of = jnp.arange(cout * 36) // 36
    bcast = (jnp.arange(cout)[:, None] == ch_of[None, :]).astype(jnp.float32)  # (32, 1152)
    pool = bcast.T / 36.0                                                       # (1152, 32)

    ws = params["fc_style_w"].T.astype(jnp.bfloat16)       # (SD, 256)
    wc = params["fc_class_w"].T.astype(jnp.bfloat16)       # (CD, 256)
    bs = params["fc_style_b"].reshape(1, 256).astype(jnp.float32)
    bc = params["fc_class_b"].reshape(1, 256).astype(jnp.float32)

    out = pl.pallas_call(
        _fc_deconv1_kernel,
        out_shape=jax.ShapeDtypeStruct((n, cout * 36), jnp.bfloat16),
        in_specs=[
            pl.BlockSpec((n, sd), lambda: (0, 0)),
            pl.BlockSpec((n, cd), lambda: (0, 0)),
            pl.BlockSpec((sd, 256), lambda: (0, 0)),
            pl.BlockSpec((cd, 256), lambda: (0, 0)),
            pl.BlockSpec((1, 256), lambda: (0, 0)),
            pl.BlockSpec((1, 256), lambda: (0, 0)),
            pl.BlockSpec((256, cout * 36), lambda: (0, 0)),
            pl.BlockSpec((256, cout * 36), lambda: (0, 0)),
            pl.BlockSpec((cout * 36, cout), lambda: (0, 0)),
            pl.BlockSpec((cout, cout * 36), lambda: (0, 0)),
        ],
        out_specs=pl.BlockSpec((n, cout * 36), lambda: (0, 0)),
    )(style_emb.astype(jnp.bfloat16), class_emb.astype(jnp.bfloat16),
      ws, wc, bs, bc, w1s, w1c, pool, bcast)
    return out.reshape(n, cout, 6, 6)


def _phase_weight(w_ct, pad):
    """Stacked (4*Cout, Cin*4) sub-pixel weight for a stride-2, k=4 transposed conv.

    Phase (ry,rx) of the output is a stride-1 2x2 correlation of the 1-padded input with
    taps kh = [2+c, c] (c = ry for pad=0, c = 1-ry for pad=1); same for columns.
    Row order = phase-major (ry,rx)=(0,0),(0,1),(1,0),(1,1); feature order = (ci, u, v).
    """
    cin, cout = w_ct.shape[0], w_ct.shape[1]
    subs = []
    for ry in range(2):
        for rx in range(2):
            ch = ry if pad == 0 else 1 - ry
            cw = rx if pad == 0 else 1 - rx
            sub = jnp.stack([w_ct[:, :, 2 + ch, :], w_ct[:, :, ch, :]], axis=2)   # (Ci,Co,2,4)
            sub = jnp.stack([sub[:, :, :, 2 + cw], sub[:, :, :, cw]], axis=3)     # (Ci,Co,2,2)
            subs.append(sub.transpose(1, 0, 2, 3).reshape(cout, cin * 4))
    return jnp.concatenate(subs, axis=0)                                          # (4*Co, Ci*4)


def deconv_phase_layer(x, w_ct, bias, pad, nb, *, last):
    """ConvTranspose2d(k=4,s=2) [+ InstanceNorm + LeakyReLU | + bias + Sigmoid].

    x: (N, Cin, H, W), N divisible by nb.  Returns (N, Cout, OH, OW).
    """
    n, cin, h, w = x.shape
    cout = w_ct.shape[1]
    r = 4 * cout
    kd = cin * 4
    qh, qw = h + 1, w + 1
    p_real = qh * qw
    ppad = -(-p_real // 128) * 128            # per-sample lane extent (128-multiple)
    nblk = n // nb
    lanes = nb * ppad

    # Shared 2x2 im2col of the 1-padded (UNdilated) input, bf16, feature order (ci, u, v).
    xp = jnp.pad(x.astype(jnp.bfloat16), ((0, 0), (0, 0), (1, 1), (1, 1)))
    cols = [xp[:, :, u:u + qh, v:v + qw] for u in range(2) for v in range(2)]
    patches = jnp.stack(cols, axis=2).reshape(n, kd, p_real)
    patches = jnp.pad(patches, ((0, 0), (0, 0), (0, ppad - p_real)))
    patches = (patches.reshape(nblk, nb, kd, ppad)
               .transpose(0, 2, 1, 3)
               .reshape(nblk, kd, lanes))      # samples lane-concatenated per grid block

    w_ph = _phase_weight(w_ct, pad).astype(jnp.bfloat16)   # (4*Cout, Cin*4)

    if last:
        kernel = _phase_deconv_bias_sigmoid_kernel
        b_rows = jnp.tile(bias.astype(jnp.float32), 4).reshape(r, 1)   # row = phase*Cout + co
        in_specs = [
            pl.BlockSpec((1, kd, lanes), lambda i: (i, 0, 0)),
            pl.BlockSpec((r, kd), lambda i: (0, 0)),
            pl.BlockSpec((r, 1), lambda i: (0, 0)),
        ]
        args = (patches, w_ph, b_rows)
        out_dtype = jnp.float32
    else:
        kernel = functools.partial(_phase_deconv_in_lrelu_kernel,
                                   nb=nb, ppad=ppad, p_real=p_real, cout=cout)
        in_specs = [
            pl.BlockSpec((1, kd, lanes), lambda i: (i, 0, 0)),
            pl.BlockSpec((r, kd), lambda i: (0, 0)),
        ]
        args = (patches, w_ph)
        out_dtype = jnp.bfloat16

    out = pl.pallas_call(
        kernel,
        out_shape=jax.ShapeDtypeStruct((nblk, r, lanes), out_dtype),
        grid_spec=pltpu.PrefetchScalarGridSpec(
            num_scalar_prefetch=0,
            grid=(nblk,),
            in_specs=in_specs,
            out_specs=pl.BlockSpec((1, r, lanes), lambda i: (i, 0, 0)),
        ),
        compiler_params=pltpu.CompilerParams(dimension_semantics=("parallel",)),
    )(*args)

    # Un-concatenate samples, drop lane padding, split into the 4 phase planes.
    y = (out.reshape(nblk, r, nb, ppad)
         .transpose(0, 2, 1, 3)
         .reshape(n, r, ppad)[:, :, :p_real]
         .reshape(n, 2, 2, cout, qh, qw))            # (N, ry, rx, C, QH, QW)

    if pad == 0:
        # Every phase position is a real output: OH = 2*QH, OW = 2*QW.
        return (y.transpose(0, 3, 4, 1, 5, 2)        # (N, C, QH, 2, QW, 2)
                .reshape(n, cout, 2 * qh, 2 * qw))
    # pad == 1: each phase keeps an (H, W) window offset by (ry, rx); OH = 2H, OW = 2W.
    p00 = y[:, 0, 0, :, 0:h, 0:w]
    p01 = y[:, 0, 1, :, 0:h, 1:w + 1]
    p10 = y[:, 1, 0, :, 1:h + 1, 0:w]
    p11 = y[:, 1, 1, :, 1:h + 1, 1:w + 1]
    row0 = jnp.stack([p00, p01], axis=-1).reshape(n, cout, h, 2 * w)
    row1 = jnp.stack([p10, p11], axis=-1).reshape(n, cout, h, 2 * w)
    return jnp.stack([row0, row1], axis=-2).reshape(n, cout, 2 * h, 2 * w)


# ---------------------------------------------------------------------------
# ReconstructorSprites forward
# ---------------------------------------------------------------------------
def init_params(key, style_dim, class_dim, num_classes):
    """Deterministic params (shapes match the PyTorch module)."""
    keys = jax.random.split(key, 5 + 2 * len(_DECONV_CFG))
    params = {
        "word_dict": jax.random.normal(keys[0], (num_classes, class_dim), jnp.float32),
        "fc_style_w": 0.05 * jax.random.normal(keys[1], (256, style_dim), jnp.float32),
        "fc_style_b": 0.01 * jax.random.normal(keys[2], (256,), jnp.float32),
        "fc_class_w": 0.05 * jax.random.normal(keys[3], (256, class_dim), jnp.float32),
        "fc_class_b": 0.01 * jax.random.normal(keys[4], (256,), jnp.float32),
    }
    deconvs = []
    ki = 5
    for (cin, cout, k, _, _) in _DECONV_CFG:
        w = 0.05 * jax.random.normal(keys[ki], (cin, cout, k, k), jnp.float32)
        b = 0.02 * jax.random.normal(keys[ki + 1], (cout,), jnp.float32)
        deconvs.append((w, b))
        ki += 2
    params["deconvs"] = deconvs
    return params


@jax.jit
def reconstructor_forward(style_emb, class_label, params):
    """style_emb (N, style_dim) f32, class_label (N,) int32 -> (N, 3, 60, 60) f32."""
    n = style_emb.shape[0]
    class_emb = jnp.take(params["word_dict"], class_label, axis=0)

    # nb <= N//2 keeps the parallel grid >= 2 (both v7x TensorCores busy); batch is padded
    # to a multiple of nb and the padded rows are dropped at the end.
    nb = max(1, min(8, n // 2)) if n > 1 else 1
    nblk = -(-n // nb)
    n_pad = nblk * nb
    if n_pad != n:
        style_emb = jnp.pad(style_emb, ((0, n_pad - n), (0, 0)))
        class_emb = jnp.pad(class_emb, ((0, n_pad - n), (0, 0)))

    x = fc_deconv1(style_emb, class_emb, params)           # (n_pad, 32, 6, 6) bf16
    for li in (1, 2, 3):
        w, b = params["deconvs"][li]
        pad = _DECONV_CFG[li][4]
        x = deconv_phase_layer(x, w, b, pad, nb, last=(li == 3))
    return x[:n]


# ---------------------------------------------------------------------------
# Pure-JAX reference (high precision) for a silent correctness check
# ---------------------------------------------------------------------------
def _conv_transpose_ref(x, w_ct, b, s, p):
    k = w_ct.shape[2]
    w_conv = jnp.flip(w_ct, axis=(2, 3)).transpose(1, 0, 2, 3)  # (Cout, Cin, K, K)
    y = jax.lax.conv_general_dilated(
        x, w_conv, window_strides=(1, 1),
        padding=[(k - 1 - p, k - 1 - p)] * 2, lhs_dilation=(s, s),
        dimension_numbers=("NCHW", "OIHW", "NCHW"),
        precision=jax.lax.Precision.HIGHEST)
    return y + b[None, :, None, None]


def _reference_forward(style_emb, class_label, params):
    class_emb = params["word_dict"][class_label]
    hs = jnp.dot(style_emb, params["fc_style_w"].T,
                 precision=jax.lax.Precision.HIGHEST) + params["fc_style_b"]
    hs = jnp.where(hs >= 0, hs, NEG_SLOPE * hs)
    hc = jnp.dot(class_emb, params["fc_class_w"].T,
                 precision=jax.lax.Precision.HIGHEST) + params["fc_class_b"]
    hc = jnp.where(hc >= 0, hc, NEG_SLOPE * hc)
    x = jnp.concatenate([hs, hc], axis=1).reshape(-1, 128, 2, 2)
    n_layers = len(_DECONV_CFG)
    for li, ((w, b), (_, _, _, s, p)) in enumerate(zip(params["deconvs"], _DECONV_CFG)):
        y = _conv_transpose_ref(x, w, b, s, p)
        if li < n_layers - 1:
            mean = y.mean(axis=(2, 3), keepdims=True)
            var = ((y - mean) ** 2).mean(axis=(2, 3), keepdims=True)
            y = (y - mean) / jnp.sqrt(var + EPS)
            x = jnp.where(y >= 0, y, NEG_SLOPE * y)
        else:
            x = 1.0 / (1.0 + jnp.exp(-y))
    return x


if __name__ == "__main__":
    key = jax.random.PRNGKey(0)
    k_style, k_lbl, k_par = jax.random.split(key, 3)

    N, STYLE_DIM, CLASS_DIM, NUM_CLASSES = 2, 64, 64, 5
    style = jax.random.normal(k_style, (N, STYLE_DIM), jnp.float32)
    labels = jax.random.randint(k_lbl, (N,), 0, NUM_CLASSES)
    params = init_params(k_par, STYLE_DIM, CLASS_DIM, NUM_CLASSES)

    out = jax.block_until_ready(reconstructor_forward(style, labels, params))
    assert out.shape == (N, 3, 60, 60), out.shape
    assert bool(jnp.all(jnp.isfinite(out))), "non-finite output"

    ref = jax.block_until_ready(_reference_forward(style, labels, params))
    max_err = float(jnp.max(jnp.abs(out - ref)))
    # bf16 MXU operands / bf16 intermediate activations (f32 accumulation + f32 stats)
    # -> allow a few 1e-2 absolute drift post-sigmoid.
    assert max_err < 5e-2, f"mismatch vs reference: max abs err = {max_err}"

    print("KERNEL_OK")
</pallas_src>

<mosaic_0001>
module attributes {stable_mosaic.version = 11 : i64} {
  func.func @_fc_deconv1_kernel(%arg0: memref<2x64xbf16, #tpu.memory_space<vmem>>, %arg1: memref<2x64xbf16, #tpu.memory_space<vmem>>, %arg2: memref<64x256xbf16, #tpu.memory_space<vmem>>, %arg3: memref<64x256xbf16, #tpu.memory_space<vmem>>, %arg4: memref<1x256xf32, #tpu.memory_space<vmem>>, %arg5: memref<1x256xf32, #tpu.memory_space<vmem>>, %arg6: memref<256x1152xbf16, #tpu.memory_space<vmem>>, %arg7: memref<256x1152xbf16, #tpu.memory_space<vmem>>, %arg8: memref<1152x32xf32, #tpu.memory_space<vmem>>, %arg9: memref<32x1152xf32, #tpu.memory_space<vmem>>, %arg10: memref<2x1152xbf16, #tpu.memory_space<vmem>>) attributes {dimension_semantics = [], scalar_prefetch = 0 : i64, scratch_operands = 0 : i64, tpu.core_type = #tpu.core_type<tc>} {
    %c0 = arith.constant 0 : index
    %c0_0 = arith.constant 0 : index
    %0 = vector.load %arg0[%c0, %c0_0] : memref<2x64xbf16, #tpu.memory_space<vmem>>, vector<2x64xbf16>
    %c0_1 = arith.constant 0 : index
    %c0_2 = arith.constant 0 : index
    %1 = vector.load %arg2[%c0_1, %c0_2] : memref<64x256xbf16, #tpu.memory_space<vmem>>, vector<64x256xbf16>
    %cst = arith.constant dense<0.000000e+00> : vector<2x256xf32>
    %2 = tpu.matmul %0, %1, %cst {dimension_numbers = #tpu.dot_dimension_numbers<[1], [0], [0], [1], [0, 0, 1, 1], [], []>} : vector<2x64xbf16>, vector<64x256xbf16>, vector<2x256xf32> -> vector<2x256xf32>
    %c0_3 = arith.constant 0 : index
    %c0_4 = arith.constant 0 : index
    %3 = vector.load %arg4[%c0_3, %c0_4] : memref<1x256xf32, #tpu.memory_space<vmem>>, vector<1x256xf32>
    %4 = vector.broadcast %3 : vector<1x256xf32> to vector<2x256xf32>
    %5 = arith.addf %2, %4 : vector<2x256xf32>
    %c0_5 = arith.constant 0 : index
    %c0_6 = arith.constant 0 : index
    %6 = vector.load %arg1[%c0_5, %c0_6] : memref<2x64xbf16, #tpu.memory_space<vmem>>, vector<2x64xbf16>
    %c0_7 = arith.constant 0 : index
    %c0_8 = arith.constant 0 : index
    %7 = vector.load %arg3[%c0_7, %c0_8] : memref<64x256xbf16, #tpu.memory_space<vmem>>, vector<64x256xbf16>
    %cst_9 = arith.constant dense<0.000000e+00> : vector<2x256xf32>
    %8 = tpu.matmul %6, %7, %cst_9 {dimension_numbers = #tpu.dot_dimension_numbers<[1], [0], [0], [1], [0, 0, 1, 1], [], []>} : vector<2x64xbf16>, vector<64x256xbf16>, vector<2x256xf32> -> vector<2x256xf32>
    %c0_10 = arith.constant 0 : index
    %c0_11 = arith.constant 0 : index
    %9 = vector.load %arg5[%c0_10, %c0_11] : memref<1x256xf32, #tpu.memory_space<vmem>>, vector<1x256xf32>
    %10 = vector.broadcast %9 : vector<1x256xf32> to vector<2x256xf32>
    %11 = arith.addf %8, %10 : vector<2x256xf32>
    %cst_12 = arith.constant 0.000000e+00 : f32
    %12 = vector.broadcast %cst_12 : f32 to vector<2x256xf32>
    %13 = arith.cmpf oge, %5, %12 : vector<2x256xf32>
    %cst_13 = arith.constant 2.000000e-01 : f32
    %14 = vector.broadcast %cst_13 : f32 to vector<2x256xf32>
    %15 = arith.mulf %14, %5 : vector<2x256xf32>
    %16 = arith.select %13, %5, %15 : vector<2x256xi1>, vector<2x256xf32>
    %cst_14 = arith.constant 0.000000e+00 : f32
    %17 = vector.broadcast %cst_14 : f32 to vector<2x256xf32>
    %18 = arith.cmpf oge, %11, %17 : vector<2x256xf32>
    %cst_15 = arith.constant 2.000000e-01 : f32
    %19 = vector.broadcast %cst_15 : f32 to vector<2x256xf32>
    %20 = arith.mulf %19, %11 : vector<2x256xf32>
    %21 = arith.select %18, %11, %20 : vector<2x256xi1>, vector<2x256xf32>
    %22 = arith.truncf %16 : vector<2x256xf32> to vector<2x256xbf16>
    %c0_16 = arith.constant 0 : index
    %c0_17 = arith.constant 0 : index
    %23 = vector.load %arg6[%c0_16, %c0_17] : memref<256x1152xbf16, #tpu.memory_space<vmem>>, vector<256x1152xbf16>
    %cst_18 = arith.constant dense<0.000000e+00> : vector<2x1152xf32>
    %24 = tpu.matmul %22, %23, %cst_18 {dimension_numbers = #tpu.dot_dimension_numbers<[1], [0], [0], [1], [0, 0, 1, 1], [], []>} : vector<2x256xbf16>, vector<256x1152xbf16>, vector<2x1152xf32> -> vector<2x1152xf32>
    %25 = arith.truncf %21 : vector<2x256xf32> to vector<2x256xbf16>
    %c0_19 = arith.constant 0 : index
    %c0_20 = arith.constant 0 : index
    %26 = vector.load %arg7[%c0_19, %c0_20] : memref<256x1152xbf16, #tpu.memory_space<vmem>>, vector<256x1152xbf16>
    %cst_21 = arith.constant dense<0.000000e+00> : vector<2x1152xf32>
    %27 = tpu.matmul %25, %26, %cst_21 {dimension_numbers = #tpu.dot_dimension_numbers<[1], [0], [0], [1], [0, 0, 1, 1], [], []>} : vector<2x256xbf16>, vector<256x1152xbf16>, vector<2x1152xf32> -> vector<2x1152xf32>
    %28 = arith.addf %24, %27 : vector<2x1152xf32>
    %c0_22 = arith.constant 0 : index
    %c0_23 = arith.constant 0 : index
    %29 = vector.load %arg8[%c0_22, %c0_23] : memref<1152x32xf32, #tpu.memory_space<vmem>>, vector<1152x32xf32>
    %cst_24 = arith.constant dense<0.000000e+00> : vector<2x32xf32>
    %30 = tpu.matmul %28, %29, %cst_24 {dimension_numbers = #tpu.dot_dimension_numbers<[1], [0], [0], [1], [0, 0, 1, 1], [], []>} : vector<2x1152xf32>, vector<1152x32xf32>, vector<2x32xf32> -> vector<2x32xf32>
    %31 = arith.mulf %28, %28 : vector<2x1152xf32>
    %c0_25 = arith.constant 0 : index
    %c0_26 = arith.constant 0 : index
    %32 = vector.load %arg8[%c0_25, %c0_26] : memref<1152x32xf32, #tpu.memory_space<vmem>>, vector<1152x32xf32>
    %cst_27 = arith.constant dense<0.000000e+00> : vector<2x32xf32>
    %33 = tpu.matmul %31, %32, %cst_27 {dimension_numbers = #tpu.dot_dimension_numbers<[1], [0], [0], [1], [0, 0, 1, 1], [], []>} : vector<2x1152xf32>, vector<1152x32xf32>, vector<2x32xf32> -> vector<2x32xf32>
    %34 = arith.mulf %30, %30 : vector<2x32xf32>
    %35 = arith.subf %33, %34 : vector<2x32xf32>
    %cst_28 = arith.constant 0.000000e+00 : f32
    %36 = vector.broadcast %cst_28 : f32 to vector<2x32xf32>
    %37 = arith.maximumf %35, %36 : vector<2x32xf32>
    %cst_29 = arith.constant 9.99999974E-6 : f32
    %38 = vector.broadcast %cst_29 : f32 to vector<2x32xf32>
    %39 = arith.addf %37, %38 : vector<2x32xf32>
    %40 = math.rsqrt %39 : vector<2x32xf32>
    %c0_30 = arith.constant 0 : index
    %c0_31 = arith.constant 0 : index
    %41 = vector.load %arg9[%c0_30, %c0_31] : memref<32x1152xf32, #tpu.memory_space<vmem>>, vector<32x1152xf32>
    %cst_32 = arith.constant dense<0.000000e+00> : vector<2x1152xf32>
    %42 = tpu.matmul %30, %41, %cst_32 {dimension_numbers = #tpu.dot_dimension_numbers<[1], [0], [0], [1], [0, 0, 1, 1], [], []>} : vector<2x32xf32>, vector<32x1152xf32>, vector<2x1152xf32> -> vector<2x1152xf32>
    %c0_33 = arith.constant 0 : index
    %c0_34 = arith.constant 0 : index
    %43 = vector.load %arg9[%c0_33, %c0_34] : memref<32x1152xf32, #tpu.memory_space<vmem>>, vector<32x1152xf32>
    %cst_35 = arith.constant dense<0.000000e+00> : vector<2x1152xf32>
    %44 = tpu.matmul %40, %43, %cst_35 {dimension_numbers = #tpu.dot_dimension_numbers<[1], [0], [0], [1], [0, 0, 1, 1], [], []>} : vector<2x32xf32>, vector<32x1152xf32>, vector<2x1152xf32> -> vector<2x1152xf32>
    %45 = arith.subf %28, %42 : vector<2x1152xf32>
    %46 = arith.mulf %45, %44 : vector<2x1152xf32>
    %cst_36 = arith.constant 0.000000e+00 : f32
    %47 = vector.broadcast %cst_36 : f32 to vector<2x1152xf32>
    %48 = arith.cmpf oge, %46, %47 : vector<2x1152xf32>
    %cst_37 = arith.constant 2.000000e-01 : f32
    %49 = vector.broadcast %cst_37 : f32 to vector<2x1152xf32>
    %50 = arith.mulf %49, %46 : vector<2x1152xf32>
    %51 = arith.select %48, %46, %50 : vector<2x1152xi1>, vector<2x1152xf32>
    %52 = arith.truncf %51 : vector<2x1152xf32> to vector<2x1152xbf16>
    %c0_38 = arith.constant 0 : index
    %c0_39 = arith.constant 0 : index
    %53 = vector.load %arg10[%c0_38, %c0_39] : memref<2x1152xbf16, #tpu.memory_space<vmem>>, vector<2x1152xbf16>
    tpu.vector_store %arg10[%c0_38, %c0_39], %52 {strides = array<i32>} : memref<2x1152xbf16, #tpu.memory_space<vmem>>, vector<2x1152xbf16>,
    return
  }
}

module attributes {stable_mosaic.version = 11 : i64} {
  func.func @_phase_deconv_in_lrelu_kernel(%arg0: i32, %arg1: memref<1x128x128xbf16, #tpu.memory_space<vmem>>, %arg2: memref<64x128xbf16, #tpu.memory_space<vmem>>, %arg3: memref<1x64x128xbf16, #tpu.memory_space<vmem>>) attributes {dimension_semantics = [#tpu.dimension_semantics<parallel>], iteration_bounds = array<i64: 2>, scalar_prefetch = 0 : i64, scratch_operands = 0 : i64, tpu.core_type = #tpu.core_type<tc>, window_params = [{transform_indices = @transform_0, window_bounds = array<i64: 1, 128, 128>}, {pipeline_mode = #tpu.pipeline_mode<synchronous>, transform_indices = @transform_1, window_bounds = array<i64: 64, 128>}, {transform_indices = @transform_2, window_bounds = array<i64: 1, 64, 128>}]} {
    %c0 = arith.constant 0 : index
    %c0_0 = arith.constant 0 : index
    %0 = vector.load %arg2[%c0, %c0_0] : memref<64x128xbf16, #tpu.memory_space<vmem>>, vector<64x128xbf16>
    %c0_1 = arith.constant 0 : index
    %c0_2 = arith.constant 0 : index
    %c0_3 = arith.constant 0 : index
    %1 = vector.load %arg1[%c0_1, %c0_2, %c0_3] : memref<1x128x128xbf16, #tpu.memory_space<vmem>>, vector<1x128x128xbf16>
    %2 = vector.shape_cast %1 : vector<1x128x128xbf16> to vector<128x128xbf16>
    %cst = arith.constant dense<0.000000e+00> : vector<64x128xf32>
    %3 = tpu.matmul %0, %2, %cst {dimension_numbers = #tpu.dot_dimension_numbers<[1], [0], [0], [1], [0, 0, 1, 1], [], []>} : vector<64x128xbf16>, vector<128x128xbf16>, vector<64x128xf32> -> vector<64x128xf32>
    %4 = vector.extract_strided_slice %3 {offsets = [0, 0], sizes = [16, 128], strides = [1, 1]} : vector<64x128xf32> to vector<16x128xf32>
    %5 = vector.extract_strided_slice %3 {offsets = [16, 0], sizes = [16, 128], strides = [1, 1]} : vector<64x128xf32> to vector<16x128xf32>
    %6 = vector.extract_strided_slice %3 {offsets = [32, 0], sizes = [16, 128], strides = [1, 1]} : vector<64x128xf32> to vector<16x128xf32>
    %7 = vector.extract_strided_slice %3 {offsets = [48, 0], sizes = [16, 128], strides = [1, 1]} : vector<64x128xf32> to vector<16x128xf32>
    %cst_4 = arith.constant dense<0.000000e+00> : vector<16xf32>
    %8 = vector.multi_reduction <add>, %4, %cst_4 [1] : vector<16x128xf32> to vector<16xf32>
    %9 = vector.shape_cast %8 : vector<16xf32> to vector<16x1xf32>
    %cst_5 = arith.constant 0.000000e+00 : f32
    %10 = vector.broadcast %cst_5 : f32 to vector<16x1xf32>
    %11 = arith.addf %10, %9 : vector<16x1xf32>
    %cst_6 = arith.constant dense<0.000000e+00> : vector<16xf32>
    %12 = vector.multi_reduction <add>, %5, %cst_6 [1] : vector<16x128xf32> to vector<16xf32>
    %13 = vector.shape_cast %12 : vector<16xf32> to vector<16x1xf32>
    %14 = arith.addf %11, %13 : vector<16x1xf32>
    %cst_7 = arith.constant dense<0.000000e+00> : vector<16xf32>
    %15 = vector.multi_reduction <add>, %6, %cst_7 [1] : vector<16x128xf32> to vector<16xf32>
    %16 = vector.shape_cast %15 : vector<16xf32> to vector<16x1xf32>
    %17 = arith.addf %14, %16 : vector<16x1xf32>
    %cst_8 = arith.constant dense<0.000000e+00> : vector<16xf32>
    %18 = vector.multi_reduction <add>, %7, %cst_8 [1] : vector<16x128xf32> to vector<16xf32>
    %19 = vector.shape_cast %18 : vector<16xf32> to vector<16x1xf32>
    %20 = arith.addf %17, %19 : vector<16x1xf32>
    %21 = arith.mulf %4, %4 : vector<16x128xf32>
    %cst_9 = arith.constant dense<0.000000e+00> : vector<16xf32>
    %22 = vector.multi_reduction <add>, %21, %cst_9 [1] : vector<16x128xf32> to vector<16xf32>
    %23 = vector.shape_cast %22 : vector<16xf32> to vector<16x1xf32>
    %cst_10 = arith.constant 0.000000e+00 : f32
    %24 = vector.broadcast %cst_10 : f32 to vector<16x1xf32>
    %25 = arith.addf %24, %23 : vector<16x1xf32>
    %26 = arith.mulf %5, %5 : vector<16x128xf32>
    %cst_11 = arith.constant dense<0.000000e+00> : vector<16xf32>
    %27 = vector.multi_reduction <add>, %26, %cst_11 [1] : vector<16x128xf32> to vector<16xf32>
    %28 = vector.shape_cast %27 : vector<16xf32> to vector<16x1xf32>
    %29 = arith.addf %25, %28 : vector<16x1xf32>
    %30 = arith.mulf %6, %6 : vector<16x128xf32>
    %cst_12 = arith.constant dense<0.000000e+00> : vector<16xf32>
    %31 = vector.multi_reduction <add>, %30, %cst_12 [1] : vector<16x128xf32> to vector<16xf32>
    %32 = vector.shape_cast %31 : vector<16xf32> to vector<16x1xf32>
    %33 = arith.addf %29, %32 : vector<16x1xf32>
    %34 = arith.mulf %7, %7 : vector<16x128xf32>
    %cst_13 = arith.constant dense<0.000000e+00> : vector<16xf32>
    %35 = vector.multi_reduction <add>, %34, %cst_13 [1] : vector<16x128xf32> to vector<16xf32>
    %36 = vector.shape_cast %35 : vector<16xf32> to vector<16x1xf32>
    %37 = arith.addf %33, %36 : vector<16x1xf32>
    %cst_14 = arith.constant 0.00510204071 : f32
    %38 = vector.broadcast %cst_14 : f32 to vector<16x1xf32>
    %39 = arith.mulf %20, %38 : vector<16x1xf32>
    %cst_15 = arith.constant 0.00510204071 : f32
    %40 = vector.broadcast %cst_15 : f32 to vector<16x1xf32>
    %41 = arith.mulf %37, %40 : vector<16x1xf32>
    %42 = arith.mulf %39, %39 : vector<16x1xf32>
    %43 = arith.subf %41, %42 : vector<16x1xf32>
    %cst_16 = arith.constant 0.000000e+00 : f32
    %44 = vector.broadcast %cst_16 : f32 to vector<16x1xf32>
    %45 = arith.maximumf %43, %44 : vector<16x1xf32>
    %cst_17 = arith.constant 9.99999974E-6 : f32
    %46 = vector.broadcast %cst_17 : f32 to vector<16x1xf32>
    %47 = arith.addf %45, %46 : vector<16x1xf32>
    %48 = math.rsqrt %47 : vector<16x1xf32>
    %49 = vector.broadcast %39 : vector<16x1xf32> to vector<16x128xf32>
    %50 = arith.subf %4, %49 : vector<16x128xf32>
    %51 = vector.broadcast %48 : vector<16x1xf32> to vector<16x128xf32>
    %52 = arith.mulf %50, %51 : vector<16x128xf32>
    %cst_18 = arith.constant 0.000000e+00 : f32
    %53 = vector.broadcast %cst_18 : f32 to vector<16x128xf32>
    %54 = arith.cmpf oge, %52, %53 : vector<16x128xf32>
    %cst_19 = arith.constant 2.000000e-01 : f32
    %55 = vector.broadcast %cst_19 : f32 to vector<16x128xf32>
    %56 = arith.mulf %55, %52 : vector<16x128xf32>
    %57 = arith.select %54, %52, %56 : vector<16x128xi1>, vector<16x128xf32>
    %58 = vector.broadcast %39 : vector<16x1xf32> to vector<16x128xf32>
    %59 = arith.subf %5, %58 : vector<16x128xf32>
    %60 = vector.broadcast %48 : vector<16x1xf32> to vector<16x128xf32>
    %61 = arith.mulf %59, %60 : vector<16x128xf32>
    %cst_20 = arith.constant 0.000000e+00 : f32
    %62 = vector.broadcast %cst_20 : f32 to vector<16x128xf32>
    %63 = arith.cmpf oge, %61, %62 : vector<16x128xf32>
    %cst_21 = arith.constant 2.000000e-01 : f32
    %64 = vector.broadcast %cst_21 : f32 to vector<16x128xf32>
    %65 = arith.mulf %64, %61 : vector<16x128xf32>
    %66 = arith.select %63, %61, %65 : vector<16x128xi1>, vector<16x128xf32>
    %67 = vector.broadcast %39 : vector<16x1xf32> to vector<16x128xf32>
    %68 = arith.subf %6, %67 : vector<16x128xf32>
    %69 = vector.broadcast %48 : vector<16x1xf32> to vector<16x128xf32>
    %70 = arith.mulf %68, %69 : vector<16x128xf32>
    %cst_22 = arith.constant 0.000000e+00 : f32
    %71 = vector.broadcast %cst_22 : f32 to vector<16x128xf32>
    %72 = arith.cmpf oge, %70, %71 : vector<16x128xf32>
    %cst_23 = arith.constant 2.000000e-01 : f32
    %73 = vector.broadcast %cst_23 : f32 to vector<16x128xf32>
    %74 = arith.mulf %73, %70 : vector<16x128xf32>
    %75 = arith.select %72, %70, %74 : vector<16x128xi1>, vector<16x128xf32>
    %76 = vector.broadcast %39 : vector<16x1xf32> to vector<16x128xf32>
    %77 = arith.subf %7, %76 : vector<16x128xf32>
    %78 = vector.broadcast %48 : vector<16x1xf32> to vector<16x128xf32>
    %79 = arith.mulf %77, %78 : vector<16x128xf32>
    %cst_24 = arith.constant 0.000000e+00 : f32
    %80 = vector.broadcast %cst_24 : f32 to vector<16x128xf32>
    %81 = arith.cmpf oge, %79, %80 : vector<16x128xf32>
    %cst_25 = arith.constant 2.000000e-01 : f32
    %82 = vector.broadcast %cst_25 : f32 to vector<16x128xf32>
    %83 = arith.mulf %82, %79 : vector<16x128xf32>
    %84 = arith.select %81, %79, %83 : vector<16x128xi1>, vector<16x128xf32>
    %85 = tpu.concatenate %57, %66, %75, %84 in 0 : vector<16x128xf32>, vector<16x128xf32>, vector<16x128xf32>, vector<16x128xf32> -> vector<64x128xf32>
    %86 = arith.truncf %85 : vector<64x128xf32> to vector<64x128xbf16>
    %c0_26 = arith.constant 0 : index
    %c0_27 = arith.constant 0 : index
    %c0_28 = arith.constant 0 : index
    %87 = vector.load %arg3[%c0_26, %c0_27, %c0_28] : memref<1x64x128xbf16, #tpu.memory_space<vmem>>, vector<1x64x128xbf16>
    %88 = vector.shape_cast %87 : vector<1x64x128xbf16> to vector<64x128xbf16>
    %89 = vector.shape_cast %86 : vector<64x128xbf16> to vector<1x64x128xbf16>
    tpu.vector_store %arg3[%c0_26, %c0_27, %c0_28], %89 {strides = array<i32>} : memref<1x64x128xbf16, #tpu.memory_space<vmem>>, vector<1x64x128xbf16>,
    return
  }
  func.func @transform_0(%arg0: i32) -> (i32, i32, i32) {
    %c0_i32 = arith.constant 0 : i32
    %c0_i32_0 = arith.constant 0 : i32
    %c0_i32_1 = arith.constant 0 : i32
    return %arg0, %c0_i32, %c0_i32_0 : i32, i32, i32
  }
  func.func @transform_1(%arg0: i32) -> (i32, i32) {
    %c0_i32 = arith.constant 0 : i32
    %c0_i32_0 = arith.constant 0 : i32
    %c0_i32_1 = arith.constant 0 : i32
    return %c0_i32, %c0_i32_0 : i32, i32
  }
  func.func @transform_2(%arg0: i32) -> (i32, i32, i32) {
    %c0_i32 = arith.constant 0 : i32
    %c0_i32_0 = arith.constant 0 : i32
    %c0_i32_1 = arith.constant 0 : i32
    return %arg0, %c0_i32, %c0_i32_0 : i32, i32, i32
  }
}

module attributes {stable_mosaic.version = 11 : i64} {
  func.func @_phase_deconv_in_lrelu_kernel(%arg0: i32, %arg1: memref<1x64x256xbf16, #tpu.memory_space<vmem>>, %arg2: memref<32x64xbf16, #tpu.memory_space<vmem>>, %arg3: memref<1x32x256xbf16, #tpu.memory_space<vmem>>) attributes {dimension_semantics = [#tpu.dimension_semantics<parallel>], iteration_bounds = array<i64: 2>, scalar_prefetch = 0 : i64, scratch_operands = 0 : i64, tpu.core_type = #tpu.core_type<tc>, window_params = [{transform_indices = @transform_0, window_bounds = array<i64: 1, 64, 256>}, {pipeline_mode = #tpu.pipeline_mode<synchronous>, transform_indices = @transform_1, window_bounds = array<i64: 32, 64>}, {transform_indices = @transform_2, window_bounds = array<i64: 1, 32, 256>}]} {
    %c0 = arith.constant 0 : index
    %c0_0 = arith.constant 0 : index
    %0 = vector.load %arg2[%c0, %c0_0] : memref<32x64xbf16, #tpu.memory_space<vmem>>, vector<32x64xbf16>
    %c0_1 = arith.constant 0 : index
    %c0_2 = arith.constant 0 : index
    %c0_3 = arith.constant 0 : index
    %1 = vector.load %arg1[%c0_1, %c0_2, %c0_3] : memref<1x64x256xbf16, #tpu.memory_space<vmem>>, vector<1x64x256xbf16>
    %2 = vector.shape_cast %1 : vector<1x64x256xbf16> to vector<64x256xbf16>
    %cst = arith.constant dense<0.000000e+00> : vector<32x256xf32>
    %3 = tpu.matmul %0, %2, %cst {dimension_numbers = #tpu.dot_dimension_numbers<[1], [0], [0], [1], [0, 0, 1, 1], [], []>} : vector<32x64xbf16>, vector<64x256xbf16>, vector<32x256xf32> -> vector<32x256xf32>
    %4 = vector.extract_strided_slice %3 {offsets = [0, 0], sizes = [8, 256], strides = [1, 1]} : vector<32x256xf32> to vector<8x256xf32>
    %5 = vector.extract_strided_slice %3 {offsets = [8, 0], sizes = [8, 256], strides = [1, 1]} : vector<32x256xf32> to vector<8x256xf32>
    %6 = vector.extract_strided_slice %3 {offsets = [16, 0], sizes = [8, 256], strides = [1, 1]} : vector<32x256xf32> to vector<8x256xf32>
    %7 = vector.extract_strided_slice %3 {offsets = [24, 0], sizes = [8, 256], strides = [1, 1]} : vector<32x256xf32> to vector<8x256xf32>
    %cst_4 = arith.constant dense<0.000000e+00> : vector<8xf32>
    %8 = vector.multi_reduction <add>, %4, %cst_4 [1] : vector<8x256xf32> to vector<8xf32>
    %9 = vector.shape_cast %8 : vector<8xf32> to vector<8x1xf32>
    %cst_5 = arith.constant 0.000000e+00 : f32
    %10 = vector.broadcast %cst_5 : f32 to vector<8x1xf32>
    %11 = arith.addf %10, %9 : vector<8x1xf32>
    %cst_6 = arith.constant dense<0.000000e+00> : vector<8xf32>
    %12 = vector.multi_reduction <add>, %5, %cst_6 [1] : vector<8x256xf32> to vector<8xf32>
    %13 = vector.shape_cast %12 : vector<8xf32> to vector<8x1xf32>
    %14 = arith.addf %11, %13 : vector<8x1xf32>
    %cst_7 = arith.constant dense<0.000000e+00> : vector<8xf32>
    %15 = vector.multi_reduction <add>, %6, %cst_7 [1] : vector<8x256xf32> to vector<8xf32>
    %16 = vector.shape_cast %15 : vector<8xf32> to vector<8x1xf32>
    %17 = arith.addf %14, %16 : vector<8x1xf32>
    %cst_8 = arith.constant dense<0.000000e+00> : vector<8xf32>
    %18 = vector.multi_reduction <add>, %7, %cst_8 [1] : vector<8x256xf32> to vector<8xf32>
    %19 = vector.shape_cast %18 : vector<8xf32> to vector<8x1xf32>
    %20 = arith.addf %17, %19 : vector<8x1xf32>
    %21 = arith.mulf %4, %4 : vector<8x256xf32>
    %cst_9 = arith.constant dense<0.000000e+00> : vector<8xf32>
    %22 = vector.multi_reduction <add>, %21, %cst_9 [1] : vector<8x256xf32> to vector<8xf32>
    %23 = vector.shape_cast %22 : vector<8xf32> to vector<8x1xf32>
    %cst_10 = arith.constant 0.000000e+00 : f32
    %24 = vector.broadcast %cst_10 : f32 to vector<8x1xf32>
    %25 = arith.addf %24, %23 : vector<8x1xf32>
    %26 = arith.mulf %5, %5 : vector<8x256xf32>
    %cst_11 = arith.constant dense<0.000000e+00> : vector<8xf32>
    %27 = vector.multi_reduction <add>, %26, %cst_11 [1] : vector<8x256xf32> to vector<8xf32>
    %28 = vector.shape_cast %27 : vector<8xf32> to vector<8x1xf32>
    %29 = arith.addf %25, %28 : vector<8x1xf32>
    %30 = arith.mulf %6, %6 : vector<8x256xf32>
    %cst_12 = arith.constant dense<0.000000e+00> : vector<8xf32>
    %31 = vector.multi_reduction <add>, %30, %cst_12 [1] : vector<8x256xf32> to vector<8xf32>
    %32 = vector.shape_cast %31 : vector<8xf32> to vector<8x1xf32>
    %33 = arith.addf %29, %32 : vector<8x1xf32>
    %34 = arith.mulf %7, %7 : vector<8x256xf32>
    %cst_13 = arith.constant dense<0.000000e+00> : vector<8xf32>
    %35 = vector.multi_reduction <add>, %34, %cst_13 [1] : vector<8x256xf32> to vector<8xf32>
    %36 = vector.shape_cast %35 : vector<8xf32> to vector<8x1xf32>
    %37 = arith.addf %33, %36 : vector<8x1xf32>
    %cst_14 = arith.constant 0.00111111114 : f32
    %38 = vector.broadcast %cst_14 : f32 to vector<8x1xf32>
    %39 = arith.mulf %20, %38 : vector<8x1xf32>
    %cst_15 = arith.constant 0.00111111114 : f32
    %40 = vector.broadcast %cst_15 : f32 to vector<8x1xf32>
    %41 = arith.mulf %37, %40 : vector<8x1xf32>
    %42 = arith.mulf %39, %39 : vector<8x1xf32>
    %43 = arith.subf %41, %42 : vector<8x1xf32>
    %cst_16 = arith.constant 0.000000e+00 : f32
    %44 = vector.broadcast %cst_16 : f32 to vector<8x1xf32>
    %45 = arith.maximumf %43, %44 : vector<8x1xf32>
    %cst_17 = arith.constant 9.99999974E-6 : f32
    %46 = vector.broadcast %cst_17 : f32 to vector<8x1xf32>
    %47 = arith.addf %45, %46 : vector<8x1xf32>
    %48 = math.rsqrt %47 : vector<8x1xf32>
    %49 = vector.broadcast %39 : vector<8x1xf32> to vector<8x256xf32>
    %50 = arith.subf %4, %49 : vector<8x256xf32>
    %51 = vector.broadcast %48 : vector<8x1xf32> to vector<8x256xf32>
    %52 = arith.mulf %50, %51 : vector<8x256xf32>
    %cst_18 = arith.constant 0.000000e+00 : f32
    %53 = vector.broadcast %cst_18 : f32 to vector<8x256xf32>
    %54 = arith.cmpf oge, %52, %53 : vector<8x256xf32>
    %cst_19 = arith.constant 2.000000e-01 : f32
    %55 = vector.broadcast %cst_19 : f32 to vector<8x256xf32>
    %56 = arith.mulf %55, %52 : vector<8x256xf32>
    %57 = arith.select %54, %52, %56 : vector<8x256xi1>, vector<8x256xf32>
    %58 = vector.broadcast %39 : vector<8x1xf32> to vector<8x256xf32>
    %59 = arith.subf %5, %58 : vector<8x256xf32>
    %60 = vector.broadcast %48 : vector<8x1xf32> to vector<8x256xf32>
    %61 = arith.mulf %59, %60 : vector<8x256xf32>
    %cst_20 = arith.constant 0.000000e+00 : f32
    %62 = vector.broadcast %cst_20 : f32 to vector<8x256xf32>
    %63 = arith.cmpf oge, %61, %62 : vector<8x256xf32>
    %cst_21 = arith.constant 2.000000e-01 : f32
    %64 = vector.broadcast %cst_21 : f32 to vector<8x256xf32>
    %65 = arith.mulf %64, %61 : vector<8x256xf32>
    %66 = arith.select %63, %61, %65 : vector<8x256xi1>, vector<8x256xf32>
    %67 = vector.broadcast %39 : vector<8x1xf32> to vector<8x256xf32>
    %68 = arith.subf %6, %67 : vector<8x256xf32>
    %69 = vector.broadcast %48 : vector<8x1xf32> to vector<8x256xf32>
    %70 = arith.mulf %68, %69 : vector<8x256xf32>
    %cst_22 = arith.constant 0.000000e+00 : f32
    %71 = vector.broadcast %cst_22 : f32 to vector<8x256xf32>
    %72 = arith.cmpf oge, %70, %71 : vector<8x256xf32>
    %cst_23 = arith.constant 2.000000e-01 : f32
    %73 = vector.broadcast %cst_23 : f32 to vector<8x256xf32>
    %74 = arith.mulf %73, %70 : vector<8x256xf32>
    %75 = arith.select %72, %70, %74 : vector<8x256xi1>, vector<8x256xf32>
    %76 = vector.broadcast %39 : vector<8x1xf32> to vector<8x256xf32>
    %77 = arith.subf %7, %76 : vector<8x256xf32>
    %78 = vector.broadcast %48 : vector<8x1xf32> to vector<8x256xf32>
    %79 = arith.mulf %77, %78 : vector<8x256xf32>
    %cst_24 = arith.constant 0.000000e+00 : f32
    %80 = vector.broadcast %cst_24 : f32 to vector<8x256xf32>
    %81 = arith.cmpf oge, %79, %80 : vector<8x256xf32>
    %cst_25 = arith.constant 2.000000e-01 : f32
    %82 = vector.broadcast %cst_25 : f32 to vector<8x256xf32>
    %83 = arith.mulf %82, %79 : vector<8x256xf32>
    %84 = arith.select %81, %79, %83 : vector<8x256xi1>, vector<8x256xf32>
    %85 = tpu.concatenate %57, %66, %75, %84 in 0 : vector<8x256xf32>, vector<8x256xf32>, vector<8x256xf32>, vector<8x256xf32> -> vector<32x256xf32>
    %86 = arith.truncf %85 : vector<32x256xf32> to vector<32x256xbf16>
    %c0_26 = arith.constant 0 : index
    %c0_27 = arith.constant 0 : index
    %c0_28 = arith.constant 0 : index
    %87 = vector.load %arg3[%c0_26, %c0_27, %c0_28] : memref<1x32x256xbf16, #tpu.memory_space<vmem>>, vector<1x32x256xbf16>
    %88 = vector.shape_cast %87 : vector<1x32x256xbf16> to vector<32x256xbf16>
    %89 = vector.shape_cast %86 : vector<32x256xbf16> to vector<1x32x256xbf16>
    tpu.vector_store %arg3[%c0_26, %c0_27, %c0_28], %89 {strides = array<i32>} : memref<1x32x256xbf16, #tpu.memory_space<vmem>>, vector<1x32x256xbf16>,
    return
  }
  func.func @transform_0(%arg0: i32) -> (i32, i32, i32) {
    %c0_i32 = arith.constant 0 : i32
    %c0_i32_0 = arith.constant 0 : i32
    %c0_i32_1 = arith.constant 0 : i32
    return %arg0, %c0_i32, %c0_i32_0 : i32, i32, i32
  }
  func.func @transform_1(%arg0: i32) -> (i32, i32) {
    %c0_i32 = arith.constant 0 : i32
    %c0_i32_0 = arith.constant 0 : i32
    %c0_i32_1 = arith.constant 0 : i32
    return %c0_i32, %c0_i32_0 : i32, i32
  }
  func.func @transform_2(%arg0: i32) -> (i32, i32, i32) {
    %c0_i32 = arith.constant 0 : i32
    %c0_i32_0 = arith.constant 0 : i32
    %c0_i32_1 = arith.constant 0 : i32
    return %arg0, %c0_i32, %c0_i32_0 : i32, i32, i32
  }
}

module attributes {stable_mosaic.version = 11 : i64} {
  func.func @_phase_deconv_bias_sigmoid_kernel(%arg0: i32, %arg1: memref<1x32x1024xbf16, #tpu.memory_space<vmem>>, %arg2: memref<12x32xbf16, #tpu.memory_space<vmem>>, %arg3: memref<12x1xf32, #tpu.memory_space<vmem>>, %arg4: memref<1x12x1024xf32, #tpu.memory_space<vmem>>) attributes {dimension_semantics = [#tpu.dimension_semantics<parallel>], iteration_bounds = array<i64: 2>, scalar_prefetch = 0 : i64, scratch_operands = 0 : i64, tpu.core_type = #tpu.core_type<tc>, window_params = [{transform_indices = @transform_0, window_bounds = array<i64: 1, 32, 1024>}, {pipeline_mode = #tpu.pipeline_mode<synchronous>, transform_indices = @transform_1, window_bounds = array<i64: 12, 32>}, {pipeline_mode = #tpu.pipeline_mode<synchronous>, transform_indices = @transform_2, window_bounds = array<i64: 12, 1>}, {transform_indices = @transform_3, window_bounds = array<i64: 1, 12, 1024>}]} {
    %c0 = arith.constant 0 : index
    %c0_0 = arith.constant 0 : index
    %0 = vector.load %arg2[%c0, %c0_0] : memref<12x32xbf16, #tpu.memory_space<vmem>>, vector<12x32xbf16>
    %c0_1 = arith.constant 0 : index
    %c0_2 = arith.constant 0 : index
    %c0_3 = arith.constant 0 : index
    %1 = vector.load %arg1[%c0_1, %c0_2, %c0_3] : memref<1x32x1024xbf16, #tpu.memory_space<vmem>>, vector<1x32x1024xbf16>
    %2 = vector.shape_cast %1 : vector<1x32x1024xbf16> to vector<32x1024xbf16>
    %cst = arith.constant dense<0.000000e+00> : vector<12x1024xf32>
    %3 = tpu.matmul %0, %2, %cst {dimension_numbers = #tpu.dot_dimension_numbers<[1], [0], [0], [1], [0, 0, 1, 1], [], []>} : vector<12x32xbf16>, vector<32x1024xbf16>, vector<12x1024xf32> -> vector<12x1024xf32>
    %c0_4 = arith.constant 0 : index
    %c0_5 = arith.constant 0 : index
    %4 = vector.load %arg3[%c0_4, %c0_5] : memref<12x1xf32, #tpu.memory_space<vmem>>, vector<12x1xf32>
    %5 = vector.broadcast %4 : vector<12x1xf32> to vector<12x1024xf32>
    %6 = arith.addf %3, %5 : vector<12x1024xf32>
    %cst_6 = arith.constant 0.000000e+00 : f32
    %7 = vector.broadcast %cst_6 : f32 to vector<12x1024xf32>
    %8 = arith.subf %7, %6 : vector<12x1024xf32>
    %9 = math.exp %8 : vector<12x1024xf32>
    %cst_7 = arith.constant 1.000000e+00 : f32
    %10 = vector.broadcast %cst_7 : f32 to vector<12x1024xf32>
    %11 = arith.addf %10, %9 : vector<12x1024xf32>
    %12 = tpu.reciprocal %11 {approx = true} : vector<12x1024xf32> -> vector<12x1024xf32>
    %c0_8 = arith.constant 0 : index
    %c0_9 = arith.constant 0 : index
    %c0_10 = arith.constant 0 : index
    %13 = vector.load %arg4[%c0_8, %c0_9, %c0_10] : memref<1x12x1024xf32, #tpu.memory_space<vmem>>, vector<1x12x1024xf32>
    %14 = vector.shape_cast %13 : vector<1x12x1024xf32> to vector<12x1024xf32>
    %15 = vector.shape_cast %12 : vector<12x1024xf32> to vector<1x12x1024xf32>
    tpu.vector_store %arg4[%c0_8, %c0_9, %c0_10], %15 {strides = array<i32>} : memref<1x12x1024xf32, #tpu.memory_space<vmem>>, vector<1x12x1024xf32>,
    return
  }
  func.func @transform_0(%arg0: i32) -> (i32, i32, i32) {
    %c0_i32 = arith.constant 0 : i32
    %c0_i32_0 = arith.constant 0 : i32
    %c0_i32_1 = arith.constant 0 : i32
    return %arg0, %c0_i32, %c0_i32_0 : i32, i32, i32
  }
  func.func @transform_1(%arg0: i32) -> (i32, i32) {
    %c0_i32 = arith.constant 0 : i32
    %c0_i32_0 = arith.constant 0 : i32
    %c0_i32_1 = arith.constant 0 : i32
    return %c0_i32, %c0_i32_0 : i32, i32
  }
  func.func @transform_2(%arg0: i32) -> (i32, i32) {
    %c0_i32 = arith.constant 0 : i32
    %c0_i32_0 = arith.constant 0 : i32
    %c0_i32_1 = arith.constant 0 : i32
    return %c0_i32, %c0_i32_0 : i32, i32
  }
  func.func @transform_3(%arg0: i32) -> (i32, i32, i32) {
    %c0_i32 = arith.constant 0 : i32
    %c0_i32_0 = arith.constant 0 : i32
    %c0_i32_1 = arith.constant 0 : i32
    return %arg0, %c0_i32, %c0_i32_0 : i32, i32, i32
  }
}

</mosaic_0001>

<llo_original>
// kernel: reconstructor_forward.4
$region0: #{reconstructor_forward.4}
  #allocation0 [shape = 'u32[]', space=smem, size = 0x4, offset = 0x4, fixed_abs, tag = 'smem constant byte address 0x4 - core index']
  #allocation1 [shape = 'u32[144,128]{1,0:T(1,128)}', space=vmem, size = 0x12000, scoped, tag = 'internal scratch']
  %s0 = inlined_call_operand.hbm [shape: bf16[2,64], index: 0, kind: input, shape index: {}]
  %s1 = inlined_call_operand.hbm [shape: bf16[2,64], index: 1, kind: input, shape index: {}]
  %s2 = inlined_call_operand.hbm [shape: bf16[64,256], index: 2, kind: input, shape index: {}]
  %s3 = inlined_call_operand.hbm [shape: bf16[64,256], index: 3, kind: input, shape index: {}]
  %s4 = inlined_call_operand.hbm [shape: f32[1,256], index: 4, kind: input, shape index: {}]
  %s5 = inlined_call_operand.hbm [shape: f32[1,256], index: 5, kind: input, shape index: {}]
  %s6 = inlined_call_operand.vmem [shape: bf16[256,1152], index: 6, kind: input, shape index: {}]
  %s7 = inlined_call_operand.vmem [shape: bf16[256,1152], index: 7, kind: input, shape index: {}]
  %s8 = inlined_call_operand.vmem [shape: f32[1152,32], index: 8, kind: input, shape index: {}]
  %s9 = inlined_call_operand.vmem [shape: f32[32,1152], index: 9, kind: input, shape index: {}]
  %s10 = inlined_call_operand.vmem [shape: bf16[2,1152], index: 10, kind: output, shape index: {}]
  %s11 = sld [smem:[#allocation0]]
  $region74: #{reconstructor_forward.4} parent=0
    _
  %s13 = ssub.s32 1, %s11
  %s14 = scalar_select 0, %s13, %s11
  $region1: #{reconstructor_forward.4} parent=0
    #allocation2 [shape = 'u8[512]{0}', space=vmem, size = 0x400, scoped, tag = 'input window, operand 0, single buffered']
    #allocation3 [shape = 's32[1]{0}', space=sflag, size = 0x4, scoped, tag = 'scoped memory for reconstructor_forward.4']
    #allocation4 [shape = 'u8[512]{0}', space=vmem, size = 0x400, scoped, tag = 'input window, operand 1, single buffered']
    #allocation5 [shape = 's32[1]{0}', space=sflag, size = 0x4, scoped, tag = 'scoped memory for reconstructor_forward.4']
    #allocation6 [shape = 'u8[32768]{0}', space=vmem, size = 0x8000, scoped, tag = 'input window, operand 2, single buffered']
    #allocation7 [shape = 'u8[32768]{0}', space=vmem, size = 0x8000, scoped, tag = 'input window, operand 3, single buffered']
    #allocation8 [shape = 's32[1]{0}', space=sflag, size = 0x4, scoped, tag = 'scoped memory for reconstructor_forward.4']
    #allocation9 [shape = 'u8[1024]{0}', space=vmem, size = 0x400, scoped, tag = 'input window, operand 4, single buffered']
    #allocation10 [shape = 'u8[1024]{0}', space=vmem, size = 0x400, scoped, tag = 'input window, operand 5, single buffered']
    #allocation11 [shape = 's32[1]{0}', space=sflag, size = 0x4, scoped, tag = 'scoped memory for reconstructor_forward.4']
    %15 = vsyncpa [#allocation3], 0
    %16 = vsyncpa [#allocation5], 0
    %17 = vsyncpa [#allocation8], 0
    %18 = vsyncpa [#allocation11], 0
    // Predicated region
    $region2: #{reconstructor_forward.4} parent=1 // pred_check
      _
    $region3: #{reconstructor_forward.4} parent=1 // pred_check_branch
      %20 = sbr.rel (0) target = $region5
    $region4: #{reconstructor_forward.4} parent=1 // pred_region
      %s22 = ssub.s32 16, 16
      %23 = vsyncadd [#allocation3], %s22
      %s25 = sshll.u32 [#allocation2], 4
      %s26 = int_to_ptr.vmem [resolvable:$true] %s25
      %28 = dma.hbm_to_vmem [thread:$0]  %s0, 16, %s26, [#allocation3]
    $region5: #{reconstructor_forward.4} parent=1 // pred_fallthru
      _
    // Predicated region
    $region6: #{reconstructor_forward.4} parent=1 // pred_check
      _
    $region7: #{reconstructor_forward.4} parent=1 // pred_check_branch
      %30 = sbr.rel (0) target = $region9
    $region8: #{reconstructor_forward.4} parent=1 // pred_region
      %s32 = ssub.s32 16, 16
      %33 = vsyncadd [#allocation5], %s32
      %s35 = sshll.u32 [#allocation4], 4
      %s36 = int_to_ptr.vmem [resolvable:$true] %s35
      %38 = dma.hbm_to_vmem [thread:$0]  %s1, 16, %s36, [#allocation5]
    $region9: #{reconstructor_forward.4} parent=1 // pred_fallthru
      _
    // Predicated region
    $region10: #{reconstructor_forward.4} parent=1 // pred_check
      _
    $region11: #{reconstructor_forward.4} parent=1 // pred_check_branch
      %40 = sbr.rel (0) target = $region13
    $region12: #{reconstructor_forward.4} parent=1 // pred_region
      %s42 = ssub.s32 1024, 1024
      %43 = vsyncadd [#allocation5], %s42
      %s44 = sshll.u32 [#allocation6], 4
      %s45 = int_to_ptr.vmem [resolvable:$true] %s44
      %50 = dma.hbm_to_vmem [thread:$0]  %s2, 1024, %s45, [#allocation5], 128, 128, 8
    $region13: #{reconstructor_forward.4} parent=1 // pred_fallthru
      _
    // Predicated region
    $region14: #{reconstructor_forward.4} parent=1 // pred_check
      _
    $region15: #{reconstructor_forward.4} parent=1 // pred_check_branch
      %52 = sbr.rel (0) target = $region17
    $region16: #{reconstructor_forward.4} parent=1 // pred_region
      %s54 = ssub.s32 1024, 1024
      %55 = vsyncadd [#allocation8], %s54
      %s56 = sshll.u32 [#allocation7], 4
      %s57 = int_to_ptr.vmem [resolvable:$true] %s56
      %62 = dma.hbm_to_vmem [thread:$0]  %s3, 1024, %s57, [#allocation8], 128, 128, 8
    $region17: #{reconstructor_forward.4} parent=1 // pred_fallthru
      _
    // Predicated region
    $region18: #{reconstructor_forward.4} parent=1 // pred_check
      _
    $region19: #{reconstructor_forward.4} parent=1 // pred_check_branch
      %64 = sbr.rel (0) target = $region21
    $region20: #{reconstructor_forward.4} parent=1 // pred_region
      %s66 = ssub.s32 32, 32
      %67 = vsyncadd [#allocation8], %s66
      %s69 = sshll.u32 [#allocation9], 4
      %s70 = int_to_ptr.vmem [resolvable:$true] %s69
      %72 = dma.hbm_to_vmem [thread:$0]  %s4, 32, %s70, [#allocation8]
    $region21: #{reconstructor_forward.4} parent=1 // pred_fallthru
      _
    // Predicated region
    $region22: #{reconstructor_forward.4} parent=1 // pred_check
      _
    $region23: #{reconstructor_forward.4} parent=1 // pred_check_branch
      %74 = sbr.rel (0) target = $region25
    $region24: #{reconstructor_forward.4} parent=1 // pred_region
      %s76 = ssub.s32 32, 32
      %77 = vsyncadd [#allocation11], %s76
      %s79 = sshll.u32 [#allocation10], 4
      %s80 = int_to_ptr.vmem [resolvable:$true] %s79
      %82 = dma.hbm_to_vmem [thread:$0]  %s5, 32, %s80, [#allocation11]
    $region25: #{reconstructor_forward.4} parent=1 // pred_fallthru
      _
    // Predicated region
    $region26: #{reconstructor_forward.4} parent=1 // pred_check
      _
    $region27: #{reconstructor_forward.4} parent=1 // pred_check_branch
      %84 = sbr.rel (0) target = $region29
    $region28: #{reconstructor_forward.4} parent=1 // pred_region
      _
    $region29: #{reconstructor_forward.4} parent=1 // pred_fallthru
      _
    // Predicated region
    $region30: #{reconstructor_forward.4} parent=1 // pred_check
      _
    $region31: #{reconstructor_forward.4} parent=1 // pred_check_branch
      %86 = sbr.rel (0) target = $region33
    $region32: #{reconstructor_forward.4} parent=1 // pred_region
      _
    $region33: #{reconstructor_forward.4} parent=1 // pred_fallthru
      _
    // Predicated region
    $region34: #{reconstructor_forward.4} parent=1 // pred_check
      _
    $region35: #{reconstructor_forward.4} parent=1 // pred_check_branch
      %88 = sbr.rel (0) target = $region37
    $region36: #{reconstructor_forward.4} parent=1 // pred_region
      _
    $region37: #{reconstructor_forward.4} parent=1 // pred_fallthru
      _
    // Predicated region
    $region38: #{reconstructor_forward.4} parent=1 // pred_check
      _
    $region39: #{reconstructor_forward.4} parent=1 // pred_check_branch
      %90 = sbr.rel (0) target = $region41
    $region40: #{reconstructor_forward.4} parent=1 // pred_region
      _
    $region41: #{reconstructor_forward.4} parent=1 // pred_fallthru
      _
    // Predicated region
    $region42: #{reconstructor_forward.4} parent=1 // pred_check
      _
    $region43: #{reconstructor_forward.4} parent=1 // pred_check_branch
      %92 = sbr.rel (0) target = $region45
    $region44: #{reconstructor_forward.4} parent=1 // pred_region
      %93 = dma.done [#allocation3], 16
    $region45: #{reconstructor_forward.4} parent=1 // pred_fallthru
      _
    // Predicated region
    $region46: #{reconstructor_forward.4} parent=1 // pred_check
      _
    $region47: #{reconstructor_forward.4} parent=1 // pred_check_branch
      %95 = sbr.rel (0) target = $region49
    $region48: #{reconstructor_forward.4} parent=1 // pred_region
      %96 = dma.done [#allocation5], 16
    $region49: #{reconstructor_forward.4} parent=1 // pred_fallthru
      _
    // Predicated region
    $region50: #{reconstructor_forward.4} parent=1 // pred_check
      _
    $region51: #{reconstructor_forward.4} parent=1 // pred_check_branch
      %98 = sbr.rel (0) target = $region53
    $region52: #{reconstructor_forward.4} parent=1 // pred_region
      %99 = dma.done [#allocation5], 1024
    $region53: #{reconstructor_forward.4} parent=1 // pred_fallthru
      _
    // Predicated region
    $region54: #{reconstructor_forward.4} parent=1 // pred_check
      _
    $region55: #{reconstructor_forward.4} parent=1 // pred_check_branch
      %101 = sbr.rel (0) target = $region57
    $region56: #{reconstructor_forward.4} parent=1 // pred_region
      %102 = dma.done [#allocation8], 1024
    $region57: #{reconstructor_forward.4} parent=1 // pred_fallthru
      _
    // Predicated region
    $region58: #{reconstructor_forward.4} parent=1 // pred_check
      _
    $region59: #{reconstructor_forward.4} parent=1 // pred_check_branch
      %104 = sbr.rel (0) target = $region61
    $region60: #{reconstructor_forward.4} parent=1 // pred_region
      %105 = dma.done [#allocation8], 32
    $region61: #{reconstructor_forward.4} parent=1 // pred_fallthru
      _
    // Predicated region
    $region62: #{reconstructor_forward.4} parent=1 // pred_check
      _
    $region63: #{reconstructor_forward.4} parent=1 // pred_check_branch
      %107 = sbr.rel (0) target = $region65
    $region64: #{reconstructor_forward.4} parent=1 // pred_region
      %108 = dma.done [#allocation11], 32
    $region65: #{reconstructor_forward.4} parent=1 // pred_fallthru
      _
    %v110 = vld [vmem:[#allocation2] sm:$0x1]
    %v111 = vld [vmem:[#allocation6] sm:$0xff]
    %v112 = vld [vmem:[#allocation6 + $0x8] sm:$0xff]
    %v113 = vld [vmem:[#allocation6 + $0x10] sm:$0xff]
    %v114 = vld [vmem:[#allocation6 + $0x18] sm:$0xff]
    %v115 = vld [vmem:[#allocation6 + $0x20] sm:$0xff]
    %v116 = vld [vmem:[#allocation6 + $0x28] sm:$0xff]
    %v117 = vld [vmem:[#allocation6 + $0x30] sm:$0xff]
    %v118 = vld [vmem:[#allocation6 + $0x38] sm:$0xff]
    %v119 = vld [vmem:[#allocation9] sm:$0x3]
    %v121 = vlaneseq
    %v122 = vshrl.u32 %v121, 7
    %v123 = vsub.s32 0, %v122
    %v124 = vrot.slane %v119, %v123
    %v125 = vlaneseq
    %v126 = vshrl.u32 %v125, 7
    %v127 = vsub.s32 1, %v126
    %v128 = vrot.slane %v119, %v127
    %v139 = vunpack.c.l.b16 %v111
    %v140 = vunpack.c.h.b16 %v111
    %v141 = vunpack.c.l.b16 %v112
    %v142 = vunpack.c.h.b16 %v112
    %v143 = vunpack.c.l.b16 %v113
    %v144 = vunpack.c.h.b16 %v113
    %v145 = vunpack.c.l.b16 %v114
    %v146 = vunpack.c.h.b16 %v114
    %v147 = vunpack.c.l.b16 %v115
    %v148 = vunpack.c.h.b16 %v115
    %v149 = vunpack.c.l.b16 %v116
    %v150 = vunpack.c.h.b16 %v116
    %v151 = vunpack.c.l.b16 %v117
    %v152 = vunpack.c.h.b16 %v117
    %v153 = vunpack.c.l.b16 %v118
    %v154 = vunpack.c.h.b16 %v118
    %v155 = vpack.c.b16 %v141, %v139
    %v156 = vpack.c.b16 %v142, %v140
    %v157 = vpack.c.b16 %v145, %v143
    %v158 = vpack.c.b16 %v146, %v144
    %v159 = vpack.c.b16 %v149, %v147
    %v160 = vpack.c.b16 %v150, %v148
    %v161 = vpack.c.b16 %v153, %v151
    %v162 = vpack.c.b16 %v154, %v152
    %vm171 = vcmask 523264
    %v173 = vsel %vm171, %v110, 0
    %175 = vmatprep.subr.bf16.mxu0 %v156
    %176 = vmatpush1.bf16.msra.mxu0 %v155
    %177 = vmatprep.subr.bf16.mxu0 %v158
    %178 = vmatpush1.bf16.msra.mxu0 %v157
    %179 = vmatprep.subr.bf16.mxu0 %v160
    %180 = vmatpush1.bf16.msra.mxu0 %v159
    %181 = vmatprep.subr.bf16.mxu0 %v162
    %182 = vmatpush1.bf16.msra.mxu0 %v161
    %183 = vmatprep.subr.bf16.mxu0 0
    %184 = vmatpush1.bf16.msra.mxu0 0
    %185 = vmatprep.subr.bf16.mxu0 0
    %186 = vmatpush1.bf16.msra.mxu0 0
    %187 = vmatprep.subr.bf16.mxu0 0
    %188 = vmatpush1.bf16.msra.mxu0 0
    %189 = vmatprep.subr.bf16.mxu0 0
    %190 = vmatpush1.bf16.msra.mxu0 0
    %191 = vmatprep.subr.bf16.mxu0 0
    %192 = vmatpush1.bf16.msra.mxu0 0
    %193 = vmatprep.subr.bf16.mxu0 0
    %194 = vmatpush1.bf16.msra.mxu0 0
    %195 = vmatprep.subr.bf16.mxu0 0
    %196 = vmatpush1.bf16.msra.mxu0 0
    %197 = vmatprep.subr.bf16.mxu0 0
    %198 = vmatpush1.bf16.msra.mxu0 0
    %199 = vmatprep.subr.bf16.mxu0 0
    %200 = vmatpush1.bf16.msra.mxu0 0
    %201 = vmatprep.subr.bf16.mxu0 0
    %202 = vmatpush1.bf16.msra.mxu0 0
    %203 = vmatprep.subr.bf16.mxu0 0
    %204 = vmatpush1.bf16.msra.mxu0 0
    %205 = vmatprep.subr.bf16.mxu0 0
    %206 = vmatpush1.bf16.msra.mxu0 0
    %207 = vmatprep.mubr.bf16.mxu0 0
    %208 = vmatmul.mubr.bf16.gmra.mrb[0].mxu0 %v173
    %v209 = vpop.f32.mrb[0].mxu0
    %v210 = vadd.f32 %v124, %v209
    %v211 = vpop.f32.mrb[0].mxu0
    %v212 = vadd.f32 %v128, %v211
    %v213 = vpop.f32.mrb[0].mxu0
    %v214 = vpop.f32.mrb[0].mxu0
    %215 = vdwg.mxu0
    %v216 = vld [vmem:[#allocation4] sm:$0x1]
    %v217 = vld [vmem:[#allocation7] sm:$0xff]
    %v218 = vld [vmem:[#allocation7 + $0x8] sm:$0xff]
    %v219 = vld [vmem:[#allocation7 + $0x10] sm:$0xff]
    %v220 = vld [vmem:[#allocation7 + $0x18] sm:$0xff]
    %v221 = vld [vmem:[#allocation7 + $0x20] sm:$0xff]
    %v222 = vld [vmem:[#allocation7 + $0x28] sm:$0xff]
    %v223 = vld [vmem:[#allocation7 + $0x30] sm:$0xff]
    %v224 = vld [vmem:[#allocation7 + $0x38] sm:$0xff]
    %v225 = vld [vmem:[#allocation10] sm:$0x3]
    %v227 = vlaneseq
    %v228 = vshrl.u32 %v227, 7
    %v229 = vsub.s32 0, %v228
    %v230 = vrot.slane %v225, %v229
    %v231 = vlaneseq
    %v232 = vshrl.u32 %v231, 7
    %v233 = vsub.s32 1, %v232
    %v234 = vrot.slane %v225, %v233
    %v245 = vunpack.c.l.b16 %v217
    %v246 = vunpack.c.h.b16 %v217
    %v247 = vunpack.c.l.b16 %v218
    %v248 = vunpack.c.h.b16 %v218
    %v249 = vunpack.c.l.b16 %v219
    %v250 = vunpack.c.h.b16 %v219
    %v251 = vunpack.c.l.b16 %v220
    %v252 = vunpack.c.h.b16 %v220
    %v253 = vunpack.c.l.b16 %v221
    %v254 = vunpack.c.h.b16 %v221
    %v255 = vunpack.c.l.b16 %v222
    %v256 = vunpack.c.h.b16 %v222
    %v257 = vunpack.c.l.b16 %v223
    %v258 = vunpack.c.h.b16 %v223
    %v259 = vunpack.c.l.b16 %v224
    %v260 = vunpack.c.h.b16 %v224
    %v261 = vpack.c.b16 %v247, %v245
    %v262 = vpack.c.b16 %v248, %v246
    %v263 = vpack.c.b16 %v251, %v249
    %v264 = vpack.c.b16 %v252, %v250
    %v265 = vpack.c.b16 %v255, %v253
    %v266 = vpack.c.b16 %v256, %v254
    %v267 = vpack.c.b16 %v259, %v257
    %v268 = vpack.c.b16 %v260, %v258
    %v278 = vsel %vm171, %v216, 0
    %280 = vmatprep.subr.bf16.mxu0 %v262
    %281 = vmatpush1.bf16.msra.mxu0 %v261
    %282 = vmatprep.subr.bf16.mxu0 %v264
    %283 = vmatpush1.bf16.msra.mxu0 %v263
    %284 = vmatprep.subr.bf16.mxu0 %v266
    %285 = vmatpush1.bf16.msra.mxu0 %v265
    %286 = vmatprep.subr.bf16.mxu0 %v268
    %287 = vmatpush1.bf16.msra.mxu0 %v267
    %288 = vmatprep.subr.bf16.mxu0 0
    %289 = vmatpush1.bf16.msra.mxu0 0
    %290 = vmatprep.subr.bf16.mxu0 0
    %291 = vmatpush1.bf16.msra.mxu0 0
    %292 = vmatprep.subr.bf16.mxu0 0
    %293 = vmatpush1.bf16.msra.mxu0 0
    %294 = vmatprep.subr.bf16.mxu0 0
    %295 = vmatpush1.bf16.msra.mxu0 0
    %296 = vmatprep.subr.bf16.mxu0 0
    %297 = vmatpush1.bf16.msra.mxu0 0
    %298 = vmatprep.subr.bf16.mxu0 0
    %299 = vmatpush1.bf16.msra.mxu0 0
    %300 = vmatprep.subr.bf16.mxu0 0
    %301 = vmatpush1.bf16.msra.mxu0 0
    %302 = vmatprep.subr.bf16.mxu0 0
    %303 = vmatpush1.bf16.msra.mxu0 0
    %304 = vmatprep.subr.bf16.mxu0 0
    %305 = vmatpush1.bf16.msra.mxu0 0
    %306 = vmatprep.subr.bf16.mxu0 0
    %307 = vmatpush1.bf16.msra.mxu0 0
    %308 = vmatprep.subr.bf16.mxu0 0
    %309 = vmatpush1.bf16.msra.mxu0 0
    %310 = vmatprep.subr.bf16.mxu0 0
    %311 = vmatpush1.bf16.msra.mxu0 0
    %312 = vmatprep.mubr.bf16.mxu0 0
    %313 = vmatmul.mubr.bf16.gmra.mrb[0].mxu0 %v278
    %v314 = vpop.f32.mrb[0].mxu0
    %v315 = vadd.f32 %v230, %v314
    %v316 = vpop.f32.mrb[0].mxu0
    %v317 = vadd.f32 %v234, %v316
    %v318 = vpop.f32.mrb[0].mxu0
    %v319 = vpop.f32.mrb[0].mxu0
    %320 = vdwg.mxu0
    %vm321 = vcmp.ge.f32.partialorder %v210, 0.0
    %vm322 = vcmp.ge.f32.partialorder %v212, 0.0
    %v323 = vmul.f32 %v210, 0.2
    %v324 = vmul.f32 %v212, 0.2
    %v325 = vsel %vm321, %v210, %v323
    %v326 = vsel %vm322, %v212, %v324
    %vm327 = vcmp.ge.f32.partialorder %v315, 0.0
    %vm328 = vcmp.ge.f32.partialorder %v317, 0.0
    %v329 = vmul.f32 %v315, 0.2
    %v330 = vmul.f32 %v317, 0.2
    %v331 = vsel %vm327, %v315, %v329
    %v332 = vsel %vm328, %v317, %v330
    %v333 = vpack.c.bf16 %v325, %v325
    %v334 = vpack.c.bf16 %v326, %v326
    %v335 = vld [vmem:[%s6] sm:$0xff]
    %v336 = vld [vmem:[%s6 + $0x8] sm:$0xff]
    %v337 = vld [vmem:[%s6 + $0x10] sm:$0xff]
    %v338 = vld [vmem:[%s6 + $0x18] sm:$0xff]
    %v339 = vld [vmem:[%s6 + $0x20] sm:$0xf]
    %v340 = vld [vmem:[%s6 + $0x24] sm:$0xff]
    %v341 = vld [vmem:[%s6 + $0x2c] sm:$0xff]
    %v342 = vld [vmem:[%s6 + $0x34] sm:$0xff]
    %v343 = vld [vmem:[%s6 + $0x3c] sm:$0xff]
    %v344 = vld [vmem:[%s6 + $0x44] sm:$0xf]
    %v345 = vld [vmem:[%s6 + $0x48] sm:$0xff]
    %v346 = vld [vmem:[%s6 + $0x50] sm:$0xff]
    %v347 = vld [vmem:[%s6 + $0x58] sm:$0xff]
    %v348 = vld [vmem:[%s6 + $0x60] sm:$0xff]
    %v349 = vld [vmem:[%s6 + $0x68] sm:$0xf]
    %v350 = vld [vmem:[%s6 + $0x6c] sm:$0xff]
    %v351 = vld [vmem:[%s6 + $0x74] sm:$0xff]
    %v352 = vld [vmem:[%s6 + $0x7c] sm:$0xff]
    %v353 = vld [vmem:[%s6 + $0x84] sm:$0xff]
    %v354 = vld [vmem:[%s6 + $0x8c] sm:$0xf]
    %v355 = vld [vmem:[%s6 + $0x90] sm:$0xff]
    %v356 = vld [vmem:[%s6 + $0x98] sm:$0xff]
    %v357 = vld [vmem:[%s6 + $0xa0] sm:$0xff]
    %v358 = vld [vmem:[%s6 + $0xa8] sm:$0xff]
    %v359 = vld [vmem:[%s6 + $0xb0] sm:$0xf]
    %v360 = vld [vmem:[%s6 + $0xb4] sm:$0xff]
    %v361 = vld [vmem:[%s6 + $0xbc] sm:$0xff]
    %v362 = vld [vmem:[%s6 + $0xc4] sm:$0xff]
    %v363 = vld [vmem:[%s6 + $0xcc] sm:$0xff]
    %v364 = vld [vmem:[%s6 + $0xd4] sm:$0xf]
    %v365 = vld [vmem:[%s6 + $0xd8] sm:$0xff]
    %v366 = vld [vmem:[%s6 + $0xe0] sm:$0xff]
    %v367 = vld [vmem:[%s6 + $0xe8] sm:$0xff]
    %v368 = vld [vmem:[%s6 + $0xf0] sm:$0xff]
    %v369 = vld [vmem:[%s6 + $0xf8] sm:$0xf]
    %v370 = vld [vmem:[%s6 + $0xfc] sm:$0xff]
    %v371 = vld [vmem:[%s6 + $0x104] sm:$0xff]
    %v372 = vld [vmem:[%s6 + $0x10c] sm:$0xff]
    %v373 = vld [vmem:[%s6 + $0x114] sm:$0xff]
    %v374 = vld [vmem:[%s6 + $0x11c] sm:$0xf]
    %v375 = vld [vmem:[%s6 + $0x120] sm:$0xff]
    %v376 = vld [vmem:[%s6 + $0x128] sm:$0xff]
    %v377 = vld [vmem:[%s6 + $0x130] sm:$0xff]
    %v378 = vld [vmem:[%s6 + $0x138] sm:$0xff]
    %v379 = vld [vmem:[%s6 + $0x140] sm:$0xf]
    %v380 = vld [vmem:[%s6 + $0x144] sm:$0xff]
    %v381 = vld [vmem:[%s6 + $0x14c] sm:$0xff]
    %v382 = vld [vmem:[%s6 + $0x154] sm:$0xff]
    %v383 = vld [vmem:[%s6 + $0x15c] sm:$0xff]
    %v384 = vld [vmem:[%s6 + $0x164] sm:$0xf]
    %v385 = vld [vmem:[%s6 + $0x168] sm:$0xff]
    %v386 = vld [vmem:[%s6 + $0x170] sm:$0xff]
    %v387 = vld [vmem:[%s6 + $0x178] sm:$0xff]
    %v388 = vld [vmem:[%s6 + $0x180] sm:$0xff]
    %v389 = vld [vmem:[%s6 + $0x188] sm:$0xf]
    %v390 = vld [vmem:[%s6 + $0x18c] sm:$0xff]
    %v391 = vld [vmem:[%s6 + $0x194] sm:$0xff]
    %v392 = vld [vmem:[%s6 + $0x19c] sm:$0xff]
    %v393 = vld [vmem:[%s6 + $0x1a4] sm:$0xff]
    %v394 = vld [vmem:[%s6 + $0x1ac] sm:$0xf]
    %v395 = vld [vmem:[%s6 + $0x1b0] sm:$0xff]
    %v396 = vld [vmem:[%s6 + $0x1b8] sm:$0xff]
    %v397 = vld [vmem:[%s6 + $0x1c0] sm:$0xff]
    %v398 = vld [vmem:[%s6 + $0x1c8] sm:$0xff]
    %v399 = vld [vmem:[%s6 + $0x1d0] sm:$0xf]
    %v400 = vld [vmem:[%s6 + $0x1d4] sm:$0xff]
    %v401 = vld [vmem:[%s6 + $0x1dc] sm:$0xff]
    %v402 = vld [vmem:[%s6 + $0x1e4] sm:$0xff]
    %v403 = vld [vmem:[%s6 + $0x1ec] sm:$0xff]
    %v404 = vld [vmem:[%s6 + $0x1f4] sm:$0xf]
    %v405 = vld [vmem:[%s6 + $0x1f8] sm:$0xff]
    %v406 = vld [vmem:[%s6 + $0x200] sm:$0xff]
    %v407 = vld [vmem:[%s6 + $0x208] sm:$0xff]
    %v408 = vld [vmem:[%s6 + $0x210] sm:$0xff]
    %v409 = vld [vmem:[%s6 + $0x218] sm:$0xf]
    %v410 = vld [vmem:[%s6 + $0x21c] sm:$0xff]
    %v411 = vld [vmem:[%s6 + $0x224] sm:$0xff]
    %v412 = vld [vmem:[%s6 + $0x22c] sm:$0xff]
    %v413 = vld [vmem:[%s6 + $0x234] sm:$0xff]
    %v414 = vld [vmem:[%s6 + $0x23c] sm:$0xf]
    %v415 = vld [vmem:[%s6 + $0x240] sm:$0xff]
    %v416 = vld [vmem:[%s6 + $0x248] sm:$0xff]
    %v417 = vld [vmem:[%s6 + $0x250] sm:$0xff]
    %v418 = vld [vmem:[%s6 + $0x258] sm:$0xff]
    %v419 = vld [vmem:[%s6 + $0x260] sm:$0xf]
    %v420 = vld [vmem:[%s6 + $0x264] sm:$0xff]
    %v421 = vld [vmem:[%s6 + $0x26c] sm:$0xff]
    %v422 = vld [vmem:[%s6 + $0x274] sm:$0xff]
    %v423 = vld [vmem:[%s6 + $0x27c] sm:$0xff]
    %v424 = vld [vmem:[%s6 + $0x284] sm:$0xf]
    %v425 = vld [vmem:[%s6 + $0x288] sm:$0xff]
    %v426 = vld [vmem:[%s6 + $0x290] sm:$0xff]
    %v427 = vld [vmem:[%s6 + $0x298] sm:$0xff]
    %v428 = vld [vmem:[%s6 + $0x2a0] sm:$0xff]
    %v429 = vld [vmem:[%s6 + $0x2a8] sm:$0xf]
    %v430 = vld [vmem:[%s6 + $0x2ac] sm:$0xff]
    %v431 = vld [vmem:[%s6 + $0x2b4] sm:$0xff]
    %v432 = vld [vmem:[%s6 + $0x2bc] sm:$0xff]
    %v433 = vld [vmem:[%s6 + $0x2c4] sm:$0xff]
    %v434 = vld [vmem:[%s6 + $0x2cc] sm:$0xf]
    %v435 = vld [vmem:[%s6 + $0x2d0] sm:$0xff]
    %v436 = vld [vmem:[%s6 + $0x2d8] sm:$0xff]
    %v437 = vld [vmem:[%s6 + $0x2e0] sm:$0xff]
    %v438 = vld [vmem:[%s6 + $0x2e8] sm:$0xff]
    %v439 = vld [vmem:[%s6 + $0x2f0] sm:$0xf]
    %v440 = vld [vmem:[%s6 + $0x2f4] sm:$0xff]
    %v441 = vld [vmem:[%s6 + $0x2fc] sm:$0xff]
    %v442 = vld [vmem:[%s6 + $0x304] sm:$0xff]
    %v443 = vld [vmem:[%s6 + $0x30c] sm:$0xff]
    %v444 = vld [vmem:[%s6 + $0x314] sm:$0xf]
    %v445 = vld [vmem:[%s6 + $0x318] sm:$0xff]
    %v446 = vld [vmem:[%s6 + $0x320] sm:$0xff]
    %v447 = vld [vmem:[%s6 + $0x328] sm:$0xff]
    %v448 = vld [vmem:[%s6 + $0x330] sm:$0xff]
    %v449 = vld [vmem:[%s6 + $0x338] sm:$0xf]
    %v450 = vld [vmem:[%s6 + $0x33c] sm:$0xff]
    %v451 = vld [vmem:[%s6 + $0x344] sm:$0xff]
    %v452 = vld [vmem:[%s6 + $0x34c] sm:$0xff]
    %v453 = vld [vmem:[%s6 + $0x354] sm:$0xff]
    %v454 = vld [vmem:[%s6 + $0x35c] sm:$0xf]
    %v455 = vld [vmem:[%s6 + $0x360] sm:$0xff]
    %v456 = vld [vmem:[%s6 + $0x368] sm:$0xff]
    %v457 = vld [vmem:[%s6 + $0x370] sm:$0xff]
    %v458 = vld [vmem:[%s6 + $0x378] sm:$0xff]
    %v459 = vld [vmem:[%s6 + $0x380] sm:$0xf]
    %v460 = vld [vmem:[%s6 + $0x384] sm:$0xff]
    %v461 = vld [vmem:[%s6 + $0x38c] sm:$0xff]
    %v462 = vld [vmem:[%s6 + $0x394] sm:$0xff]
    %v463 = vld [vmem:[%s6 + $0x39c] sm:$0xff]
    %v464 = vld [vmem:[%s6 + $0x3a4] sm:$0xf]
    %v465 = vld [vmem:[%s6 + $0x3a8] sm:$0xff]
    %v466 = vld [vmem:[%s6 + $0x3b0] sm:$0xff]
    %v467 = vld [vmem:[%s6 + $0x3b8] sm:$0xff]
    %v468 = vld [vmem:[%s6 + $0x3c0] sm:$0xff]
    %v469 = vld [vmem:[%s6 + $0x3c8] sm:$0xf]
    %v470 = vld [vmem:[%s6 + $0x3cc] sm:$0xff]
    %v471 = vld [vmem:[%s6 + $0x3d4] sm:$0xff]
    %v472 = vld [vmem:[%s6 + $0x3dc] sm:$0xff]
    %v473 = vld [vmem:[%s6 + $0x3e4] sm:$0xff]
    %v474 = vld [vmem:[%s6 + $0x3ec] sm:$0xf]
    %v475 = vld [vmem:[%s6 + $0x3f0] sm:$0xff]
    %v476 = vld [vmem:[%s6 + $0x3f8] sm:$0xff]
    %v477 = vld [vmem:[%s6 + $0x400] sm:$0xff]
    %v478 = vld [vmem:[%s6 + $0x408] sm:$0xff]
    %v479 = vld [vmem:[%s6 + $0x410] sm:$0xf]
    %v480 = vld [vmem:[%s6 + $0x414] sm:$0xff]
    %v481 = vld [vmem:[%s6 + $0x41c] sm:$0xff]
    %v482 = vld [vmem:[%s6 + $0x424] sm:$0xff]
    %v483 = vld [vmem:[%s6 + $0x42c] sm:$0xff]
    %v484 = vld [vmem:[%s6 + $0x434] sm:$0xf]
    %v485 = vld [vmem:[%s6 + $0x438] sm:$0xff]
    %v486 = vld [vmem:[%s6 + $0x440] sm:$0xff]
    %v487 = vld [vmem:[%s6 + $0x448] sm:$0xff]
    %v488 = vld [vmem:[%s6 + $0x450] sm:$0xff]
    %v489 = vld [vmem:[%s6 + $0x458] sm:$0xf]
    %v490 = vld [vmem:[%s6 + $0x45c] sm:$0xff]
    %v491 = vld [vmem:[%s6 + $0x464] sm:$0xff]
    %v492 = vld [vmem:[%s6 + $0x46c] sm:$0xff]
    %v493 = vld [vmem:[%s6 + $0x474] sm:$0xff]
    %v494 = vld [vmem:[%s6 + $0x47c] sm:$0xf]
    %v495 = vpack.c.bf16 %v331, %v331
    %v496 = vpack.c.bf16 %v332, %v332
    %v497 = vld [vmem:[%s7] sm:$0xff]
    %v498 = vld [vmem:[%s7 + $0x8] sm:$0xff]
    %v499 = vld [vmem:[%s7 + $0x10] sm:$0xff]
    %v500 = vld [vmem:[%s7 + $0x18] sm:$0xff]
    %v501 = vld [vmem:[%s7 + $0x20] sm:$0xf]
    %v502 = vld [vmem:[%s7 + $0x24] sm:$0xff]
    %v503 = vld [vmem:[%s7 + $0x2c] sm:$0xff]
    %v504 = vld [vmem:[%s7 + $0x34] sm:$0xff]
    %v505 = vld [vmem:[%s7 + $0x3c] sm:$0xff]
    %v506 = vld [vmem:[%s7 + $0x44] sm:$0xf]
    %v507 = vld [vmem:[%s7 + $0x48] sm:$0xff]
    %v508 = vld [vmem:[%s7 + $0x50] sm:$0xff]
    %v509 = vld [vmem:[%s7 + $0x58] sm:$0xff]
    %v510 = vld [vmem:[%s7 + $0x60] sm:$0xff]
    %v511 = vld [vmem:[%s7 + $0x68] sm:$0xf]
    %v512 = vld [vmem:[%s7 + $0x6c] sm:$0xff]
    %v513 = vld [vmem:[%s7 + $0x74] sm:$0xff]
    %v514 = vld [vmem:[%s7 + $0x7c] sm:$0xff]
    %v515 = vld [vmem:[%s7 + $0x84] sm:$0xff]
    %v516 = vld [vmem:[%s7 + $0x8c] sm:$0xf]
    %v517 = vld [vmem:[%s7 + $0x90] sm:$0xff]
    %v518 = vld [vmem:[%s7 + $0x98] sm:$0xff]
    %v519 = vld [vmem:[%s7 + $0xa0] sm:$0xff]
    %v520 = vld [vmem:[%s7 + $0xa8] sm:$0xff]
    %v521 = vld [vmem:[%s7 + $0xb0] sm:$0xf]
    %v522 = vld [vmem:[%s7 + $0xb4] sm:$0xff]
    %v523 = vld [vmem:[%s7 + $0xbc] sm:$0xff]
    %v524 = vld [vmem:[%s7 + $0xc4] sm:$0xff]
    %v525 = vld [vmem:[%s7 + $0xcc] sm:$0xff]
    %v526 = vld [vmem:[%s7 + $0xd4] sm:$0xf]
    %v527 = vld [vmem:[%s7 + $0xd8] sm:$0xff]
    %v528 = vld [vmem:[%s7 + $0xe0] sm:$0xff]
    %v529 = vld [vmem:[%s7 + $0xe8] sm:$0xff]
    %v530 = vld [vmem:[%s7 + $0xf0] sm:$0xff]
    %v531 = vld [vmem:[%s7 + $0xf8] sm:$0xf]
    %v532 = vld [vmem:[%s7 + $0xfc] sm:$0xff]
    %v533 = vld [vmem:[%s7 + $0x104] sm:$0xff]
    %v534 = vld [vmem:[%s7 + $0x10c] sm:$0xff]
    %v535 = vld [vmem:[%s7 + $0x114] sm:$0xff]
    %v536 = vld [vmem:[%s7 + $0x11c] sm:$0xf]
    %v537 = vld [vmem:[%s7 + $0x120] sm:$0xff]
    %v538 = vld [vmem:[%s7 + $0x128] sm:$0xff]
    %v539 = vld [vmem:[%s7 + $0x130] sm:$0xff]
    %v540 = vld [vmem:[%s7 + $0x138] sm:$0xff]
    %v541 = vld [vmem:[%s7 + $0x140] sm:$0xf]
    %v542 = vld [vmem:[%s7 + $0x144] sm:$0xff]
    %v543 = vld [vmem:[%s7 + $0x14c] sm:$0xff]
    %v544 = vld [vmem:[%s7 + $0x154] sm:$0xff]
    %v545 = vld [vmem:[%s7 + $0x15c] sm:$0xff]
    %v546 = vld [vmem:[%s7 + $0x164] sm:$0xf]
    %v547 = vld [vmem:[%s7 + $0x168] sm:$0xff]
    %v548 = vld [vmem:[%s7 + $0x170] sm:$0xff]
    %v549 = vld [vmem:[%s7 + $0x178] sm:$0xff]
    %v550 = vld [vmem:[%s7 + $0x180] sm:$0xff]
    %v551 = vld [vmem:[%s7 + $0x188] sm:$0xf]
    %v552 = vld [vmem:[%s7 + $0x18c] sm:$0xff]
    %v553 = vld [vmem:[%s7 + $0x194] sm:$0xff]
    %v554 = vld [vmem:[%s7 + $0x19c] sm:$0xff]
    %v555 = vld [vmem:[%s7 + $0x1a4] sm:$0xff]
    %v556 = vld [vmem:[%s7 + $0x1ac] sm:$0xf]
    %v557 = vld [vmem:[%s7 + $0x1b0] sm:$0xff]
    %v558 = vld [vmem:[%s7 + $0x1b8] sm:$0xff]
    %v559 = vld [vmem:[%s7 + $0x1c0] sm:$0xff]
    %v560 = vld [vmem:[%s7 + $0x1c8] sm:$0xff]
    %v561 = vld [vmem:[%s7 + $0x1d0] sm:$0xf]
    %v562 = vld [vmem:[%s7 + $0x1d4] sm:$0xff]
    %v563 = vld [vmem:[%s7 + $0x1dc] sm:$0xff]
    %v564 = vld [vmem:[%s7 + $0x1e4] sm:$0xff]
    %v565 = vld [vmem:[%s7 + $0x1ec] sm:$0xff]
    %v566 = vld [vmem:[%s7 + $0x1f4] sm:$0xf]
    %v567 = vld [vmem:[%s7 + $0x1f8] sm:$0xff]
    %v568 = vld [vmem:[%s7 + $0x200] sm:$0xff]
    %v569 = vld [vmem:[%s7 + $0x208] sm:$0xff]
    %v570 = vld [vmem:[%s7 + $0x210] sm:$0xff]
    %v571 = vld [vmem:[%s7 + $0x218] sm:$0xf]
    %v572 = vld [vmem:[%s7 + $0x21c] sm:$0xff]
    %v573 = vld [vmem:[%s7 + $0x224] sm:$0xff]
    %v574 = vld [vmem:[%s7 + $0x22c] sm:$0xff]
    %v575 = vld [vmem:[%s7 + $0x234] sm:$0xff]
    %v576 = vld [vmem:[%s7 + $0x23c] sm:$0xf]
    %v577 = vld [vmem:[%s7 + $0x240] sm:$0xff]
    %v578 = vld [vmem:[%s7 + $0x248] sm:$0xff]
    %v579 = vld [vmem:[%s7 + $0x250] sm:$0xff]
    %v580 = vld [vmem:[%s7 + $0x258] sm:$0xff]
    %v581 = vld [vmem:[%s7 + $0x260] sm:$0xf]
    %v582 = vld [vmem:[%s7 + $0x264] sm:$0xff]
    %v583 = vld [vmem:[%s7 + $0x26c] sm:$0xff]
    %v584 = vld [vmem:[%s7 + $0x274] sm:$0xff]
    %v585 = vld [vmem:[%s7 + $0x27c] sm:$0xff]
    %v586 = vld [vmem:[%s7 + $0x284] sm:$0xf]
    %v587 = vld [vmem:[%s7 + $0x288] sm:$0xff]
    %v588 = vld [vmem:[%s7 + $0x290] sm:$0xff]
    %v589 = vld [vmem:[%s7 + $0x298] sm:$0xff]
    %v590 = vld [vmem:[%s7 + $0x2a0] sm:$0xff]
    %v591 = vld [vmem:[%s7 + $0x2a8] sm:$0xf]
    %v592 = vld [vmem:[%s7 + $0x2ac] sm:$0xff]
    %v593 = vld [vmem:[%s7 + $0x2b4] sm:$0xff]
    %v594 = vld [vmem:[%s7 + $0x2bc] sm:$0xff]
    %v595 = vld [vmem:[%s7 + $0x2c4] sm:$0xff]
    %v596 = vld [vmem:[%s7 + $0x2cc] sm:$0xf]
    %v597 = vld [vmem:[%s7 + $0x2d0] sm:$0xff]
    %v598 = vld [vmem:[%s7 + $0x2d8] sm:$0xff]
    %v599 = vld [vmem:[%s7 + $0x2e0] sm:$0xff]
    %v600 = vld [vmem:[%s7 + $0x2e8] sm:$0xff]
    %v601 = vld [vmem:[%s7 + $0x2f0] sm:$0xf]
    %v602 = vld [vmem:[%s7 + $0x2f4] sm:$0xff]
    %v603 = vld [vmem:[%s7 + $0x2fc] sm:$0xff]
    %v604 = vld [vmem:[%s7 + $0x304] sm:$0xff]
    %v605 = vld [vmem:[%s7 + $0x30c] sm:$0xff]
    %v606 = vld [vmem:[%s7 + $0x314] sm:$0xf]
    %v607 = vld [vmem:[%s7 + $0x318] sm:$0xff]
    %v608 = vld [vmem:[%s7 + $0x320] sm:$0xff]
    %v609 = vld [vmem:[%s7 + $0x328] sm:$0xff]
    %v610 = vld [vmem:[%s7 + $0x330] sm:$0xff]
    %v611 = vld [vmem:[%s7 + $0x338] sm:$0xf]
    %v612 = vld [vmem:[%s7 + $0x33c] sm:$0xff]
    %v613 = vld [vmem:[%s7 + $0x344] sm:$0xff]
    %v614 = vld [vmem:[%s7 + $0x34c] sm:$0xff]
    %v615 = vld [vmem:[%s7 + $0x354] sm:$0xff]
    %v616 = vld [vmem:[%s7 + $0x35c] sm:$0xf]
    %v617 = vld [vmem:[%s7 + $0x360] sm:$0xff]
    %v618 = vld [vmem:[%s7 + $0x368] sm:$0xff]
    %v619 = vld [vmem:[%s7 + $0x370] sm:$0xff]
    %v620 = vld [vmem:[%s7 + $0x378] sm:$0xff]
    %v621 = vld [vmem:[%s7 + $0x380] sm:$0xf]
    %v622 = vld [vmem:[%s7 + $0x384] sm:$0xff]
    %v623 = vld [vmem:[%s7 + $0x38c] sm:$0xff]
    %v624 = vld [vmem:[%s7 + $0x394] sm:$0xff]
    %v625 = vld [vmem:[%s7 + $0x39c] sm:$0xff]
    %v626 = vld [vmem:[%s7 + $0x3a4] sm:$0xf]
    %v627 = vld [vmem:[%s7 + $0x3a8] sm:$0xff]
    %v628 = vld [vmem:[%s7 + $0x3b0] sm:$0xff]
    %v629 = vld [vmem:[%s7 + $0x3b8] sm:$0xff]
    %v630 = vld [vmem:[%s7 + $0x3c0] sm:$0xff]
    %v631 = vld [vmem:[%s7 + $0x3c8] sm:$0xf]
    %v632 = vld [vmem:[%s7 + $0x3cc] sm:$0xff]
    %v633 = vld [vmem:[%s7 + $0x3d4] sm:$0xff]
    %v634 = vld [vmem:[%s7 + $0x3dc] sm:$0xff]
    %v635 = vld [vmem:[%s7 + $0x3e4] sm:$0xff]
    %v636 = vld [vmem:[%s7 + $0x3ec] sm:$0xf]
    %v637 = vld [vmem:[%s7 + $0x3f0] sm:$0xff]
    %v638 = vld [vmem:[%s7 + $0x3f8] sm:$0xff]
    %v639 = vld [vmem:[%s7 + $0x400] sm:$0xff]
    %v640 = vld [vmem:[%s7 + $0x408] sm:$0xff]
    %v641 = vld [vmem:[%s7 + $0x410] sm:$0xf]
    %v642 = vld [vmem:[%s7 + $0x414] sm:$0xff]
    %v643 = vld [vmem:[%s7 + $0x41c] sm:$0xff]
    %v644 = vld [vmem:[%s7 + $0x424] sm:$0xff]
    %v645 = vld [vmem:[%s7 + $0x42c] sm:$0xff]
    %v646 = vld [vmem:[%s7 + $0x434] sm:$0xf]
    %v647 = vld [vmem:[%s7 + $0x438] sm:$0xff]
    %v648 = vld [vmem:[%s7 + $0x440] sm:$0xff]
    %v649 = vld [vmem:[%s7 + $0x448] sm:$0xff]
    %v650 = vld [vmem:[%s7 + $0x450] sm:$0xff]
    %v651 = vld [vmem:[%s7 + $0x458] sm:$0xf]
    %v652 = vld [vmem:[%s7 + $0x45c] sm:$0xff]
    %v653 = vld [vmem:[%s7 + $0x464] sm:$0xff]
    %v654 = vld [vmem:[%s7 + $0x46c] sm:$0xff]
    %v655 = vld [vmem:[%s7 + $0x474] sm:$0xff]
    %v656 = vld [vmem:[%s7 + $0x47c] sm:$0xf]
    %v817 = vunpack.c.l.b16 %v497
    %v818 = vunpack.c.h.b16 %v497
    %v819 = vunpack.c.l.b16 %v498
    %v820 = vunpack.c.h.b16 %v498
    %v821 = vunpack.c.l.b16 %v499
    %v822 = vunpack.c.h.b16 %v499
    %v823 = vunpack.c.l.b16 %v500
    %v824 = vunpack.c.h.b16 %v500
    %v825 = vunpack.c.l.b16 %v501
    %v826 = vunpack.c.l.b16 %v502
    %v827 = vunpack.c.h.b16 %v502
    %v828 = vunpack.c.l.b16 %v503
    %v829 = vunpack.c.h.b16 %v503
    %v830 = vunpack.c.l.b16 %v504
    %v831 = vunpack.c.h.b16 %v504
    %v832 = vunpack.c.l.b16 %v505
    %v833 = vunpack.c.h.b16 %v505
    %v834 = vunpack.c.l.b16 %v506
    %v835 = vunpack.c.l.b16 %v507
    %v836 = vunpack.c.h.b16 %v507
    %v837 = vunpack.c.l.b16 %v508
    %v838 = vunpack.c.h.b16 %v508
    %v839 = vunpack.c.l.b16 %v509
    %v840 = vunpack.c.h.b16 %v509
    %v841 = vunpack.c.l.b16 %v510
    %v842 = vunpack.c.h.b16 %v510
    %v843 = vunpack.c.l.b16 %v511
    %v844 = vunpack.c.l.b16 %v512
    %v845 = vunpack.c.h.b16 %v512
    %v846 = vunpack.c.l.b16 %v513
    %v847 = vunpack.c.h.b16 %v513
    %v848 = vunpack.c.l.b16 %v514
    %v849 = vunpack.c.h.b16 %v514
    %v850 = vunpack.c.l.b16 %v515
    %v851 = vunpack.c.h.b16 %v515
    %v852 = vunpack.c.l.b16 %v516
    %v853 = vunpack.c.l.b16 %v517
    %v854 = vunpack.c.h.b16 %v517
    %v855 = vunpack.c.l.b16 %v518
    %v856 = vunpack.c.h.b16 %v518
    %v857 = vunpack.c.l.b16 %v519
    %v858 = vunpack.c.h.b16 %v519
    %v859 = vunpack.c.l.b16 %v520
    %v860 = vunpack.c.h.b16 %v520
    %v861 = vunpack.c.l.b16 %v521
    %v862 = vunpack.c.l.b16 %v522
    %v863 = vunpack.c.h.b16 %v522
    %v864 = vunpack.c.l.b16 %v523
    %v865 = vunpack.c.h.b16 %v523
    %v866 = vunpack.c.l.b16 %v524
    %v867 = vunpack.c.h.b16 %v524
    %v868 = vunpack.c.l.b16 %v525
    %v869 = vunpack.c.h.b16 %v525
    %v870 = vunpack.c.l.b16 %v526
    %v871 = vunpack.c.l.b16 %v527
    %v872 = vunpack.c.h.b16 %v527
    %v873 = vunpack.c.l.b16 %v528
    %v874 = vunpack.c.h.b16 %v528
    %v875 = vunpack.c.l.b16 %v529
    %v876 = vunpack.c.h.b16 %v529
    %v877 = vunpack.c.l.b16 %v530
    %v878 = vunpack.c.h.b16 %v530
    %v879 = vunpack.c.l.b16 %v531
    %v880 = vunpack.c.l.b16 %v532
    %v881 = vunpack.c.h.b16 %v532
    %v882 = vunpack.c.l.b16 %v533
    %v883 = vunpack.c.h.b16 %v533
    %v884 = vunpack.c.l.b16 %v534
    %v885 = vunpack.c.h.b16 %v534
    %v886 = vunpack.c.l.b16 %v535
    %v887 = vunpack.c.h.b16 %v535
    %v888 = vunpack.c.l.b16 %v536
    %v889 = vunpack.c.l.b16 %v537
    %v890 = vunpack.c.h.b16 %v537
    %v891 = vunpack.c.l.b16 %v538
    %v892 = vunpack.c.h.b16 %v538
    %v893 = vunpack.c.l.b16 %v539
    %v894 = vunpack.c.h.b16 %v539
    %v895 = vunpack.c.l.b16 %v540
    %v896 = vunpack.c.h.b16 %v540
    %v897 = vunpack.c.l.b16 %v541
    %v898 = vunpack.c.l.b16 %v542
    %v899 = vunpack.c.h.b16 %v542
    %v900 = vunpack.c.l.b16 %v543
    %v901 = vunpack.c.h.b16 %v543
    %v902 = vunpack.c.l.b16 %v544
    %v903 = vunpack.c.h.b16 %v544
    %v904 = vunpack.c.l.b16 %v545
    %v905 = vunpack.c.h.b16 %v545
    %v906 = vunpack.c.l.b16 %v546
    %v907 = vunpack.c.l.b16 %v547
    %v908 = vunpack.c.h.b16 %v547
    %v909 = vunpack.c.l.b16 %v548
    %v910 = vunpack.c.h.b16 %v548
    %v911 = vunpack.c.l.b16 %v549
    %v912 = vunpack.c.h.b16 %v549
    %v913 = vunpack.c.l.b16 %v550
    %v914 = vunpack.c.h.b16 %v550
    %v915 = vunpack.c.l.b16 %v551
    %v916 = vunpack.c.l.b16 %v552
    %v917 = vunpack.c.h.b16 %v552
    %v918 = vunpack.c.l.b16 %v553
    %v919 = vunpack.c.h.b16 %v553
    %v920 = vunpack.c.l.b16 %v554
    %v921 = vunpack.c.h.b16 %v554
    %v922 = vunpack.c.l.b16 %v555
    %v923 = vunpack.c.h.b16 %v555
    %v924 = vunpack.c.l.b16 %v556
    %v925 = vunpack.c.l.b16 %v557
    %v926 = vunpack.c.h.b16 %v557
    %v927 = vunpack.c.l.b16 %v558
    %v928 = vunpack.c.h.b16 %v558
    %v929 = vunpack.c.l.b16 %v559
    %v930 = vunpack.c.h.b16 %v559
    %v931 = vunpack.c.l.b16 %v560
    %v932 = vunpack.c.h.b16 %v560
    %v933 = vunpack.c.l.b16 %v561
    %v934 = vunpack.c.l.b16 %v562
    %v935 = vunpack.c.h.b16 %v562
    %v936 = vunpack.c.l.b16 %v563
    %v937 = vunpack.c.h.b16 %v563
    %v938 = vunpack.c.l.b16 %v564
    %v939 = vunpack.c.h.b16 %v564
    %v940 = vunpack.c.l.b16 %v565
    %v941 = vunpack.c.h.b16 %v565
    %v942 = vunpack.c.l.b16 %v566
    %v943 = vunpack.c.l.b16 %v567
    %v944 = vunpack.c.h.b16 %v567
    %v945 = vunpack.c.l.b16 %v568
    %v946 = vunpack.c.h.b16 %v568
    %v947 = vunpack.c.l.b16 %v569
    %v948 = vunpack.c.h.b16 %v569
    %v949 = vunpack.c.l.b16 %v570
    %v950 = vunpack.c.h.b16 %v570
    %v951 = vunpack.c.l.b16 %v571
    %v952 = vunpack.c.l.b16 %v572
    %v953 = vunpack.c.h.b16 %v572
    %v954 = vunpack.c.l.b16 %v573
    %v955 = vunpack.c.h.b16 %v573
    %v956 = vunpack.c.l.b16 %v574
    %v957 = vunpack.c.h.b16 %v574
    %v958 = vunpack.c.l.b16 %v575
    %v959 = vunpack.c.h.b16 %v575
    %v960 = vunpack.c.l.b16 %v576
    %v961 = vunpack.c.l.b16 %v577
    %v962 = vunpack.c.h.b16 %v577
    %v963 = vunpack.c.l.b16 %v578
    %v964 = vunpack.c.h.b16 %v578
    %v965 = vunpack.c.l.b16 %v579
    %v966 = vunpack.c.h.b16 %v579
    %v967 = vunpack.c.l.b16 %v580
    %v968 = vunpack.c.h.b16 %v580
    %v969 = vunpack.c.l.b16 %v581
    %v970 = vunpack.c.l.b16 %v582
    %v971 = vunpack.c.h.b16 %v582
    %v972 = vunpack.c.l.b16 %v583
    %v973 = vunpack.c.h.b16 %v583
    %v974 = vunpack.c.l.b16 %v584
    %v975 = vunpack.c.h.b16 %v584
    %v976 = vunpack.c.l.b16 %v585
    %v977 = vunpack.c.h.b16 %v585
    %v978 = vunpack.c.l.b16 %v586
    %v979 = vunpack.c.l.b16 %v587
    %v980 = vunpack.c.h.b16 %v587
    %v981 = vunpack.c.l.b16 %v588
    %v982 = vunpack.c.h.b16 %v588
    %v983 = vunpack.c.l.b16 %v589
    %v984 = vunpack.c.h.b16 %v589
    %v985 = vunpack.c.l.b16 %v590
    %v986 = vunpack.c.h.b16 %v590
    %v987 = vunpack.c.l.b16 %v591
    %v988 = vunpack.c.l.b16 %v592
    %v989 = vunpack.c.h.b16 %v592
    %v990 = vunpack.c.l.b16 %v593
    %v991 = vunpack.c.h.b16 %v593
    %v992 = vunpack.c.l.b16 %v594
    %v993 = vunpack.c.h.b16 %v594
    %v994 = vunpack.c.l.b16 %v595
    %v995 = vunpack.c.h.b16 %v595
    %v996 = vunpack.c.l.b16 %v596
    %v997 = vunpack.c.l.b16 %v597
    %v998 = vunpack.c.h.b16 %v597
    %v999 = vunpack.c.l.b16 %v598
    %v1000 = vunpack.c.h.b16 %v598
    %v1001 = vunpack.c.l.b16 %v599
    %v1002 = vunpack.c.h.b16 %v599
    %v1003 = vunpack.c.l.b16 %v600
    %v1004 = vunpack.c.h.b16 %v600
    %v1005 = vunpack.c.l.b16 %v601
    %v1006 = vunpack.c.l.b16 %v602
    %v1007 = vunpack.c.h.b16 %v602
    %v1008 = vunpack.c.l.b16 %v603
    %v1009 = vunpack.c.h.b16 %v603
    %v1010 = vunpack.c.l.b16 %v604
    %v1011 = vunpack.c.h.b16 %v604
    %v1012 = vunpack.c.l.b16 %v605
    %v1013 = vunpack.c.h.b16 %v605
    %v1014 = vunpack.c.l.b16 %v606
    %v1015 = vunpack.c.l.b16 %v607
    %v1016 = vunpack.c.h.b16 %v607
    %v1017 = vunpack.c.l.b16 %v608
    %v1018 = vunpack.c.h.b16 %v608
    %v1019 = vunpack.c.l.b16 %v609
    %v1020 = vunpack.c.h.b16 %v609
    %v1021 = vunpack.c.l.b16 %v610
    %v1022 = vunpack.c.h.b16 %v610
    %v1023 = vunpack.c.l.b16 %v611
    %v1024 = vunpack.c.l.b16 %v612
    %v1025 = vunpack.c.h.b16 %v612
    %v1026 = vunpack.c.l.b16 %v613
    %v1027 = vunpack.c.h.b16 %v613
    %v1028 = vunpack.c.l.b16 %v614
    %v1029 = vunpack.c.h.b16 %v614
    %v1030 = vunpack.c.l.b16 %v615
    %v1031 = vunpack.c.h.b16 %v615
    %v1032 = vunpack.c.l.b16 %v616
    %v1033 = vunpack.c.l.b16 %v617
    %v1034 = vunpack.c.h.b16 %v617
    %v1035 = vunpack.c.l.b16 %v618
    %v1036 = vunpack.c.h.b16 %v618
    %v1037 = vunpack.c.l.b16 %v619
    %v1038 = vunpack.c.h.b16 %v619
    %v1039 = vunpack.c.l.b16 %v620
    %v1040 = vunpack.c.h.b16 %v620
    %v1041 = vunpack.c.l.b16 %v621
    %v1042 = vunpack.c.l.b16 %v622
    %v1043 = vunpack.c.h.b16 %v622
    %v1044 = vunpack.c.l.b16 %v623
    %v1045 = vunpack.c.h.b16 %v623
    %v1046 = vunpack.c.l.b16 %v624
    %v1047 = vunpack.c.h.b16 %v624
    %v1048 = vunpack.c.l.b16 %v625
    %v1049 = vunpack.c.h.b16 %v625
    %v1050 = vunpack.c.l.b16 %v626
    %v1051 = vunpack.c.l.b16 %v627
    %v1052 = vunpack.c.h.b16 %v627
    %v1053 = vunpack.c.l.b16 %v628
    %v1054 = vunpack.c.h.b16 %v628
    %v1055 = vunpack.c.l.b16 %v629
    %v1056 = vunpack.c.h.b16 %v629
    %v1057 = vunpack.c.l.b16 %v630
    %v1058 = vunpack.c.h.b16 %v630
    %v1059 = vunpack.c.l.b16 %v631
    %v1060 = vunpack.c.l.b16 %v632
    %v1061 = vunpack.c.h.b16 %v632
    %v1062 = vunpack.c.l.b16 %v633
    %v1063 = vunpack.c.h.b16 %v633
    %v1064 = vunpack.c.l.b16 %v634
    %v1065 = vunpack.c.h.b16 %v634
    %v1066 = vunpack.c.l.b16 %v635
    %v1067 = vunpack.c.h.b16 %v635
    %v1068 = vunpack.c.l.b16 %v636
    %v1069 = vunpack.c.l.b16 %v637
    %v1070 = vunpack.c.h.b16 %v637
    %v1071 = vunpack.c.l.b16 %v638
    %v1072 = vunpack.c.h.b16 %v638
    %v1073 = vunpack.c.l.b16 %v639
    %v1074 = vunpack.c.h.b16 %v639
    %v1075 = vunpack.c.l.b16 %v640
    %v1076 = vunpack.c.h.b16 %v640
    %v1077 = vunpack.c.l.b16 %v641
    %v1078 = vunpack.c.l.b16 %v642
    %v1079 = vunpack.c.h.b16 %v642
    %v1080 = vunpack.c.l.b16 %v643
    %v1081 = vunpack.c.h.b16 %v643
    %v1082 = vunpack.c.l.b16 %v644
    %v1083 = vunpack.c.h.b16 %v644
    %v1084 = vunpack.c.l.b16 %v645
    %v1085 = vunpack.c.h.b16 %v645
    %v1086 = vunpack.c.l.b16 %v646
    %v1087 = vunpack.c.l.b16 %v647
    %v1088 = vunpack.c.h.b16 %v647
    %v1089 = vunpack.c.l.b16 %v648
    %v1090 = vunpack.c.h.b16 %v648
    %v1091 = vunpack.c.l.b16 %v649
    %v1092 = vunpack.c.h.b16 %v649
    %v1093 = vunpack.c.l.b16 %v650
    %v1094 = vunpack.c.h.b16 %v650
    %v1095 = vunpack.c.l.b16 %v651
    %v1096 = vunpack.c.l.b16 %v652
    %v1097 = vunpack.c.h.b16 %v652
    %v1098 = vunpack.c.l.b16 %v653
    %v1099 = vunpack.c.h.b16 %v653
    %v1100 = vunpack.c.l.b16 %v654
    %v1101 = vunpack.c.h.b16 %v654
    %v1102 = vunpack.c.l.b16 %v655
    %v1103 = vunpack.c.h.b16 %v655
    %v1104 = vunpack.c.l.b16 %v656
    %v1105 = vpack.c.b16 %v826, %v817
    %v1106 = vpack.c.b16 %v827, %v818
    %v1107 = vpack.c.b16 %v828, %v819
    %v1108 = vpack.c.b16 %v829, %v820
    %v1109 = vpack.c.b16 %v830, %v821
    %v1110 = vpack.c.b16 %v831, %v822
    %v1111 = vpack.c.b16 %v832, %v823
    %v1112 = vpack.c.b16 %v833, %v824
    %v1113 = vpack.c.b16 %v834, %v825
    %v1114 = vpack.c.b16 %v844, %v835
    %v1115 = vpack.c.b16 %v845, %v836
    %v1116 = vpack.c.b16 %v846, %v837
    %v1117 = vpack.c.b16 %v847, %v838
    %v1118 = vpack.c.b16 %v848, %v839
    %v1119 = vpack.c.b16 %v849, %v840
    %v1120 = vpack.c.b16 %v850, %v841
    %v1121 = vpack.c.b16 %v851, %v842
    %v1122 = vpack.c.b16 %v852, %v843
    %v1123 = vpack.c.b16 %v862, %v853
    %v1124 = vpack.c.b16 %v863, %v854
    %v1125 = vpack.c.b16 %v864, %v855
    %v1126 = vpack.c.b16 %v865, %v856
    %v1127 = vpack.c.b16 %v866, %v857
    %v1128 = vpack.c.b16 %v867, %v858
    %v1129 = vpack.c.b16 %v868, %v859
    %v1130 = vpack.c.b16 %v869, %v860
    %v1131 = vpack.c.b16 %v870, %v861
    %v1132 = vpack.c.b16 %v880, %v871
    %v1133 = vpack.c.b16 %v881, %v872
    %v1134 = vpack.c.b16 %v882, %v873
    %v1135 = vpack.c.b16 %v883, %v874
    %v1136 = vpack.c.b16 %v884, %v875
    %v1137 = vpack.c.b16 %v885, %v876
    %v1138 = vpack.c.b16 %v886, %v877
    %v1139 = vpack.c.b16 %v887, %v878
    %v1140 = vpack.c.b16 %v888, %v879
    %v1141 = vpack.c.b16 %v898, %v889
    %v1142 = vpack.c.b16 %v899, %v890
    %v1143 = vpack.c.b16 %v900, %v891
    %v1144 = vpack.c.b16 %v901, %v892
    %v1145 = vpack.c.b16 %v902, %v893
    %v1146 = vpack.c.b16 %v903, %v894
    %v1147 = vpack.c.b16 %v904, %v895
    %v1148 = vpack.c.b16 %v905, %v896
    %v1149 = vpack.c.b16 %v906, %v897
    %v1150 = vpack.c.b16 %v916, %v907
    %v1151 = vpack.c.b16 %v917, %v908
    %v1152 = vpack.c.b16 %v918, %v909
    %v1153 = vpack.c.b16 %v919, %v910
    %v1154 = vpack.c.b16 %v920, %v911
    %v1155 = vpack.c.b16 %v921, %v912
    %v1156 = vpack.c.b16 %v922, %v913
    %v1157 = vpack.c.b16 %v923, %v914
    %v1158 = vpack.c.b16 %v924, %v915
    %v1159 = vpack.c.b16 %v934, %v925
    %v1160 = vpack.c.b16 %v935, %v926
    %v1161 = vpack.c.b16 %v936, %v927
    %v1162 = vpack.c.b16 %v937, %v928
    %v1163 = vpack.c.b16 %v938, %v929
    %v1164 = vpack.c.b16 %v939, %v930
    %v1165 = vpack.c.b16 %v940, %v931
    %v1166 = vpack.c.b16 %v941, %v932
    %v1167 = vpack.c.b16 %v942, %v933
    %v1168 = vpack.c.b16 %v952, %v943
    %v1169 = vpack.c.b16 %v953, %v944
    %v1170 = vpack.c.b16 %v954, %v945
    %v1171 = vpack.c.b16 %v955, %v946
    %v1172 = vpack.c.b16 %v956, %v947
    %v1173 = vpack.c.b16 %v957, %v948
    %v1174 = vpack.c.b16 %v958, %v949
    %v1175 = vpack.c.b16 %v959, %v950
    %v1176 = vpack.c.b16 %v960, %v951
    %v1177 = vpack.c.b16 %v970, %v961
    %v1178 = vpack.c.b16 %v971, %v962
    %v1179 = vpack.c.b16 %v972, %v963
    %v1180 = vpack.c.b16 %v973, %v964
    %v1181 = vpack.c.b16 %v974, %v965
    %v1182 = vpack.c.b16 %v975, %v966
    %v1183 = vpack.c.b16 %v976, %v967
    %v1184 = vpack.c.b16 %v977, %v968
    %v1185 = vpack.c.b16 %v978, %v969
    %v1186 = vpack.c.b16 %v988, %v979
    %v1187 = vpack.c.b16 %v989, %v980
    %v1188 = vpack.c.b16 %v990, %v981
    %v1189 = vpack.c.b16 %v991, %v982
    %v1190 = vpack.c.b16 %v992, %v983
    %v1191 = vpack.c.b16 %v993, %v984
    %v1192 = vpack.c.b16 %v994, %v985
    %v1193 = vpack.c.b16 %v995, %v986
    %v1194 = vpack.c.b16 %v996, %v987
    %v1195 = vpack.c.b16 %v1006, %v997
    %v1196 = vpack.c.b16 %v1007, %v998
    %v1197 = vpack.c.b16 %v1008, %v999
    %v1198 = vpack.c.b16 %v1009, %v1000
    %v1199 = vpack.c.b16 %v1010, %v1001
    %v1200 = vpack.c.b16 %v1011, %v1002
    %v1201 = vpack.c.b16 %v1012, %v1003
    %v1202 = vpack.c.b16 %v1013, %v1004
    %v1203 = vpack.c.b16 %v1014, %v1005
    %v1204 = vpack.c.b16 %v1024, %v1015
    %v1205 = vpack.c.b16 %v1025, %v1016
    %v1206 = vpack.c.b16 %v1026, %v1017
    %v1207 = vpack.c.b16 %v1027, %v1018
    %v1208 = vpack.c.b16 %v1028, %v1019
    %v1209 = vpack.c.b16 %v1029, %v1020
    %v1210 = vpack.c.b16 %v1030, %v1021
    %v1211 = vpack.c.b16 %v1031, %v1022
    %v1212 = vpack.c.b16 %v1032, %v1023
    %v1213 = vpack.c.b16 %v1042, %v1033
    %v1214 = vpack.c.b16 %v1043, %v1034
    %v1215 = vpack.c.b16 %v1044, %v1035
    %v1216 = vpack.c.b16 %v1045, %v1036
    %v1217 = vpack.c.b16 %v1046, %v1037
    %v1218 = vpack.c.b16 %v1047, %v1038
    %v1219 = vpack.c.b16 %v1048, %v1039
    %v1220 = vpack.c.b16 %v1049, %v1040
    %v1221 = vpack.c.b16 %v1050, %v1041
    %v1222 = vpack.c.b16 %v1060, %v1051
    %v1223 = vpack.c.b16 %v1061, %v1052
    %v1224 = vpack.c.b16 %v1062, %v1053
    %v1225 = vpack.c.b16 %v1063, %v1054
    %v1226 = vpack.c.b16 %v1064, %v1055
    %v1227 = vpack.c.b16 %v1065, %v1056
    %v1228 = vpack.c.b16 %v1066, %v1057
    %v1229 = vpack.c.b16 %v1067, %v1058
    %v1230 = vpack.c.b16 %v1068, %v1059
    %v1231 = vpack.c.b16 %v1078, %v1069
    %v1232 = vpack.c.b16 %v1079, %v1070
    %v1233 = vpack.c.b16 %v1080, %v1071
    %v1234 = vpack.c.b16 %v1081, %v1072
    %v1235 = vpack.c.b16 %v1082, %v1073
    %v1236 = vpack.c.b16 %v1083, %v1074
    %v1237 = vpack.c.b16 %v1084, %v1075
    %v1238 = vpack.c.b16 %v1085, %v1076
    %v1239 = vpack.c.b16 %v1086, %v1077
    %v1240 = vpack.c.b16 %v1096, %v1087
    %v1241 = vpack.c.b16 %v1097, %v1088
    %v1242 = vpack.c.b16 %v1098, %v1089
    %v1243 = vpack.c.b16 %v1099, %v1090
    %v1244 = vpack.c.b16 %v1100, %v1091
    %v1245 = vpack.c.b16 %v1101, %v1092
    %v1246 = vpack.c.b16 %v1102, %v1093
    %v1247 = vpack.c.b16 %v1103, %v1094
    %v1248 = vpack.c.b16 %v1104, %v1095
    %1393 = vmatprep.subr.bf16.mxu0 %v1106
    %1394 = vmatpush1.bf16.msra.mxu0 %v1105
    %1395 = vmatprep.subr.bf16.mxu0 %v1115
    %1396 = vmatpush1.bf16.msra.mxu0 %v1114
    %1397 = vmatprep.subr.bf16.mxu0 %v1124
    %1398 = vmatpush1.bf16.msra.mxu0 %v1123
    %1399 = vmatprep.subr.bf16.mxu0 %v1133
    %1400 = vmatpush1.bf16.msra.mxu0 %v1132
    %1401 = vmatprep.subr.bf16.mxu0 %v1142
    %1402 = vmatpush1.bf16.msra.mxu0 %v1141
    %1403 = vmatprep.subr.bf16.mxu0 %v1151
    %1404 = vmatpush1.bf16.msra.mxu0 %v1150
    %1405 = vmatprep.subr.bf16.mxu0 %v1160
    %1406 = vmatpush1.bf16.msra.mxu0 %v1159
    %1407 = vmatprep.subr.bf16.mxu0 %v1169
    %1408 = vmatpush1.bf16.msra.mxu0 %v1168
    %1409 = vmatprep.subr.bf16.mxu0 %v1178
    %1410 = vmatpush1.bf16.msra.mxu0 %v1177
    %1411 = vmatprep.subr.bf16.mxu0 %v1187
    %1412 = vmatpush1.bf16.msra.mxu0 %v1186
    %1413 = vmatprep.subr.bf16.mxu0 %v1196
    %1414 = vmatpush1.bf16.msra.mxu0 %v1195
    %1415 = vmatprep.subr.bf16.mxu0 %v1205
    %1416 = vmatpush1.bf16.msra.mxu0 %v1204
    %1417 = vmatprep.subr.bf16.mxu0 %v1214
    %1418 = vmatpush1.bf16.msra.mxu0 %v1213
    %1419 = vmatprep.subr.bf16.mxu0 %v1223
    %1420 = vmatpush1.bf16.msra.mxu0 %v1222
    %1421 = vmatprep.subr.bf16.mxu0 %v1232
    %1422 = vmatpush1.bf16.msra.mxu0 %v1231
    %1423 = vmatprep.subr.bf16.mxu0 %v1241
    %1424 = vmatpush1.bf16.msra.mxu0 %v1240
    %1425 = vmatprep.mubr.bf16.mxu0 %v496
    %1426 = vmatmul.mubr.bf16.gmra.mrb[0].mxu0 %v495
    %v1427 = vpop.f32.mrb[0].mxu0
    %v1428 = vadd.f32 0.0, %v1427
    %v1429 = vpop.f32.mrb[0].mxu0
    %v1430 = vadd.f32 0.0, %v1429
    %v1431 = vpop.f32.mrb[0].mxu0
    %v1432 = vpop.f32.mrb[0].mxu0
    %1433 = vdwg.mxu0
    %1434 = vmatprep.subr.bf16.mxu0 %v1108
    %1435 = vmatpush1.bf16.msra.mxu0 %v1107
    %1436 = vmatprep.subr.bf16.mxu0 %v1117
    %1437 = vmatpush1.bf16.msra.mxu0 %v1116
    %1438 = vmatprep.subr.bf16.mxu0 %v1126
    %1439 = vmatpush1.bf16.msra.mxu0 %v1125
    %1440 = vmatprep.subr.bf16.mxu0 %v1135
    %1441 = vmatpush1.bf16.msra.mxu0 %v1134
    %1442 = vmatprep.subr.bf16.mxu0 %v1144
    %1443 = vmatpush1.bf16.msra.mxu0 %v1143
    %1444 = vmatprep.subr.bf16.mxu0 %v1153
    %1445 = vmatpush1.bf16.msra.mxu0 %v1152
    %1446 = vmatprep.subr.bf16.mxu0 %v1162
    %1447 = vmatpush1.bf16.msra.mxu0 %v1161
    %1448 = vmatprep.subr.bf16.mxu0 %v1171
    %1449 = vmatpush1.bf16.msra.mxu0 %v1170
    %1450 = vmatprep.subr.bf16.mxu0 %v1180
    %1451 = vmatpush1.bf16.msra.mxu0 %v1179
    %1452 = vmatprep.subr.bf16.mxu0 %v1189
    %1453 = vmatpush1.bf16.msra.mxu0 %v1188
    %1454 = vmatprep.subr.bf16.mxu0 %v1198
    %1455 = vmatpush1.bf16.msra.mxu0 %v1197
    %1456 = vmatprep.subr.bf16.mxu0 %v1207
    %1457 = vmatpush1.bf16.msra.mxu0 %v1206
    %1458 = vmatprep.subr.bf16.mxu0 %v1216
    %1459 = vmatpush1.bf16.msra.mxu0 %v1215
    %1460 = vmatprep.subr.bf16.mxu0 %v1225
    %1461 = vmatpush1.bf16.msra.mxu0 %v1224
    %1462 = vmatprep.subr.bf16.mxu0 %v1234
    %1463 = vmatpush1.bf16.msra.mxu0 %v1233
    %1464 = vmatprep.subr.bf16.mxu0 %v1243
    %1465 = vmatpush1.bf16.msra.mxu0 %v1242
    %1466 = vmatprep.mubr.bf16.mxu0 %v496
    %1467 = vmatmul.mubr.bf16.gmra.mrb[0].mxu0 %v495
    %v1468 = vpop.f32.mrb[0].mxu0
    %v1469 = vadd.f32 0.0, %v1468
    %v1470 = vpop.f32.mrb[0].mxu0
    %v1471 = vadd.f32 0.0, %v1470
    %v1472 = vpop.f32.mrb[0].mxu0
    %v1473 = vpop.f32.mrb[0].mxu0
    %1474 = vdwg.mxu0
    %1475 = vmatprep.subr.bf16.mxu0 %v1110
    %1476 = vmatpush1.bf16.msra.mxu0 %v1109
    %1477 = vmatprep.subr.bf16.mxu0 %v1119
    %1478 = vmatpush1.bf16.msra.mxu0 %v1118
    %1479 = vmatprep.subr.bf16.mxu0 %v1128
    %1480 = vmatpush1.bf16.msra.mxu0 %v1127
    %1481 = vmatprep.subr.bf16.mxu0 %v1137
    %1482 = vmatpush1.bf16.msra.mxu0 %v1136
    %1483 = vmatprep.subr.bf16.mxu0 %v1146
    %1484 = vmatpush1.bf16.msra.mxu0 %v1145
    %1485 = vmatprep.subr.bf16.mxu0 %v1155
    %1486 = vmatpush1.bf16.msra.mxu0 %v1154
    %1487 = vmatprep.subr.bf16.mxu0 %v1164
    %1488 = vmatpush1.bf16.msra.mxu0 %v1163
    %1489 = vmatprep.subr.bf16.mxu0 %v1173
    %1490 = vmatpush1.bf16.msra.mxu0 %v1172
    %1491 = vmatprep.subr.bf16.mxu0 %v1182
    %1492 = vmatpush1.bf16.msra.mxu0 %v1181
    %1493 = vmatprep.subr.bf16.mxu0 %v1191
    %1494 = vmatpush1.bf16.msra.mxu0 %v1190
    %1495 = vmatprep.subr.bf16.mxu0 %v1200
    %1496 = vmatpush1.bf16.msra.mxu0 %v1199
    %1497 = vmatprep.subr.bf16.mxu0 %v1209
    %1498 = vmatpush1.bf16.msra.mxu0 %v1208
    %1499 = vmatprep.subr.bf16.mxu0 %v1218
    %1500 = vmatpush1.bf16.msra.mxu0 %v1217
    %1501 = vmatprep.subr.bf16.mxu0 %v1227
    %1502 = vmatpush1.bf16.msra.mxu0 %v1226
    %1503 = vmatprep.subr.bf16.mxu0 %v1236
    %1504 = vmatpush1.bf16.msra.mxu0 %v1235
    %1505 = vmatprep.subr.bf16.mxu0 %v1245
    %1506 = vmatpush1.bf16.msra.mxu0 %v1244
    %1507 = vmatprep.mubr.bf16.mxu0 %v496
    %1508 = vmatmul.mubr.bf16.gmra.mrb[0].mxu0 %v495
    %v1509 = vpop.f32.mrb[0].mxu0
    %v1510 = vadd.f32 0.0, %v1509
    %v1511 = vpop.f32.mrb[0].mxu0
    %v1512 = vadd.f32 0.0, %v1511
    %v1513 = vpop.f32.mrb[0].mxu0
    %v1514 = vpop.f32.mrb[0].mxu0
    %1515 = vdwg.mxu0
    %1516 = vmatprep.subr.bf16.mxu0 %v1112
    %1517 = vmatpush1.bf16.msra.mxu0 %v1111
    %1518 = vmatprep.subr.bf16.mxu0 %v1121
    %1519 = vmatpush1.bf16.msra.mxu0 %v1120
    %1520 = vmatprep.subr.bf16.mxu0 %v1130
    %1521 = vmatpush1.bf16.msra.mxu0 %v1129
    %1522 = vmatprep.subr.bf16.mxu0 %v1139
    %1523 = vmatpush1.bf16.msra.mxu0 %v1138
    %1524 = vmatprep.subr.bf16.mxu0 %v1148
    %1525 = vmatpush1.bf16.msra.mxu0 %v1147
    %1526 = vmatprep.subr.bf16.mxu0 %v1157
    %1527 = vmatpush1.bf16.msra.mxu0 %v1156
    %1528 = vmatprep.subr.bf16.mxu0 %v1166
    %1529 = vmatpush1.bf16.msra.mxu0 %v1165
    %1530 = vmatprep.subr.bf16.mxu0 %v1175
    %1531 = vmatpush1.bf16.msra.mxu0 %v1174
    %1532 = vmatprep.subr.bf16.mxu0 %v1184
    %1533 = vmatpush1.bf16.msra.mxu0 %v1183
    %1534 = vmatprep.subr.bf16.mxu0 %v1193
    %1535 = vmatpush1.bf16.msra.mxu0 %v1192
    %1536 = vmatprep.subr.bf16.mxu0 %v1202
    %1537 = vmatpush1.bf16.msra.mxu0 %v1201
    %1538 = vmatprep.subr.bf16.mxu0 %v1211
    %1539 = vmatpush1.bf16.msra.mxu0 %v1210
    %1540 = vmatprep.subr.bf16.mxu0 %v1220
    %1541 = vmatpush1.bf16.msra.mxu0 %v1219
    %1542 = vmatprep.subr.bf16.mxu0 %v1229
    %1543 = vmatpush1.bf16.msra.mxu0 %v1228
    %1544 = vmatprep.subr.bf16.mxu0 %v1238
    %1545 = vmatpush1.bf16.msra.mxu0 %v1237
    %1546 = vmatprep.subr.bf16.mxu0 %v1247
    %1547 = vmatpush1.bf16.msra.mxu0 %v1246
    %1548 = vmatprep.mubr.bf16.mxu0 %v496
    %1549 = vmatmul.mubr.bf16.gmra.mrb[0].mxu0 %v495
    %v1550 = vpop.f32.mrb[0].mxu0
    %v1551 = vadd.f32 0.0, %v1550
    %v1552 = vpop.f32.mrb[0].mxu0
    %v1553 = vadd.f32 0.0, %v1552
    %v1554 = vpop.f32.mrb[0].mxu0
    %v1555 = vpop.f32.mrb[0].mxu0
    %1556 = vdwg.mxu0
    %1557 = vmatprep.subr.bf16.mxu0 0
    %1558 = vmatpush1.bf16.msra.mxu0 %v1113
    %1559 = vmatprep.subr.bf16.mxu0 0
    %1560 = vmatpush1.bf16.msra.mxu0 %v1122
    %1561 = vmatprep.subr.bf16.mxu0 0
    %1562 = vmatpush1.bf16.msra.mxu0 %v1131
    %1563 = vmatprep.subr.bf16.mxu0 0
    %1564 = vmatpush1.bf16.msra.mxu0 %v1140
    %1565 = vmatprep.subr.bf16.mxu0 0
    %1566 = vmatpush1.bf16.msra.mxu0 %v1149
    %1567 = vmatprep.subr.bf16.mxu0 0
    %1568 = vmatpush1.bf16.msra.mxu0 %v1158
    %1569 = vmatprep.subr.bf16.mxu0 0
    %1570 = vmatpush1.bf16.msra.mxu0 %v1167
    %1571 = vmatprep.subr.bf16.mxu0 0
    %1572 = vmatpush1.bf16.msra.mxu0 %v1176
    %1573 = vmatprep.subr.bf16.mxu0 0
    %1574 = vmatpush1.bf16.msra.mxu0 %v1185
    %1575 = vmatprep.subr.bf16.mxu0 0
    %1576 = vmatpush1.bf16.msra.mxu0 %v1194
    %1577 = vmatprep.subr.bf16.mxu0 0
    %1578 = vmatpush1.bf16.msra.mxu0 %v1203
    %1579 = vmatprep.subr.bf16.mxu0 0
    %1580 = vmatpush1.bf16.msra.mxu0 %v1212
    %1581 = vmatprep.subr.bf16.mxu0 0
    %1582 = vmatpush1.bf16.msra.mxu0 %v1221
    %1583 = vmatprep.subr.bf16.mxu0 0
    %1584 = vmatpush1.bf16.msra.mxu0 %v1230
    %1585 = vmatprep.subr.bf16.mxu0 0
    %1586 = vmatpush1.bf16.msra.mxu0 %v1239
    %1587 = vmatprep.subr.bf16.mxu0 0
    %1588 = vmatpush1.bf16.msra.mxu0 %v1248
    %1589 = vmatprep.mubr.bf16.mxu0 %v496
    %1590 = vmatmul.mubr.bf16.gmra.mrb[0].mxu0 %v495
    %v1591 = vpop.f32.mrb[0].mxu0
    %v1592 = vadd.f32 0.0, %v1591
    %v1593 = vpop.f32.mrb[0].mxu0
    %v1594 = vpop.f32.mrb[0].mxu0
    %v1595 = vpop.f32.mrb[0].mxu0
    %1596 = vdwg.mxu0
    %v1757 = vunpack.c.l.b16 %v335
    %v1758 = vunpack.c.h.b16 %v335
    %v1759 = vunpack.c.l.b16 %v336
    %v1760 = vunpack.c.h.b16 %v336
    %v1761 = vunpack.c.l.b16 %v337
    %v1762 = vunpack.c.h.b16 %v337
    %v1763 = vunpack.c.l.b16 %v338
    %v1764 = vunpack.c.h.b16 %v338
    %v1765 = vunpack.c.l.b16 %v339
    %v1766 = vunpack.c.l.b16 %v340
    %v1767 = vunpack.c.h.b16 %v340
    %v1768 = vunpack.c.l.b16 %v341
    %v1769 = vunpack.c.h.b16 %v341
    %v1770 = vunpack.c.l.b16 %v342
    %v1771 = vunpack.c.h.b16 %v342
    %v1772 = vunpack.c.l.b16 %v343
    %v1773 = vunpack.c.h.b16 %v343
    %v1774 = vunpack.c.l.b16 %v344
    %v1775 = vunpack.c.l.b16 %v345
    %v1776 = vunpack.c.h.b16 %v345
    %v1777 = vunpack.c.l.b16 %v346
    %v1778 = vunpack.c.h.b16 %v346
    %v1779 = vunpack.c.l.b16 %v347
    %v1780 = vunpack.c.h.b16 %v347
    %v1781 = vunpack.c.l.b16 %v348
    %v1782 = vunpack.c.h.b16 %v348
    %v1783 = vunpack.c.l.b16 %v349
    %v1784 = vunpack.c.l.b16 %v350
    %v1785 = vunpack.c.h.b16 %v350
    %v1786 = vunpack.c.l.b16 %v351
    %v1787 = vunpack.c.h.b16 %v351
    %v1788 = vunpack.c.l.b16 %v352
    %v1789 = vunpack.c.h.b16 %v352
    %v1790 = vunpack.c.l.b16 %v353
    %v1791 = vunpack.c.h.b16 %v353
    %v1792 = vunpack.c.l.b16 %v354
    %v1793 = vunpack.c.l.b16 %v355
    %v1794 = vunpack.c.h.b16 %v355
    %v1795 = vunpack.c.l.b16 %v356
    %v1796 = vunpack.c.h.b16 %v356
    %v1797 = vunpack.c.l.b16 %v357
    %v1798 = vunpack.c.h.b16 %v357
    %v1799 = vunpack.c.l.b16 %v358
    %v1800 = vunpack.c.h.b16 %v358
    %v1801 = vunpack.c.l.b16 %v359
    %v1802 = vunpack.c.l.b16 %v360
    %v1803 = vunpack.c.h.b16 %v360
    %v1804 = vunpack.c.l.b16 %v361
    %v1805 = vunpack.c.h.b16 %v361
    %v1806 = vunpack.c.l.b16 %v362
    %v1807 = vunpack.c.h.b16 %v362
    %v1808 = vunpack.c.l.b16 %v363
    %v1809 = vunpack.c.h.b16 %v363
    %v1810 = vunpack.c.l.b16 %v364
    %v1811 = vunpack.c.l.b16 %v365
    %v1812 = vunpack.c.h.b16 %v365
    %v1813 = vunpack.c.l.b16 %v366
    %v1814 = vunpack.c.h.b16 %v366
    %v1815 = vunpack.c.l.b16 %v367
    %v1816 = vunpack.c.h.b16 %v367
    %v1817 = vunpack.c.l.b16 %v368
    %v1818 = vunpack.c.h.b16 %v368
    %v1819 = vunpack.c.l.b16 %v369
    %v1820 = vunpack.c.l.b16 %v370
    %v1821 = vunpack.c.h.b16 %v370
    %v1822 = vunpack.c.l.b16 %v371
    %v1823 = vunpack.c.h.b16 %v371
    %v1824 = vunpack.c.l.b16 %v372
    %v1825 = vunpack.c.h.b16 %v372
    %v1826 = vunpack.c.l.b16 %v373
    %v1827 = vunpack.c.h.b16 %v373
    %v1828 = vunpack.c.l.b16 %v374
    %v1829 = vunpack.c.l.b16 %v375
    %v1830 = vunpack.c.h.b16 %v375
    %v1831 = vunpack.c.l.b16 %v376
    %v1832 = vunpack.c.h.b16 %v376
    %v1833 = vunpack.c.l.b16 %v377
    %v1834 = vunpack.c.h.b16 %v377
    %v1835 = vunpack.c.l.b16 %v378
    %v1836 = vunpack.c.h.b16 %v378
    %v1837 = vunpack.c.l.b16 %v379
    %v1838 = vunpack.c.l.b16 %v380
    %v1839 = vunpack.c.h.b16 %v380
    %v1840 = vunpack.c.l.b16 %v381
    %v1841 = vunpack.c.h.b16 %v381
    %v1842 = vunpack.c.l.b16 %v382
    %v1843 = vunpack.c.h.b16 %v382
    %v1844 = vunpack.c.l.b16 %v383
    %v1845 = vunpack.c.h.b16 %v383
    %v1846 = vunpack.c.l.b16 %v384
    %v1847 = vunpack.c.l.b16 %v385
    %v1848 = vunpack.c.h.b16 %v385
    %v1849 = vunpack.c.l.b16 %v386
    %v1850 = vunpack.c.h.b16 %v386
    %v1851 = vunpack.c.l.b16 %v387
    %v1852 = vunpack.c.h.b16 %v387
    %v1853 = vunpack.c.l.b16 %v388
    %v1854 = vunpack.c.h.b16 %v388
    %v1855 = vunpack.c.l.b16 %v389
    %v1856 = vunpack.c.l.b16 %v390
    %v1857 = vunpack.c.h.b16 %v390
    %v1858 = vunpack.c.l.b16 %v391
    %v1859 = vunpack.c.h.b16 %v391
    %v1860 = vunpack.c.l.b16 %v392
    %v1861 = vunpack.c.h.b16 %v392
    %v1862 = vunpack.c.l.b16 %v393
    %v1863 = vunpack.c.h.b16 %v393
    %v1864 = vunpack.c.l.b16 %v394
    %v1865 = vunpack.c.l.b16 %v395
    %v1866 = vunpack.c.h.b16 %v395
    %v1867 = vunpack.c.l.b16 %v396
    %v1868 = vunpack.c.h.b16 %v396
    %v1869 = vunpack.c.l.b16 %v397
    %v1870 = vunpack.c.h.b16 %v397
    %v1871 = vunpack.c.l.b16 %v398
    %v1872 = vunpack.c.h.b16 %v398
    %v1873 = vunpack.c.l.b16 %v399
    %v1874 = vunpack.c.l.b16 %v400
    %v1875 = vunpack.c.h.b16 %v400
    %v1876 = vunpack.c.l.b16 %v401
    %v1877 = vunpack.c.h.b16 %v401
    %v1878 = vunpack.c.l.b16 %v402
    %v1879 = vunpack.c.h.b16 %v402
    %v1880 = vunpack.c.l.b16 %v403
    %v1881 = vunpack.c.h.b16 %v403
    %v1882 = vunpack.c.l.b16 %v404
    %v1883 = vunpack.c.l.b16 %v405
    %v1884 = vunpack.c.h.b16 %v405
    %v1885 = vunpack.c.l.b16 %v406
    %v1886 = vunpack.c.h.b16 %v406
    %v1887 = vunpack.c.l.b16 %v407
    %v1888 = vunpack.c.h.b16 %v407
    %v1889 = vunpack.c.l.b16 %v408
    %v1890 = vunpack.c.h.b16 %v408
    %v1891 = vunpack.c.l.b16 %v409
    %v1892 = vunpack.c.l.b16 %v410
    %v1893 = vunpack.c.h.b16 %v410
    %v1894 = vunpack.c.l.b16 %v411
    %v1895 = vunpack.c.h.b16 %v411
    %v1896 = vunpack.c.l.b16 %v412
    %v1897 = vunpack.c.h.b16 %v412
    %v1898 = vunpack.c.l.b16 %v413
    %v1899 = vunpack.c.h.b16 %v413
    %v1900 = vunpack.c.l.b16 %v414
    %v1901 = vunpack.c.l.b16 %v415
    %v1902 = vunpack.c.h.b16 %v415
    %v1903 = vunpack.c.l.b16 %v416
    %v1904 = vunpack.c.h.b16 %v416
    %v1905 = vunpack.c.l.b16 %v417
    %v1906 = vunpack.c.h.b16 %v417
    %v1907 = vunpack.c.l.b16 %v418
    %v1908 = vunpack.c.h.b16 %v418
    %v1909 = vunpack.c.l.b16 %v419
    %v1910 = vunpack.c.l.b16 %v420
    %v1911 = vunpack.c.h.b16 %v420
    %v1912 = vunpack.c.l.b16 %v421
    %v1913 = vunpack.c.h.b16 %v421
    %v1914 = vunpack.c.l.b16 %v422
    %v1915 = vunpack.c.h.b16 %v422
    %v1916 = vunpack.c.l.b16 %v423
    %v1917 = vunpack.c.h.b16 %v423
    %v1918 = vunpack.c.l.b16 %v424
    %v1919 = vunpack.c.l.b16 %v425
    %v1920 = vunpack.c.h.b16 %v425
    %v1921 = vunpack.c.l.b16 %v426
    %v1922 = vunpack.c.h.b16 %v426
    %v1923 = vunpack.c.l.b16 %v427
    %v1924 = vunpack.c.h.b16 %v427
    %v1925 = vunpack.c.l.b16 %v428
    %v1926 = vunpack.c.h.b16 %v428
    %v1927 = vunpack.c.l.b16 %v429
    %v1928 = vunpack.c.l.b16 %v430
    %v1929 = vunpack.c.h.b16 %v430
    %v1930 = vunpack.c.l.b16 %v431
    %v1931 = vunpack.c.h.b16 %v431
    %v1932 = vunpack.c.l.b16 %v432
    %v1933 = vunpack.c.h.b16 %v432
    %v1934 = vunpack.c.l.b16 %v433
    %v1935 = vunpack.c.h.b16 %v433
    %v1936 = vunpack.c.l.b16 %v434
    %v1937 = vunpack.c.l.b16 %v435
    %v1938 = vunpack.c.h.b16 %v435
    %v1939 = vunpack.c.l.b16 %v436
    %v1940 = vunpack.c.h.b16 %v436
    %v1941 = vunpack.c.l.b16 %v437
    %v1942 = vunpack.c.h.b16 %v437
    %v1943 = vunpack.c.l.b16 %v438
    %v1944 = vunpack.c.h.b16 %v438
    %v1945 = vunpack.c.l.b16 %v439
    %v1946 = vunpack.c.l.b16 %v440
    %v1947 = vunpack.c.h.b16 %v440
    %v1948 = vunpack.c.l.b16 %v441
    %v1949 = vunpack.c.h.b16 %v441
    %v1950 = vunpack.c.l.b16 %v442
    %v1951 = vunpack.c.h.b16 %v442
    %v1952 = vunpack.c.l.b16 %v443
    %v1953 = vunpack.c.h.b16 %v443
    %v1954 = vunpack.c.l.b16 %v444
    %v1955 = vunpack.c.l.b16 %v445
    %v1956 = vunpack.c.h.b16 %v445
    %v1957 = vunpack.c.l.b16 %v446
    %v1958 = vunpack.c.h.b16 %v446
    %v1959 = vunpack.c.l.b16 %v447
    %v1960 = vunpack.c.h.b16 %v447
    %v1961 = vunpack.c.l.b16 %v448
    %v1962 = vunpack.c.h.b16 %v448
    %v1963 = vunpack.c.l.b16 %v449
    %v1964 = vunpack.c.l.b16 %v450
    %v1965 = vunpack.c.h.b16 %v450
    %v1966 = vunpack.c.l.b16 %v451
    %v1967 = vunpack.c.h.b16 %v451
    %v1968 = vunpack.c.l.b16 %v452
    %v1969 = vunpack.c.h.b16 %v452
    %v1970 = vunpack.c.l.b16 %v453
    %v1971 = vunpack.c.h.b16 %v453
    %v1972 = vunpack.c.l.b16 %v454
    %v1973 = vunpack.c.l.b16 %v455
    %v1974 = vunpack.c.h.b16 %v455
    %v1975 = vunpack.c.l.b16 %v456
    %v1976 = vunpack.c.h.b16 %v456
    %v1977 = vunpack.c.l.b16 %v457
    %v1978 = vunpack.c.h.b16 %v457
    %v1979 = vunpack.c.l.b16 %v458
    %v1980 = vunpack.c.h.b16 %v458
    %v1981 = vunpack.c.l.b16 %v459
    %v1982 = vunpack.c.l.b16 %v460
    %v1983 = vunpack.c.h.b16 %v460
    %v1984 = vunpack.c.l.b16 %v461
    %v1985 = vunpack.c.h.b16 %v461
    %v1986 = vunpack.c.l.b16 %v462
    %v1987 = vunpack.c.h.b16 %v462
    %v1988 = vunpack.c.l.b16 %v463
    %v1989 = vunpack.c.h.b16 %v463
    %v1990 = vunpack.c.l.b16 %v464
    %v1991 = vunpack.c.l.b16 %v465
    %v1992 = vunpack.c.h.b16 %v465
    %v1993 = vunpack.c.l.b16 %v466
    %v1994 = vunpack.c.h.b16 %v466
    %v1995 = vunpack.c.l.b16 %v467
    %v1996 = vunpack.c.h.b16 %v467
    %v1997 = vunpack.c.l.b16 %v468
    %v1998 = vunpack.c.h.b16 %v468
    %v1999 = vunpack.c.l.b16 %v469
    %v2000 = vunpack.c.l.b16 %v470
    %v2001 = vunpack.c.h.b16 %v470
    %v2002 = vunpack.c.l.b16 %v471
    %v2003 = vunpack.c.h.b16 %v471
    %v2004 = vunpack.c.l.b16 %v472
    %v2005 = vunpack.c.h.b16 %v472
    %v2006 = vunpack.c.l.b16 %v473
    %v2007 = vunpack.c.h.b16 %v473
    %v2008 = vunpack.c.l.b16 %v474
    %v2009 = vunpack.c.l.b16 %v475
    %v2010 = vunpack.c.h.b16 %v475
    %v2011 = vunpack.c.l.b16 %v476
    %v2012 = vunpack.c.h.b16 %v476
    %v2013 = vunpack.c.l.b16 %v477
    %v2014 = vunpack.c.h.b16 %v477
    %v2015 = vunpack.c.l.b16 %v478
    %v2016 = vunpack.c.h.b16 %v478
    %v2017 = vunpack.c.l.b16 %v479
    %v2018 = vunpack.c.l.b16 %v480
    %v2019 = vunpack.c.h.b16 %v480
    %v2020 = vunpack.c.l.b16 %v481
    %v2021 = vunpack.c.h.b16 %v481
    %v2022 = vunpack.c.l.b16 %v482
    %v2023 = vunpack.c.h.b16 %v482
    %v2024 = vunpack.c.l.b16 %v483
    %v2025 = vunpack.c.h.b16 %v483
    %v2026 = vunpack.c.l.b16 %v484
    %v2027 = vunpack.c.l.b16 %v485
    %v2028 = vunpack.c.h.b16 %v485
    %v2029 = vunpack.c.l.b16 %v486
    %v2030 = vunpack.c.h.b16 %v486
    %v2031 = vunpack.c.l.b16 %v487
    %v2032 = vunpack.c.h.b16 %v487
    %v2033 = vunpack.c.l.b16 %v488
    %v2034 = vunpack.c.h.b16 %v488
    %v2035 = vunpack.c.l.b16 %v489
    %v2036 = vunpack.c.l.b16 %v490
    %v2037 = vunpack.c.h.b16 %v490
    %v2038 = vunpack.c.l.b16 %v491
    %v2039 = vunpack.c.h.b16 %v491
    %v2040 = vunpack.c.l.b16 %v492
    %v2041 = vunpack.c.h.b16 %v492
    %v2042 = vunpack.c.l.b16 %v493
    %v2043 = vunpack.c.h.b16 %v493
    %v2044 = vunpack.c.l.b16 %v494
    %v2045 = vpack.c.b16 %v1766, %v1757
    %v2046 = vpack.c.b16 %v1767, %v1758
    %v2047 = vpack.c.b16 %v1768, %v1759
    %v2048 = vpack.c.b16 %v1769, %v1760
    %v2049 = vpack.c.b16 %v1770, %v1761
    %v2050 = vpack.c.b16 %v1771, %v1762
    %v2051 = vpack.c.b16 %v1772, %v1763
    %v2052 = vpack.c.b16 %v1773, %v1764
    %v2053 = vpack.c.b16 %v1774, %v1765
    %v2054 = vpack.c.b16 %v1784, %v1775
    %v2055 = vpack.c.b16 %v1785, %v1776
    %v2056 = vpack.c.b16 %v1786, %v1777
    %v2057 = vpack.c.b16 %v1787, %v1778
    %v2058 = vpack.c.b16 %v1788, %v1779
    %v2059 = vpack.c.b16 %v1789, %v1780
    %v2060 = vpack.c.b16 %v1790, %v1781
    %v2061 = vpack.c.b16 %v1791, %v1782
    %v2062 = vpack.c.b16 %v1792, %v1783
    %v2063 = vpack.c.b16 %v1802, %v1793
    %v2064 = vpack.c.b16 %v1803, %v1794
    %v2065 = vpack.c.b16 %v1804, %v1795
    %v2066 = vpack.c.b16 %v1805, %v1796
    %v2067 = vpack.c.b16 %v1806, %v1797
    %v2068 = vpack.c.b16 %v1807, %v1798
    %v2069 = vpack.c.b16 %v1808, %v1799
    %v2070 = vpack.c.b16 %v1809, %v1800
    %v2071 = vpack.c.b16 %v1810, %v1801
    %v2072 = vpack.c.b16 %v1820, %v1811
    %v2073 = vpack.c.b16 %v1821, %v1812
    %v2074 = vpack.c.b16 %v1822, %v1813
    %v2075 = vpack.c.b16 %v1823, %v1814
    %v2076 = vpack.c.b16 %v1824, %v1815
    %v2077 = vpack.c.b16 %v1825, %v1816
    %v2078 = vpack.c.b16 %v1826, %v1817
    %v2079 = vpack.c.b16 %v1827, %v1818
    %v2080 = vpack.c.b16 %v1828, %v1819
    %v2081 = vpack.c.b16 %v1838, %v1829
    %v2082 = vpack.c.b16 %v1839, %v1830
    %v2083 = vpack.c.b16 %v1840, %v1831
    %v2084 = vpack.c.b16 %v1841, %v1832
    %v2085 = vpack.c.b16 %v1842, %v1833
    %v2086 = vpack.c.b16 %v1843, %v1834
    %v2087 = vpack.c.b16 %v1844, %v1835
    %v2088 = vpack.c.b16 %v1845, %v1836
    %v2089 = vpack.c.b16 %v1846, %v1837
    %v2090 = vpack.c.b16 %v1856, %v1847
    %v2091 = vpack.c.b16 %v1857, %v1848
    %v2092 = vpack.c.b16 %v1858, %v1849
    %v2093 = vpack.c.b16 %v1859, %v1850
    %v2094 = vpack.c.b16 %v1860, %v1851
    %v2095 = vpack.c.b16 %v1861, %v1852
    %v2096 = vpack.c.b16 %v1862, %v1853
    %v2097 = vpack.c.b16 %v1863, %v1854
    %v2098 = vpack.c.b16 %v1864, %v1855
    %v2099 = vpack.c.b16 %v1874, %v1865
    %v2100 = vpack.c.b16 %v1875, %v1866
    %v2101 = vpack.c.b16 %v1876, %v1867
    %v2102 = vpack.c.b16 %v1877, %v1868
    %v2103 = vpack.c.b16 %v1878, %v1869
    %v2104 = vpack.c.b16 %v1879, %v1870
    %v2105 = vpack.c.b16 %v1880, %v1871
    %v2106 = vpack.c.b16 %v1881, %v1872
    %v2107 = vpack.c.b16 %v1882, %v1873
    %v2108 = vpack.c.b16 %v1892, %v1883
    %v2109 = vpack.c.b16 %v1893, %v1884
    %v2110 = vpack.c.b16 %v1894, %v1885
    %v2111 = vpack.c.b16 %v1895, %v1886
    %v2112 = vpack.c.b16 %v1896, %v1887
    %v2113 = vpack.c.b16 %v1897, %v1888
    %v2114 = vpack.c.b16 %v1898, %v1889
    %v2115 = vpack.c.b16 %v1899, %v1890
    %v2116 = vpack.c.b16 %v1900, %v1891
    %v2117 = vpack.c.b16 %v1910, %v1901
    %v2118 = vpack.c.b16 %v1911, %v1902
    %v2119 = vpack.c.b16 %v1912, %v1903
    %v2120 = vpack.c.b16 %v1913, %v1904
    %v2121 = vpack.c.b16 %v1914, %v1905
    %v2122 = vpack.c.b16 %v1915, %v1906
    %v2123 = vpack.c.b16 %v1916, %v1907
    %v2124 = vpack.c.b16 %v1917, %v1908
    %v2125 = vpack.c.b16 %v1918, %v1909
    %v2126 = vpack.c.b16 %v1928, %v1919
    %v2127 = vpack.c.b16 %v1929, %v1920
    %v2128 = vpack.c.b16 %v1930, %v1921
    %v2129 = vpack.c.b16 %v1931, %v1922
    %v2130 = vpack.c.b16 %v1932, %v1923
    %v2131 = vpack.c.b16 %v1933, %v1924
    %v2132 = vpack.c.b16 %v1934, %v1925
    %v2133 = vpack.c.b16 %v1935, %v1926
    %v2134 = vpack.c.b16 %v1936, %v1927
    %v2135 = vpack.c.b16 %v1946, %v1937
    %v2136 = vpack.c.b16 %v1947, %v1938
    %v2137 = vpack.c.b16 %v1948, %v1939
    %v2138 = vpack.c.b16 %v1949, %v1940
    %v2139 = vpack.c.b16 %v1950, %v1941
    %v2140 = vpack.c.b16 %v1951, %v1942
    %v2141 = vpack.c.b16 %v1952, %v1943
    %v2142 = vpack.c.b16 %v1953, %v1944
    %v2143 = vpack.c.b16 %v1954, %v1945
    %v2144 = vpack.c.b16 %v1964, %v1955
    %v2145 = vpack.c.b16 %v1965, %v1956
    %v2146 = vpack.c.b16 %v1966, %v1957
    %v2147 = vpack.c.b16 %v1967, %v1958
    %v2148 = vpack.c.b16 %v1968, %v1959
    %v2149 = vpack.c.b16 %v1969, %v1960
    %v2150 = vpack.c.b16 %v1970, %v1961
    %v2151 = vpack.c.b16 %v1971, %v1962
    %v2152 = vpack.c.b16 %v1972, %v1963
    %v2153 = vpack.c.b16 %v1982, %v1973
    %v2154 = vpack.c.b16 %v1983, %v1974
    %v2155 = vpack.c.b16 %v1984, %v1975
    %v2156 = vpack.c.b16 %v1985, %v1976
    %v2157 = vpack.c.b16 %v1986, %v1977
    %v2158 = vpack.c.b16 %v1987, %v1978
    %v2159 = vpack.c.b16 %v1988, %v1979
    %v2160 = vpack.c.b16 %v1989, %v1980
    %v2161 = vpack.c.b16 %v1990, %v1981
    %v2162 = vpack.c.b16 %v2000, %v1991
    %v2163 = vpack.c.b16 %v2001, %v1992
    %v2164 = vpack.c.b16 %v2002, %v1993
    %v2165 = vpack.c.b16 %v2003, %v1994
    %v2166 = vpack.c.b16 %v2004, %v1995
    %v2167 = vpack.c.b16 %v2005, %v1996
    %v2168 = vpack.c.b16 %v2006, %v1997
    %v2169 = vpack.c.b16 %v2007, %v1998
    %v2170 = vpack.c.b16 %v2008, %v1999
    %v2171 = vpack.c.b16 %v2018, %v2009
    %v2172 = vpack.c.b16 %v2019, %v2010
    %v2173 = vpack.c.b16 %v2020, %v2011
    %v2174 = vpack.c.b16 %v2021, %v2012
    %v2175 = vpack.c.b16 %v2022, %v2013
    %v2176 = vpack.c.b16 %v2023, %v2014
    %v2177 = vpack.c.b16 %v2024, %v2015
    %v2178 = vpack.c.b16 %v2025, %v2016
    %v2179 = vpack.c.b16 %v2026, %v2017
    %v2180 = vpack.c.b16 %v2036, %v2027
    %v2181 = vpack.c.b16 %v2037, %v2028
    %v2182 = vpack.c.b16 %v2038, %v2029
    %v2183 = vpack.c.b16 %v2039, %v2030
    %v2184 = vpack.c.b16 %v2040, %v2031
    %v2185 = vpack.c.b16 %v2041, %v2032
    %v2186 = vpack.c.b16 %v2042, %v2033
    %v2187 = vpack.c.b16 %v2043, %v2034
    %v2188 = vpack.c.b16 %v2044, %v2035
    %2333 = vmatprep.subr.bf16.mxu0 %v2046
    %2334 = vmatpush1.bf16.msra.mxu0 %v2045
    %2335 = vmatprep.subr.bf16.mxu0 %v2055
    %2336 = vmatpush1.bf16.msra.mxu0 %v2054
    %2337 = vmatprep.subr.bf16.mxu0 %v2064
    %2338 = vmatpush1.bf16.msra.mxu0 %v2063
    %2339 = vmatprep.subr.bf16.mxu0 %v2073
    %2340 = vmatpush1.bf16.msra.mxu0 %v2072
    %2341 = vmatprep.subr.bf16.mxu0 %v2082
    %2342 = vmatpush1.bf16.msra.mxu0 %v2081
    %2343 = vmatprep.subr.bf16.mxu0 %v2091
    %2344 = vmatpush1.bf16.msra.mxu0 %v2090
    %2345 = vmatprep.subr.bf16.mxu0 %v2100
    %2346 = vmatpush1.bf16.msra.mxu0 %v2099
    %2347 = vmatprep.subr.bf16.mxu0 %v2109
    %2348 = vmatpush1.bf16.msra.mxu0 %v2108
    %2349 = vmatprep.subr.bf16.mxu0 %v2118
    %2350 = vmatpush1.bf16.msra.mxu0 %v2117
    %2351 = vmatprep.subr.bf16.mxu0 %v2127
    %2352 = vmatpush1.bf16.msra.mxu0 %v2126
    %2353 = vmatprep.subr.bf16.mxu0 %v2136
    %2354 = vmatpush1.bf16.msra.mxu0 %v2135
    %2355 = vmatprep.subr.bf16.mxu0 %v2145
    %2356 = vmatpush1.bf16.msra.mxu0 %v2144
    %2357 = vmatprep.subr.bf16.mxu0 %v2154
    %2358 = vmatpush1.bf16.msra.mxu0 %v2153
    %2359 = vmatprep.subr.bf16.mxu0 %v2163
    %2360 = vmatpush1.bf16.msra.mxu0 %v2162
    %2361 = vmatprep.subr.bf16.mxu0 %v2172
    %2362 = vmatpush1.bf16.msra.mxu0 %v2171
    %2363 = vmatprep.subr.bf16.mxu0 %v2181
    %2364 = vmatpush1.bf16.msra.mxu0 %v2180
    %2365 = vmatprep.mubr.bf16.mxu0 %v334
    %2366 = vmatmul.mubr.bf16.gmra.mrb[0].mxu0 %v333
    %v2367 = vpop.f32.mrb[0].mxu0
    %v2368 = vadd.f32 %v1428, %v2367
    %v2369 = vpop.f32.mrb[0].mxu0
    %v2370 = vadd.f32 %v1430, %v2369
    %v2371 = vpop.f32.mrb[0].mxu0
    %v2372 = vpop.f32.mrb[0].mxu0
    %2373 = vdwg.mxu0
    %2374 = vmatprep.subr.bf16.mxu0 %v2048
    %2375 = vmatpush1.bf16.msra.mxu0 %v2047
    %2376 = vmatprep.subr.bf16.mxu0 %v2057
    %2377 = vmatpush1.bf16.msra.mxu0 %v2056
    %2378 = vmatprep.subr.bf16.mxu0 %v2066
    %2379 = vmatpush1.bf16.msra.mxu0 %v2065
    %2380 = vmatprep.subr.bf16.mxu0 %v2075
    %2381 = vmatpush1.bf16.msra.mxu0 %v2074
    %2382 = vmatprep.subr.bf16.mxu0 %v2084
    %2383 = vmatpush1.bf16.msra.mxu0 %v2083
    %2384 = vmatprep.subr.bf16.mxu0 %v2093
    %2385 = vmatpush1.bf16.msra.mxu0 %v2092
    %2386 = vmatprep.subr.bf16.mxu0 %v2102
    %2387 = vmatpush1.bf16.msra.mxu0 %v2101
    %2388 = vmatprep.subr.bf16.mxu0 %v2111
    %2389 = vmatpush1.bf16.msra.mxu0 %v2110
    %2390 = vmatprep.subr.bf16.mxu0 %v2120
    %2391 = vmatpush1.bf16.msra.mxu0 %v2119
    %2392 = vmatprep.subr.bf16.mxu0 %v2129
    %2393 = vmatpush1.bf16.msra.mxu0 %v2128
    %2394 = vmatprep.subr.bf16.mxu0 %v2138
    %2395 = vmatpush1.bf16.msra.mxu0 %v2137
    %2396 = vmatprep.subr.bf16.mxu0 %v2147
    %2397 = vmatpush1.bf16.msra.mxu0 %v2146
    %2398 = vmatprep.subr.bf16.mxu0 %v2156
    %2399 = vmatpush1.bf16.msra.mxu0 %v2155
    %2400 = vmatprep.subr.bf16.mxu0 %v2165
    %2401 = vmatpush1.bf16.msra.mxu0 %v2164
    %2402 = vmatprep.subr.bf16.mxu0 %v2174
    %2403 = vmatpush1.bf16.msra.mxu0 %v2173
    %2404 = vmatprep.subr.bf16.mxu0 %v2183
    %2405 = vmatpush1.bf16.msra.mxu0 %v2182
    %2406 = vmatprep.mubr.bf16.mxu0 %v334
    %2407 = vmatmul.mubr.bf16.gmra.mrb[0].mxu0 %v333
    %v2408 = vpop.f32.mrb[0].mxu0
    %v2409 = vadd.f32 %v1469, %v2408
    %v2410 = vpop.f32.mrb[0].mxu0
    %v2411 = vadd.f32 %v1471, %v2410
    %v2412 = vpop.f32.mrb[0].mxu0
    %v2413 = vpop.f32.mrb[0].mxu0
    %2414 = vdwg.mxu0
    %2415 = vmatprep.subr.bf16.mxu0 %v2050
    %2416 = vmatpush1.bf16.msra.mxu0 %v2049
    %2417 = vmatprep.subr.bf16.mxu0 %v2059
    %2418 = vmatpush1.bf16.msra.mxu0 %v2058
    %2419 = vmatprep.subr.bf16.mxu0 %v2068
    %2420 = vmatpush1.bf16.msra.mxu0 %v2067
    %2421 = vmatprep.subr.bf16.mxu0 %v2077
    %2422 = vmatpush1.bf16.msra.mxu0 %v2076
    %2423 = vmatprep.subr.bf16.mxu0 %v2086
    %2424 = vmatpush1.bf16.msra.mxu0 %v2085
    %2425 = vmatprep.subr.bf16.mxu0 %v2095
    %2426 = vmatpush1.bf16.msra.mxu0 %v2094
    %2427 = vmatprep.subr.bf16.mxu0 %v2104
    %2428 = vmatpush1.bf16.msra.mxu0 %v2103
    %2429 = vmatprep.subr.bf16.mxu0 %v2113
    %2430 = vmatpush1.bf16.msra.mxu0 %v2112
    %2431 = vmatprep.subr.bf16.mxu0 %v2122
    %2432 = vmatpush1.bf16.msra.mxu0 %v2121
    %2433 = vmatprep.subr.bf16.mxu0 %v2131
    %2434 = vmatpush1.bf16.msra.mxu0 %v2130
    %2435 = vmatprep.subr.bf16.mxu0 %v2140
    %2436 = vmatpush1.bf16.msra.mxu0 %v2139
    %2437 = vmatprep.subr.bf16.mxu0 %v2149
    %2438 = vmatpush1.bf16.msra.mxu0 %v2148
    %2439 = vmatprep.subr.bf16.mxu0 %v2158
    %2440 = vmatpush1.bf16.msra.mxu0 %v2157
    %2441 = vmatprep.subr.bf16.mxu0 %v2167
    %2442 = vmatpush1.bf16.msra.mxu0 %v2166
    %2443 = vmatprep.subr.bf16.mxu0 %v2176
    %2444 = vmatpush1.bf16.msra.mxu0 %v2175
    %2445 = vmatprep.subr.bf16.mxu0 %v2185
    %2446 = vmatpush1.bf16.msra.mxu0 %v2184
    %2447 = vmatprep.mubr.bf16.mxu0 %v334
    %2448 = vmatmul.mubr.bf16.gmra.mrb[0].mxu0 %v333
    %v2449 = vpop.f32.mrb[0].mxu0
    %v2450 = vadd.f32 %v1510, %v2449
    %v2451 = vpop.f32.mrb[0].mxu0
    %v2452 = vadd.f32 %v1512, %v2451
    %v2453 = vpop.f32.mrb[0].mxu0
    %v2454 = vpop.f32.mrb[0].mxu0
    %2455 = vdwg.mxu0
    %2456 = vmatprep.subr.bf16.mxu0 %v2052
    %2457 = vmatpush1.bf16.msra.mxu0 %v2051
    %2458 = vmatprep.subr.bf16.mxu0 %v2061
    %2459 = vmatpush1.bf16.msra.mxu0 %v2060
    %2460 = vmatprep.subr.bf16.mxu0 %v2070
    %2461 = vmatpush1.bf16.msra.mxu0 %v2069
    %2462 = vmatprep.subr.bf16.mxu0 %v2079
    %2463 = vmatpush1.bf16.msra.mxu0 %v2078
    %2464 = vmatprep.subr.bf16.mxu0 %v2088
    %2465 = vmatpush1.bf16.msra.mxu0 %v2087
    %2466 = vmatprep.subr.bf16.mxu0 %v2097
    %2467 = vmatpush1.bf16.msra.mxu0 %v2096
    %2468 = vmatprep.subr.bf16.mxu0 %v2106
    %2469 = vmatpush1.bf16.msra.mxu0 %v2105
    %2470 = vmatprep.subr.bf16.mxu0 %v2115
    %2471 = vmatpush1.bf16.msra.mxu0 %v2114
    %2472 = vmatprep.subr.bf16.mxu0 %v2124
    %2473 = vmatpush1.bf16.msra.mxu0 %v2123
    %2474 = vmatprep.subr.bf16.mxu0 %v2133
    %2475 = vmatpush1.bf16.msra.mxu0 %v2132
    %2476 = vmatprep.subr.bf16.mxu0 %v2142
    %2477 = vmatpush1.bf16.msra.mxu0 %v2141
    %2478 = vmatprep.subr.bf16.mxu0 %v2151
    %2479 = vmatpush1.bf16.msra.mxu0 %v2150
    %2480 = vmatprep.subr.bf16.mxu0 %v2160
    %2481 = vmatpush1.bf16.msra.mxu0 %v2159
    %2482 = vmatprep.subr.bf16.mxu0 %v2169
    %2483 = vmatpush1.bf16.msra.mxu0 %v2168
    %2484 = vmatprep.subr.bf16.mxu0 %v2178
    %2485 = vmatpush1.bf16.msra.mxu0 %v2177
    %2486 = vmatprep.subr.bf16.mxu0 %v2187
    %2487 = vmatpush1.bf16.msra.mxu0 %v2186
    %2488 = vmatprep.mubr.bf16.mxu0 %v334
    %2489 = vmatmul.mubr.bf16.gmra.mrb[0].mxu0 %v333
    %v2490 = vpop.f32.mrb[0].mxu0
    %v2491 = vadd.f32 %v1551, %v2490
    %v2492 = vpop.f32.mrb[0].mxu0
    %v2493 = vadd.f32 %v1553, %v2492
    %v2494 = vpop.f32.mrb[0].mxu0
    %v2495 = vpop.f32.mrb[0].mxu0
    %2496 = vdwg.mxu0
    %2497 = vmatprep.subr.bf16.mxu0 0
    %2498 = vmatpush1.bf16.msra.mxu0 %v2053
    %2499 = vmatprep.subr.bf16.mxu0 0
    %2500 = vmatpush1.bf16.msra.mxu0 %v2062
    %2501 = vmatprep.subr.bf16.mxu0 0
    %2502 = vmatpush1.bf16.msra.mxu0 %v2071
    %2503 = vmatprep.subr.bf16.mxu0 0
    %2504 = vmatpush1.bf16.msra.mxu0 %v2080
    %2505 = vmatprep.subr.bf16.mxu0 0
    %2506 = vmatpush1.bf16.msra.mxu0 %v2089
    %2507 = vmatprep.subr.bf16.mxu0 0
    %2508 = vmatpush1.bf16.msra.mxu0 %v2098
    %2509 = vmatprep.subr.bf16.mxu0 0
    %2510 = vmatpush1.bf16.msra.mxu0 %v2107
    %2511 = vmatprep.subr.bf16.mxu0 0
    %2512 = vmatpush1.bf16.msra.mxu0 %v2116
    %2513 = vmatprep.subr.bf16.mxu0 0
    %2514 = vmatpush1.bf16.msra.mxu0 %v2125
    %2515 = vmatprep.subr.bf16.mxu0 0
    %2516 = vmatpush1.bf16.msra.mxu0 %v2134
    %2517 = vmatprep.subr.bf16.mxu0 0
    %2518 = vmatpush1.bf16.msra.mxu0 %v2143
    %2519 = vmatprep.subr.bf16.mxu0 0
    %2520 = vmatpush1.bf16.msra.mxu0 %v2152
    %2521 = vmatprep.subr.bf16.mxu0 0
    %2522 = vmatpush1.bf16.msra.mxu0 %v2161
    %2523 = vmatprep.subr.bf16.mxu0 0
    %2524 = vmatpush1.bf16.msra.mxu0 %v2170
    %2525 = vmatprep.subr.bf16.mxu0 0
    %2526 = vmatpush1.bf16.msra.mxu0 %v2179
    %2527 = vmatprep.subr.bf16.mxu0 0
    %2528 = vmatpush1.bf16.msra.mxu0 %v2188
    %2529 = vmatprep.mubr.bf16.mxu0 %v334
    %2530 = vmatmul.mubr.bf16.gmra.mrb[0].mxu0 %v333
    %v2531 = vpop.f32.mrb[0].mxu0
    %v2532 = vadd.f32 %v1592, %v2531
    %v2533 = vpop.f32.mrb[0].mxu0
    %v2534 = vpop.f32.mrb[0].mxu0
    %v2535 = vpop.f32.mrb[0].mxu0
    %2536 = vdwg.mxu0
    %v2537 = vld [vmem:[%s8] sm:$0xff]
    %v2538 = vld [vmem:[%s8 + $0x8] sm:$0xff]
    %v2539 = vld [vmem:[%s8 + $0x10] sm:$0xff]
    %v2540 = vld [vmem:[%s8 + $0x18] sm:$0xff]
    %v2541 = vld [vmem:[%s8 + $0x20] sm:$0xff]
    %v2542 = vld [vmem:[%s8 + $0x28] sm:$0xff]
    %v2543 = vld [vmem:[%s8 + $0x30] sm:$0xff]
    %v2544 = vld [vmem:[%s8 + $0x38] sm:$0xff]
    %v2545 = vld [vmem:[%s8 + $0x40] sm:$0xff]
    %v2546 = vld [vmem:[%s8 + $0x48] sm:$0xff]
    %v2547 = vld [vmem:[%s8 + $0x50] sm:$0xff]
    %v2548 = vld [vmem:[%s8 + $0x58] sm:$0xff]
    %v2549 = vld [vmem:[%s8 + $0x60] sm:$0xff]
    %v2550 = vld [vmem:[%s8 + $0x68] sm:$0xff]
    %v2551 = vld [vmem:[%s8 + $0x70] sm:$0xff]
    %v2552 = vld [vmem:[%s8 + $0x78] sm:$0xff]
    %v2553 = vld [vmem:[%s8 + $0x80] sm:$0xff]
    %v2554 = vld [vmem:[%s8 + $0x88] sm:$0xff]
    %v2555 = vld [vmem:[%s8 + $0x90] sm:$0xff]
    %v2556 = vld [vmem:[%s8 + $0x98] sm:$0xff]
    %v2557 = vld [vmem:[%s8 + $0xa0] sm:$0xff]
    %v2558 = vld [vmem:[%s8 + $0xa8] sm:$0xff]
    %v2559 = vld [vmem:[%s8 + $0xb0] sm:$0xff]
    %v2560 = vld [vmem:[%s8 + $0xb8] sm:$0xff]
    %v2561 = vld [vmem:[%s8 + $0xc0] sm:$0xff]
    %v2562 = vld [vmem:[%s8 + $0xc8] sm:$0xff]
    %v2563 = vld [vmem:[%s8 + $0xd0] sm:$0xff]
    %v2564 = vld [vmem:[%s8 + $0xd8] sm:$0xff]
    %v2565 = vld [vmem:[%s8 + $0xe0] sm:$0xff]
    %v2566 = vld [vmem:[%s8 + $0xe8] sm:$0xff]
    %v2567 = vld [vmem:[%s8 + $0xf0] sm:$0xff]
    %v2568 = vld [vmem:[%s8 + $0xf8] sm:$0xff]
    %v2569 = vld [vmem:[%s8 + $0x100] sm:$0xff]
    %v2570 = vld [vmem:[%s8 + $0x108] sm:$0xff]
    %v2571 = vld [vmem:[%s8 + $0x110] sm:$0xff]
    %v2572 = vld [vmem:[%s8 + $0x118] sm:$0xff]
    %v2573 = vld [vmem:[%s8 + $0x120] sm:$0xff]
    %v2574 = vld [vmem:[%s8 + $0x128] sm:$0xff]
    %v2575 = vld [vmem:[%s8 + $0x130] sm:$0xff]
    %v2576 = vld [vmem:[%s8 + $0x138] sm:$0xff]
    %v2577 = vld [vmem:[%s8 + $0x140] sm:$0xff]
    %v2578 = vld [vmem:[%s8 + $0x148] sm:$0xff]
    %v2579 = vld [vmem:[%s8 + $0x150] sm:$0xff]
    %v2580 = vld [vmem:[%s8 + $0x158] sm:$0xff]
    %v2581 = vld [vmem:[%s8 + $0x160] sm:$0xff]
    %v2582 = vld [vmem:[%s8 + $0x168] sm:$0xff]
    %v2583 = vld [vmem:[%s8 + $0x170] sm:$0xff]
    %v2584 = vld [vmem:[%s8 + $0x178] sm:$0xff]
    %v2585 = vld [vmem:[%s8 + $0x180] sm:$0xff]
    %v2586 = vld [vmem:[%s8 + $0x188] sm:$0xff]
    %v2587 = vld [vmem:[%s8 + $0x190] sm:$0xff]
    %v2588 = vld [vmem:[%s8 + $0x198] sm:$0xff]
    %v2589 = vld [vmem:[%s8 + $0x1a0] sm:$0xff]
    %v2590 = vld [vmem:[%s8 + $0x1a8] sm:$0xff]
    %v2591 = vld [vmem:[%s8 + $0x1b0] sm:$0xff]
    %v2592 = vld [vmem:[%s8 + $0x1b8] sm:$0xff]
    %v2593 = vld [vmem:[%s8 + $0x1c0] sm:$0xff]
    %v2594 = vld [vmem:[%s8 + $0x1c8] sm:$0xff]
    %v2595 = vld [vmem:[%s8 + $0x1d0] sm:$0xff]
    %v2596 = vld [vmem:[%s8 + $0x1d8] sm:$0xff]
    %v2597 = vld [vmem:[%s8 + $0x1e0] sm:$0xff]
    %v2598 = vld [vmem:[%s8 + $0x1e8] sm:$0xff]
    %v2599 = vld [vmem:[%s8 + $0x1f0] sm:$0xff]
    %v2600 = vld [vmem:[%s8 + $0x1f8] sm:$0xff]
    %v2601 = vld [vmem:[%s8 + $0x200] sm:$0xff]
    %v2602 = vld [vmem:[%s8 + $0x208] sm:$0xff]
    %v2603 = vld [vmem:[%s8 + $0x210] sm:$0xff]
    %v2604 = vld [vmem:[%s8 + $0x218] sm:$0xff]
    %v2605 = vld [vmem:[%s8 + $0x220] sm:$0xff]
    %v2606 = vld [vmem:[%s8 + $0x228] sm:$0xff]
    %v2607 = vld [vmem:[%s8 + $0x230] sm:$0xff]
    %v2608 = vld [vmem:[%s8 + $0x238] sm:$0xff]
    %v2609 = vld [vmem:[%s8 + $0x240] sm:$0xff]
    %v2610 = vld [vmem:[%s8 + $0x248] sm:$0xff]
    %v2611 = vld [vmem:[%s8 + $0x250] sm:$0xff]
    %v2612 = vld [vmem:[%s8 + $0x258] sm:$0xff]
    %v2613 = vld [vmem:[%s8 + $0x260] sm:$0xff]
    %v2614 = vld [vmem:[%s8 + $0x268] sm:$0xff]
    %v2615 = vld [vmem:[%s8 + $0x270] sm:$0xff]
    %v2616 = vld [vmem:[%s8 + $0x278] sm:$0xff]
    %v2617 = vld [vmem:[%s8 + $0x280] sm:$0xff]
    %v2618 = vld [vmem:[%s8 + $0x288] sm:$0xff]
    %v2619 = vld [vmem:[%s8 + $0x290] sm:$0xff]
    %v2620 = vld [vmem:[%s8 + $0x298] sm:$0xff]
    %v2621 = vld [vmem:[%s8 + $0x2a0] sm:$0xff]
    %v2622 = vld [vmem:[%s8 + $0x2a8] sm:$0xff]
    %v2623 = vld [vmem:[%s8 + $0x2b0] sm:$0xff]
    %v2624 = vld [vmem:[%s8 + $0x2b8] sm:$0xff]
    %v2625 = vld [vmem:[%s8 + $0x2c0] sm:$0xff]
    %v2626 = vld [vmem:[%s8 + $0x2c8] sm:$0xff]
    %v2627 = vld [vmem:[%s8 + $0x2d0] sm:$0xff]
    %v2628 = vld [vmem:[%s8 + $0x2d8] sm:$0xff]
    %v2629 = vld [vmem:[%s8 + $0x2e0] sm:$0xff]
    %v2630 = vld [vmem:[%s8 + $0x2e8] sm:$0xff]
    %v2631 = vld [vmem:[%s8 + $0x2f0] sm:$0xff]
    %v2632 = vld [vmem:[%s8 + $0x2f8] sm:$0xff]
    %v2633 = vld [vmem:[%s8 + $0x300] sm:$0xff]
    %v2634 = vld [vmem:[%s8 + $0x308] sm:$0xff]
    %v2635 = vld [vmem:[%s8 + $0x310] sm:$0xff]
    %v2636 = vld [vmem:[%s8 + $0x318] sm:$0xff]
    %v2637 = vld [vmem:[%s8 + $0x320] sm:$0xff]
    %v2638 = vld [vmem:[%s8 + $0x328] sm:$0xff]
    %v2639 = vld [vmem:[%s8 + $0x330] sm:$0xff]
    %v2640 = vld [vmem:[%s8 + $0x338] sm:$0xff]
    %v2641 = vld [vmem:[%s8 + $0x340] sm:$0xff]
    %v2642 = vld [vmem:[%s8 + $0x348] sm:$0xff]
    %v2643 = vld [vmem:[%s8 + $0x350] sm:$0xff]
    %v2644 = vld [vmem:[%s8 + $0x358] sm:$0xff]
    %v2645 = vld [vmem:[%s8 + $0x360] sm:$0xff]
    %v2646 = vld [vmem:[%s8 + $0x368] sm:$0xff]
    %v2647 = vld [vmem:[%s8 + $0x370] sm:$0xff]
    %v2648 = vld [vmem:[%s8 + $0x378] sm:$0xff]
    %v2649 = vld [vmem:[%s8 + $0x380] sm:$0xff]
    %v2650 = vld [vmem:[%s8 + $0x388] sm:$0xff]
    %v2651 = vld [vmem:[%s8 + $0x390] sm:$0xff]
    %v2652 = vld [vmem:[%s8 + $0x398] sm:$0xff]
    %v2653 = vld [vmem:[%s8 + $0x3a0] sm:$0xff]
    %v2654 = vld [vmem:[%s8 + $0x3a8] sm:$0xff]
    %v2655 = vld [vmem:[%s8 + $0x3b0] sm:$0xff]
    %v2656 = vld [vmem:[%s8 + $0x3b8] sm:$0xff]
    %v2657 = vld [vmem:[%s8 + $0x3c0] sm:$0xff]
    %v2658 = vld [vmem:[%s8 + $0x3c8] sm:$0xff]
    %v2659 = vld [vmem:[%s8 + $0x3d0] sm:$0xff]
    %v2660 = vld [vmem:[%s8 + $0x3d8] sm:$0xff]
    %v2661 = vld [vmem:[%s8 + $0x3e0] sm:$0xff]
    %v2662 = vld [vmem:[%s8 + $0x3e8] sm:$0xff]
    %v2663 = vld [vmem:[%s8 + $0x3f0] sm:$0xff]
    %v2664 = vld [vmem:[%s8 + $0x3f8] sm:$0xff]
    %v2665 = vld [vmem:[%s8 + $0x400] sm:$0xff]
    %v2666 = vld [vmem:[%s8 + $0x408] sm:$0xff]
    %v2667 = vld [vmem:[%s8 + $0x410] sm:$0xff]
    %v2668 = vld [vmem:[%s8 + $0x418] sm:$0xff]
    %v2669 = vld [vmem:[%s8 + $0x420] sm:$0xff]
    %v2670 = vld [vmem:[%s8 + $0x428] sm:$0xff]
    %v2671 = vld [vmem:[%s8 + $0x430] sm:$0xff]
    %v2672 = vld [vmem:[%s8 + $0x438] sm:$0xff]
    %v2673 = vld [vmem:[%s8 + $0x440] sm:$0xff]
    %v2674 = vld [vmem:[%s8 + $0x448] sm:$0xff]
    %v2675 = vld [vmem:[%s8 + $0x450] sm:$0xff]
    %v2676 = vld [vmem:[%s8 + $0x458] sm:$0xff]
    %v2677 = vld [vmem:[%s8 + $0x460] sm:$0xff]
    %v2678 = vld [vmem:[%s8 + $0x468] sm:$0xff]
    %v2679 = vld [vmem:[%s8 + $0x470] sm:$0xff]
    %v2680 = vld [vmem:[%s8 + $0x478] sm:$0xff]
    %2681 = vmatprep.subr.mxu0 0.0
    %2682 = vmatpush1.msra.mxu0 %v2537
    %2683 = vmatprep.subr.mxu0 0.0
    %2684 = vmatpush1.msra.mxu0 %v2538
    %2685 = vmatprep.subr.mxu0 0.0
    %2686 = vmatpush1.msra.mxu0 %v2539
    %2687 = vmatprep.subr.mxu0 0.0
    %2688 = vmatpush1.msra.mxu0 %v2540
    %2689 = vmatprep.subr.mxu0 0.0
    %2690 = vmatpush1.msra.mxu0 %v2541
    %2691 = vmatprep.subr.mxu0 0.0
    %2692 = vmatpush1.msra.mxu0 %v2542
    %2693 = vmatprep.subr.mxu0 0.0
    %2694 = vmatpush1.msra.mxu0 %v2543
    %2695 = vmatprep.subr.mxu0 0.0
    %2696 = vmatpush1.msra.mxu0 %v2544
    %2697 = vmatprep.subr.mxu0 0.0
    %2698 = vmatpush1.msra.mxu0 %v2545
    %2699 = vmatprep.subr.mxu0 0.0
    %2700 = vmatpush1.msra.mxu0 %v2546
    %2701 = vmatprep.subr.mxu0 0.0
    %2702 = vmatpush1.msra.mxu0 %v2547
    %2703 = vmatprep.subr.mxu0 0.0
    %2704 = vmatpush1.msra.mxu0 %v2548
    %2705 = vmatprep.subr.mxu0 0.0
    %2706 = vmatpush1.msra.mxu0 %v2549
    %2707 = vmatprep.subr.mxu0 0.0
    %2708 = vmatpush1.msra.mxu0 %v2550
    %2709 = vmatprep.subr.mxu0 0.0
    %2710 = vmatpush1.msra.mxu0 %v2551
    %2711 = vmatprep.subr.mxu0 0.0
    %2712 = vmatpush1.msra.mxu0 %v2552
    %2713 = vmatprep.subr.mxu0 0.0
    %2714 = vmatpush1.msra.mxu0 %v2553
    %2715 = vmatprep.subr.mxu0 0.0
    %2716 = vmatpush1.msra.mxu0 %v2554
    %2717 = vmatprep.subr.mxu0 0.0
    %2718 = vmatpush1.msra.mxu0 %v2555
    %2719 = vmatprep.subr.mxu0 0.0
    %2720 = vmatpush1.msra.mxu0 %v2556
    %2721 = vmatprep.subr.mxu0 0.0
    %2722 = vmatpush1.msra.mxu0 %v2557
    %2723 = vmatprep.subr.mxu0 0.0
    %2724 = vmatpush1.msra.mxu0 %v2558
    %2725 = vmatprep.subr.mxu0 0.0
    %2726 = vmatpush1.msra.mxu0 %v2559
    %2727 = vmatprep.subr.mxu0 0.0
    %2728 = vmatpush1.msra.mxu0 %v2560
    %2729 = vmatprep.subr.mxu0 0.0
    %2730 = vmatpush1.msra.mxu0 %v2561
    %2731 = vmatprep.subr.mxu0 0.0
    %2732 = vmatpush1.msra.mxu0 %v2562
    %2733 = vmatprep.subr.mxu0 0.0
    %2734 = vmatpush1.msra.mxu0 %v2563
    %2735 = vmatprep.subr.mxu0 0.0
    %2736 = vmatpush1.msra.mxu0 %v2564
    %2737 = vmatprep.subr.mxu0 0.0
    %2738 = vmatpush1.msra.mxu0 %v2565
    %2739 = vmatprep.subr.mxu0 0.0
    %2740 = vmatpush1.msra.mxu0 %v2566
    %2741 = vmatprep.subr.mxu0 0.0
    %2742 = vmatpush1.msra.mxu0 %v2567
    %2743 = vmatprep.subr.mxu0 0.0
    %2744 = vmatpush1.msra.mxu0 %v2568
    %2745 = vmatprep.mubr.f32.mxu0 %v2370
    %2746 = vmatmul.mubr.f32.gmra.mrb[0].mxu0 %v2368
    %v2747 = vpop.f32.mrb[0].mxu0
    %v2748 = vadd.f32 0.0, %v2747
    %v2749 = vpop.f32.mrb[0].mxu0
    %2750 = vdwg.mxu0
    %2751 = vmatprep.subr.mxu0 0.0
    %2752 = vmatpush1.msra.mxu0 %v2569
    %2753 = vmatprep.subr.mxu0 0.0
    %2754 = vmatpush1.msra.mxu0 %v2570
    %2755 = vmatprep.subr.mxu0 0.0
    %2756 = vmatpush1.msra.mxu0 %v2571
    %2757 = vmatprep.subr.mxu0 0.0
    %2758 = vmatpush1.msra.mxu0 %v2572
    %2759 = vmatprep.subr.mxu0 0.0
    %2760 = vmatpush1.msra.mxu0 %v2573
    %2761 = vmatprep.subr.mxu0 0.0
    %2762 = vmatpush1.msra.mxu0 %v2574
    %2763 = vmatprep.subr.mxu0 0.0
    %2764 = vmatpush1.msra.mxu0 %v2575
    %2765 = vmatprep.subr.mxu0 0.0
    %2766 = vmatpush1.msra.mxu0 %v2576
    %2767 = vmatprep.subr.mxu0 0.0
    %2768 = vmatpush1.msra.mxu0 %v2577
    %2769 = vmatprep.subr.mxu0 0.0
    %2770 = vmatpush1.msra.mxu0 %v2578
    %2771 = vmatprep.subr.mxu0 0.0
    %2772 = vmatpush1.msra.mxu0 %v2579
    %2773 = vmatprep.subr.mxu0 0.0
    %2774 = vmatpush1.msra.mxu0 %v2580
    %2775 = vmatprep.subr.mxu0 0.0
    %2776 = vmatpush1.msra.mxu0 %v2581
    %2777 = vmatprep.subr.mxu0 0.0
    %2778 = vmatpush1.msra.mxu0 %v2582
    %2779 = vmatprep.subr.mxu0 0.0
    %2780 = vmatpush1.msra.mxu0 %v2583
    %2781 = vmatprep.subr.mxu0 0.0
    %2782 = vmatpush1.msra.mxu0 %v2584
    %2783 = vmatprep.subr.mxu0 0.0
    %2784 = vmatpush1.msra.mxu0 %v2585
    %2785 = vmatprep.subr.mxu0 0.0
    %2786 = vmatpush1.msra.mxu0 %v2586
    %2787 = vmatprep.subr.mxu0 0.0
    %2788 = vmatpush1.msra.mxu0 %v2587
    %2789 = vmatprep.subr.mxu0 0.0
    %2790 = vmatpush1.msra.mxu0 %v2588
    %2791 = vmatprep.subr.mxu0 0.0
    %2792 = vmatpush1.msra.mxu0 %v2589
    %2793 = vmatprep.subr.mxu0 0.0
    %2794 = vmatpush1.msra.mxu0 %v2590
    %2795 = vmatprep.subr.mxu0 0.0
    %2796 = vmatpush1.msra.mxu0 %v2591
    %2797 = vmatprep.subr.mxu0 0.0
    %2798 = vmatpush1.msra.mxu0 %v2592
    %2799 = vmatprep.subr.mxu0 0.0
    %2800 = vmatpush1.msra.mxu0 %v2593
    %2801 = vmatprep.subr.mxu0 0.0
    %2802 = vmatpush1.msra.mxu0 %v2594
    %2803 = vmatprep.subr.mxu0 0.0
    %2804 = vmatpush1.msra.mxu0 %v2595
    %2805 = vmatprep.subr.mxu0 0.0
    %2806 = vmatpush1.msra.mxu0 %v2596
    %2807 = vmatprep.subr.mxu0 0.0
    %2808 = vmatpush1.msra.mxu0 %v2597
    %2809 = vmatprep.subr.mxu0 0.0
    %2810 = vmatpush1.msra.mxu0 %v2598
    %2811 = vmatprep.subr.mxu0 0.0
    %2812 = vmatpush1.msra.mxu0 %v2599
    %2813 = vmatprep.subr.mxu0 0.0
    %2814 = vmatpush1.msra.mxu0 %v2600
    %2815 = vmatprep.mubr.f32.mxu0 %v2411
    %2816 = vmatmul.mubr.f32.gmra.mrb[0].mxu0 %v2409
    %v2817 = vpop.f32.mrb[0].mxu0
    %v2818 = vadd.f32 %v2748, %v2817
    %v2819 = vpop.f32.mrb[0].mxu0
    %2820 = vdwg.mxu0
    %2821 = vmatprep.subr.mxu0 0.0
    %2822 = vmatpush1.msra.mxu0 %v2601
    %2823 = vmatprep.subr.mxu0 0.0
    %2824 = vmatpush1.msra.mxu0 %v2602
    %2825 = vmatprep.subr.mxu0 0.0
    %2826 = vmatpush1.msra.mxu0 %v2603
    %2827 = vmatprep.subr.mxu0 0.0
    %2828 = vmatpush1.msra.mxu0 %v2604
    %2829 = vmatprep.subr.mxu0 0.0
    %2830 = vmatpush1.msra.mxu0 %v2605
    %2831 = vmatprep.subr.mxu0 0.0
    %2832 = vmatpush1.msra.mxu0 %v2606
    %2833 = vmatprep.subr.mxu0 0.0
    %2834 = vmatpush1.msra.mxu0 %v2607
    %2835 = vmatprep.subr.mxu0 0.0
    %2836 = vmatpush1.msra.mxu0 %v2608
    %2837 = vmatprep.subr.mxu0 0.0
    %2838 = vmatpush1.msra.mxu0 %v2609
    %2839 = vmatprep.subr.mxu0 0.0
    %2840 = vmatpush1.msra.mxu0 %v2610
    %2841 = vmatprep.subr.mxu0 0.0
    %2842 = vmatpush1.msra.mxu0 %v2611
    %2843 = vmatprep.subr.mxu0 0.0
    %2844 = vmatpush1.msra.mxu0 %v2612
    %2845 = vmatprep.subr.mxu0 0.0
    %2846 = vmatpush1.msra.mxu0 %v2613
    %2847 = vmatprep.subr.mxu0 0.0
    %2848 = vmatpush1.msra.mxu0 %v2614
    %2849 = vmatprep.subr.mxu0 0.0
    %2850 = vmatpush1.msra.mxu0 %v2615
    %2851 = vmatprep.subr.mxu0 0.0
    %2852 = vmatpush1.msra.mxu0 %v2616
    %2853 = vmatprep.subr.mxu0 0.0
    %2854 = vmatpush1.msra.mxu0 %v2617
    %2855 = vmatprep.subr.mxu0 0.0
    %2856 = vmatpush1.msra.mxu0 %v2618
    %2857 = vmatprep.subr.mxu0 0.0
    %2858 = vmatpush1.msra.mxu0 %v2619
    %2859 = vmatprep.subr.mxu0 0.0
    %2860 = vmatpush1.msra.mxu0 %v2620
    %2861 = vmatprep.subr.mxu0 0.0
    %2862 = vmatpush1.msra.mxu0 %v2621
    %2863 = vmatprep.subr.mxu0 0.0
    %2864 = vmatpush1.msra.mxu0 %v2622
    %2865 = vmatprep.subr.mxu0 0.0
    %2866 = vmatpush1.msra.mxu0 %v2623
    %2867 = vmatprep.subr.mxu0 0.0
    %2868 = vmatpush1.msra.mxu0 %v2624
    %2869 = vmatprep.subr.mxu0 0.0
    %2870 = vmatpush1.msra.mxu0 %v2625
    %2871 = vmatprep.subr.mxu0 0.0
    %2872 = vmatpush1.msra.mxu0 %v2626
    %2873 = vmatprep.subr.mxu0 0.0
    %2874 = vmatpush1.msra.mxu0 %v2627
    %2875 = vmatprep.subr.mxu0 0.0
    %2876 = vmatpush1.msra.mxu0 %v2628
    %2877 = vmatprep.subr.mxu0 0.0
    %2878 = vmatpush1.msra.mxu0 %v2629
    %2879 = vmatprep.subr.mxu0 0.0
    %2880 = vmatpush1.msra.mxu0 %v2630
    %2881 = vmatprep.subr.mxu0 0.0
    %2882 = vmatpush1.msra.mxu0 %v2631
    %2883 = vmatprep.subr.mxu0 0.0
    %2884 = vmatpush1.msra.mxu0 %v2632
    %2885 = vmatprep.mubr.f32.mxu0 %v2452
    %2886 = vmatmul.mubr.f32.gmra.mrb[0].mxu0 %v2450
    %v2887 = vpop.f32.mrb[0].mxu0
    %v2888 = vadd.f32 %v2818, %v2887
    %v2889 = vpop.f32.mrb[0].mxu0
    %2890 = vdwg.mxu0
    %2891 = vmatprep.subr.mxu0 0.0
    %2892 = vmatpush1.msra.mxu0 %v2633
    %2893 = vmatprep.subr.mxu0 0.0
    %2894 = vmatpush1.msra.mxu0 %v2634
    %2895 = vmatprep.subr.mxu0 0.0
    %2896 = vmatpush1.msra.mxu0 %v2635
    %2897 = vmatprep.subr.mxu0 0.0
    %2898 = vmatpush1.msra.mxu0 %v2636
    %2899 = vmatprep.subr.mxu0 0.0
    %2900 = vmatpush1.msra.mxu0 %v2637
    %2901 = vmatprep.subr.mxu0 0.0
    %2902 = vmatpush1.msra.mxu0 %v2638
    %2903 = vmatprep.subr.mxu0 0.0
    %2904 = vmatpush1.msra.mxu0 %v2639
    %2905 = vmatprep.subr.mxu0 0.0
    %2906 = vmatpush1.msra.mxu0 %v2640
    %2907 = vmatprep.subr.mxu0 0.0
    %2908 = vmatpush1.msra.mxu0 %v2641
    %2909 = vmatprep.subr.mxu0 0.0
    %2910 = vmatpush1.msra.mxu0 %v2642
    %2911 = vmatprep.subr.mxu0 0.0
    %2912 = vmatpush1.msra.mxu0 %v2643
    %2913 = vmatprep.subr.mxu0 0.0
    %2914 = vmatpush1.msra.mxu0 %v2644
    %2915 = vmatprep.subr.mxu0 0.0
    %2916 = vmatpush1.msra.mxu0 %v2645
    %2917 = vmatprep.subr.mxu0 0.0
    %2918 = vmatpush1.msra.mxu0 %v2646
    %2919 = vmatprep.subr.mxu0 0.0
    %2920 = vmatpush1.msra.mxu0 %v2647
    %2921 = vmatprep.subr.mxu0 0.0
    %2922 = vmatpush1.msra.mxu0 %v2648
    %2923 = vmatprep.subr.mxu0 0.0
    %2924 = vmatpush1.msra.mxu0 %v2649
    %2925 = vmatprep.subr.mxu0 0.0
    %2926 = vmatpush1.msra.mxu0 %v2650
    %2927 = vmatprep.subr.mxu0 0.0
    %2928 = vmatpush1.msra.mxu0 %v2651
    %2929 = vmatprep.subr.mxu0 0.0
    %2930 = vmatpush1.msra.mxu0 %v2652
    %2931 = vmatprep.subr.mxu0 0.0
    %2932 = vmatpush1.msra.mxu0 %v2653
    %2933 = vmatprep.subr.mxu0 0.0
    %2934 = vmatpush1.msra.mxu0 %v2654
    %2935 = vmatprep.subr.mxu0 0.0
    %2936 = vmatpush1.msra.mxu0 %v2655
    %2937 = vmatprep.subr.mxu0 0.0
    %2938 = vmatpush1.msra.mxu0 %v2656
    %2939 = vmatprep.subr.mxu0 0.0
    %2940 = vmatpush1.msra.mxu0 %v2657
    %2941 = vmatprep.subr.mxu0 0.0
    %2942 = vmatpush1.msra.mxu0 %v2658
    %2943 = vmatprep.subr.mxu0 0.0
    %2944 = vmatpush1.msra.mxu0 %v2659
    %2945 = vmatprep.subr.mxu0 0.0
    %2946 = vmatpush1.msra.mxu0 %v2660
    %2947 = vmatprep.subr.mxu0 0.0
    %2948 = vmatpush1.msra.mxu0 %v2661
    %2949 = vmatprep.subr.mxu0 0.0
    %2950 = vmatpush1.msra.mxu0 %v2662
    %2951 = vmatprep.subr.mxu0 0.0
    %2952 = vmatpush1.msra.mxu0 %v2663
    %2953 = vmatprep.subr.mxu0 0.0
    %2954 = vmatpush1.msra.mxu0 %v2664
    %2955 = vmatprep.mubr.f32.mxu0 %v2493
    %2956 = vmatmul.mubr.f32.gmra.mrb[0].mxu0 %v2491
    %v2957 = vpop.f32.mrb[0].mxu0
    %v2958 = vadd.f32 %v2888, %v2957
    %v2959 = vpop.f32.mrb[0].mxu0
    %2960 = vdwg.mxu0
    %2961 = vmatprep.subr.mxu0 0.0
    %2962 = vmatpush1.msra.mxu0 %v2665
    %2963 = vmatprep.subr.mxu0 0.0
    %2964 = vmatpush1.msra.mxu0 %v2666
    %2965 = vmatprep.subr.mxu0 0.0
    %2966 = vmatpush1.msra.mxu0 %v2667
    %2967 = vmatprep.subr.mxu0 0.0
    %2968 = vmatpush1.msra.mxu0 %v2668
    %2969 = vmatprep.subr.mxu0 0.0
    %2970 = vmatpush1.msra.mxu0 %v2669
    %2971 = vmatprep.subr.mxu0 0.0
    %2972 = vmatpush1.msra.mxu0 %v2670
    %2973 = vmatprep.subr.mxu0 0.0
    %2974 = vmatpush1.msra.mxu0 %v2671
    %2975 = vmatprep.subr.mxu0 0.0
    %2976 = vmatpush1.msra.mxu0 %v2672
    %2977 = vmatprep.subr.mxu0 0.0
    %2978 = vmatpush1.msra.mxu0 %v2673
    %2979 = vmatprep.subr.mxu0 0.0
    %2980 = vmatpush1.msra.mxu0 %v2674
    %2981 = vmatprep.subr.mxu0 0.0
    %2982 = vmatpush1.msra.mxu0 %v2675
    %2983 = vmatprep.subr.mxu0 0.0
    %2984 = vmatpush1.msra.mxu0 %v2676
    %2985 = vmatprep.subr.mxu0 0.0
    %2986 = vmatpush1.msra.mxu0 %v2677
    %2987 = vmatprep.subr.mxu0 0.0
    %2988 = vmatpush1.msra.mxu0 %v2678
    %2989 = vmatprep.subr.mxu0 0.0
    %2990 = vmatpush1.msra.mxu0 %v2679
    %2991 = vmatprep.subr.mxu0 0.0
    %2992 = vmatpush1.msra.mxu0 %v2680
    %2993 = vmatprep.subr.mxu0 0.0
    %2994 = vmatpush1.msra.mxu0 0.0
    %2995 = vmatprep.subr.mxu0 0.0
    %2996 = vmatpush1.msra.mxu0 0.0
    %2997 = vmatprep.subr.mxu0 0.0
    %2998 = vmatpush1.msra.mxu0 0.0
    %2999 = vmatprep.subr.mxu0 0.0
    %3000 = vmatpush1.msra.mxu0 0.0
    %3001 = vmatprep.subr.mxu0 0.0
    %3002 = vmatpush1.msra.mxu0 0.0
    %3003 = vmatprep.subr.mxu0 0.0
    %3004 = vmatpush1.msra.mxu0 0.0
    %3005 = vmatprep.subr.mxu0 0.0
    %3006 = vmatpush1.msra.mxu0 0.0
    %3007 = vmatprep.subr.mxu0 0.0
    %3008 = vmatpush1.msra.mxu0 0.0
    %3009 = vmatprep.subr.mxu0 0.0
    %3010 = vmatpush1.msra.mxu0 0.0
    %3011 = vmatprep.subr.mxu0 0.0
    %3012 = vmatpush1.msra.mxu0 0.0
    %3013 = vmatprep.subr.mxu0 0.0
    %3014 = vmatpush1.msra.mxu0 0.0
    %3015 = vmatprep.subr.mxu0 0.0
    %3016 = vmatpush1.msra.mxu0 0.0
    %3017 = vmatprep.subr.mxu0 0.0
    %3018 = vmatpush1.msra.mxu0 0.0
    %3019 = vmatprep.subr.mxu0 0.0
    %3020 = vmatpush1.msra.mxu0 0.0
    %3021 = vmatprep.subr.mxu0 0.0
    %3022 = vmatpush1.msra.mxu0 0.0
    %3023 = vmatprep.subr.mxu0 0.0
    %3024 = vmatpush1.msra.mxu0 0.0
    %3025 = vmatprep.mubr.f32.mxu0 0.0
    %3026 = vmatmul.mubr.f32.gmra.mrb[0].mxu0 %v2532
    %v3027 = vpop.f32.mrb[0].mxu0
    %v3028 = vadd.f32 %v2958, %v3027
    %v3029 = vpop.f32.mrb[0].mxu0
    %3030 = vdwg.mxu0
    %v3031 = vmul.f32 %v2368, %v2368
    %v3032 = vmul.f32 %v2370, %v2370
    %v3033 = vmul.f32 %v2409, %v2409
    %v3034 = vmul.f32 %v2411, %v2411
    %v3035 = vmul.f32 %v2450, %v2450
    %v3036 = vmul.f32 %v2452, %v2452
    %v3037 = vmul.f32 %v2491, %v2491
    %v3038 = vmul.f32 %v2493, %v2493
    %v3039 = vmul.f32 %v2532, %v2532
    %3040 = vmatprep.subr.mxu0 0.0
    %3041 = vmatpush1.msra.mxu0 %v2537
    %3042 = vmatprep.subr.mxu0 0.0
    %3043 = vmatpush1.msra.mxu0 %v2538
    %3044 = vmatprep.subr.mxu0 0.0
    %3045 = vmatpush1.msra.mxu0 %v2539
    %3046 = vmatprep.subr.mxu0 0.0
    %3047 = vmatpush1.msra.mxu0 %v2540
    %3048 = vmatprep.subr.mxu0 0.0
    %3049 = vmatpush1.msra.mxu0 %v2541
    %3050 = vmatprep.subr.mxu0 0.0
    %3051 = vmatpush1.msra.mxu0 %v2542
    %3052 = vmatprep.subr.mxu0 0.0
    %3053 = vmatpush1.msra.mxu0 %v2543
    %3054 = vmatprep.subr.mxu0 0.0
    %3055 = vmatpush1.msra.mxu0 %v2544
    %3056 = vmatprep.subr.mxu0 0.0
    %3057 = vmatpush1.msra.mxu0 %v2545
    %3058 = vmatprep.subr.mxu0 0.0
    %3059 = vmatpush1.msra.mxu0 %v2546
    %3060 = vmatprep.subr.mxu0 0.0
    %3061 = vmatpush1.msra.mxu0 %v2547
    %3062 = vmatprep.subr.mxu0 0.0
    %3063 = vmatpush1.msra.mxu0 %v2548
    %3064 = vmatprep.subr.mxu0 0.0
    %3065 = vmatpush1.msra.mxu0 %v2549
    %3066 = vmatprep.subr.mxu0 0.0
    %3067 = vmatpush1.msra.mxu0 %v2550
    %3068 = vmatprep.subr.mxu0 0.0
    %3069 = vmatpush1.msra.mxu0 %v2551
    %3070 = vmatprep.subr.mxu0 0.0
    %3071 = vmatpush1.msra.mxu0 %v2552
    %3072 = vmatprep.subr.mxu0 0.0
    %3073 = vmatpush1.msra.mxu0 %v2553
    %3074 = vmatprep.subr.mxu0 0.0
    %3075 = vmatpush1.msra.mxu0 %v2554
    %3076 = vmatprep.subr.mxu0 0.0
    %3077 = vmatpush1.msra.mxu0 %v2555
    %3078 = vmatprep.subr.mxu0 0.0
    %3079 = vmatpush1.msra.mxu0 %v2556
    %3080 = vmatprep.subr.mxu0 0.0
    %3081 = vmatpush1.msra.mxu0 %v2557
    %3082 = vmatprep.subr.mxu0 0.0
    %3083 = vmatpush1.msra.mxu0 %v2558
    %3084 = vmatprep.subr.mxu0 0.0
    %3085 = vmatpush1.msra.mxu0 %v2559
    %3086 = vmatprep.subr.mxu0 0.0
    %3087 = vmatpush1.msra.mxu0 %v2560
    %3088 = vmatprep.subr.mxu0 0.0
    %3089 = vmatpush1.msra.mxu0 %v2561
    %3090 = vmatprep.subr.mxu0 0.0
    %3091 = vmatpush1.msra.mxu0 %v2562
    %3092 = vmatprep.subr.mxu0 0.0
    %3093 = vmatpush1.msra.mxu0 %v2563
    %3094 = vmatprep.subr.mxu0 0.0
    %3095 = vmatpush1.msra.mxu0 %v2564
    %3096 = vmatprep.subr.mxu0 0.0
    %3097 = vmatpush1.msra.mxu0 %v2565
    %3098 = vmatprep.subr.mxu0 0.0
    %3099 = vmatpush1.msra.mxu0 %v2566
    %3100 = vmatprep.subr.mxu0 0.0
    %3101 = vmatpush1.msra.mxu0 %v2567
    %3102 = vmatprep.subr.mxu0 0.0
    %3103 = vmatpush1.msra.mxu0 %v2568
    %3104 = vmatprep.mubr.f32.mxu0 %v3032
    %3105 = vmatmul.mubr.f32.gmra.mrb[0].mxu0 %v3031
    %v3106 = vpop.f32.mrb[0].mxu0
    %v3107 = vadd.f32 0.0, %v3106
    %v3108 = vpop.f32.mrb[0].mxu0
    %3109 = vdwg.mxu0
    %3110 = vmatprep.subr.mxu0 0.0
    %3111 = vmatpush1.msra.mxu0 %v2569
    %3112 = vmatprep.subr.mxu0 0.0
    %3113 = vmatpush1.msra.mxu0 %v2570
    %3114 = vmatprep.subr.mxu0 0.0
    %3115 = vmatpush1.msra.mxu0 %v2571
    %3116 = vmatprep.subr.mxu0 0.0
    %3117 = vmatpush1.msra.mxu0 %v2572
    %3118 = vmatprep.subr.mxu0 0.0
    %3119 = vmatpush1.msra.mxu0 %v2573
    %3120 = vmatprep.subr.mxu0 0.0
    %3121 = vmatpush1.msra.mxu0 %v2574
    %3122 = vmatprep.subr.mxu0 0.0
    %3123 = vmatpush1.msra.mxu0 %v2575
    %3124 = vmatprep.subr.mxu0 0.0
    %3125 = vmatpush1.msra.mxu0 %v2576
    %3126 = vmatprep.subr.mxu0 0.0
    %3127 = vmatpush1.msra.mxu0 %v2577
    %3128 = vmatprep.subr.mxu0 0.0
    %3129 = vmatpush1.msra.mxu0 %v2578
    %3130 = vmatprep.subr.mxu0 0.0
    %3131 = vmatpush1.msra.mxu0 %v2579
    %3132 = vmatprep.subr.mxu0 0.0
    %3133 = vmatpush1.msra.mxu0 %v2580
    %3134 = vmatprep.subr.mxu0 0.0
    %3135 = vmatpush1.msra.mxu0 %v2581
    %3136 = vmatprep.subr.mxu0 0.0
    %3137 = vmatpush1.msra.mxu0 %v2582
    %3138 = vmatprep.subr.mxu0 0.0
    %3139 = vmatpush1.msra.mxu0 %v2583
    %3140 = vmatprep.subr.mxu0 0.0
    %3141 = vmatpush1.msra.mxu0 %v2584
    %3142 = vmatprep.subr.mxu0 0.0
    %3143 = vmatpush1.msra.mxu0 %v2585
    %3144 = vmatprep.subr.mxu0 0.0
    %3145 = vmatpush1.msra.mxu0 %v2586
    %3146 = vmatprep.subr.mxu0 0.0
    %3147 = vmatpush1.msra.mxu0 %v2587
    %3148 = vmatprep.subr.mxu0 0.0
    %3149 = vmatpush1.msra.mxu0 %v2588
    %3150 = vmatprep.subr.mxu0 0.0
    %3151 = vmatpush1.msra.mxu0 %v2589
    %3152 = vmatprep.subr.mxu0 0.0
    %3153 = vmatpush1.msra.mxu0 %v2590
    %3154 = vmatprep.subr.mxu0 0.0
    %3155 = vmatpush1.msra.mxu0 %v2591
    %3156 = vmatprep.subr.mxu0 0.0
    %3157 = vmatpush1.msra.mxu0 %v2592
    %3158 = vmatprep.subr.mxu0 0.0
    %3159 = vmatpush1.msra.mxu0 %v2593
    %3160 = vmatprep.subr.mxu0 0.0
    %3161 = vmatpush1.msra.mxu0 %v2594
    %3162 = vmatprep.subr.mxu0 0.0
    %3163 = vmatpush1.msra.mxu0 %v2595
    %3164 = vmatprep.subr.mxu0 0.0
    %3165 = vmatpush1.msra.mxu0 %v2596
    %3166 = vmatprep.subr.mxu0 0.0
    %3167 = vmatpush1.msra.mxu0 %v2597
    %3168 = vmatprep.subr.mxu0 0.0
    %3169 = vmatpush1.msra.mxu0 %v2598
    %3170 = vmatprep.subr.mxu0 0.0
    %3171 = vmatpush1.msra.mxu0 %v2599
    %3172 = vmatprep.subr.mxu0 0.0
    %3173 = vmatpush1.msra.mxu0 %v2600
    %3174 = vmatprep.mubr.f32.mxu0 %v3034
    %3175 = vmatmul.mubr.f32.gmra.mrb[0].mxu0 %v3033
    %v3176 = vpop.f32.mrb[0].mxu0
    %v3177 = vadd.f32 %v3107, %v3176
    %v3178 = vpop.f32.mrb[0].mxu0
    %3179 = vdwg.mxu0
    %3180 = vmatprep.subr.mxu0 0.0
    %3181 = vmatpush1.msra.mxu0 %v2601
    %3182 = vmatprep.subr.mxu0 0.0
    %3183 = vmatpush1.msra.mxu0 %v2602
    %3184 = vmatprep.subr.mxu0 0.0
    %3185 = vmatpush1.msra.mxu0 %v2603
    %3186 = vmatprep.subr.mxu0 0.0
    %3187 = vmatpush1.msra.mxu0 %v2604
    %3188 = vmatprep.subr.mxu0 0.0
    %3189 = vmatpush1.msra.mxu0 %v2605
    %3190 = vmatprep.subr.mxu0 0.0
    %3191 = vmatpush1.msra.mxu0 %v2606
    %3192 = vmatprep.subr.mxu0 0.0
    %3193 = vmatpush1.msra.mxu0 %v2607
    %3194 = vmatprep.subr.mxu0 0.0
    %3195 = vmatpush1.msra.mxu0 %v2608
    %3196 = vmatprep.subr.mxu0 0.0
    %3197 = vmatpush1.msra.mxu0 %v2609
    %3198 = vmatprep.subr.mxu0 0.0
    %3199 = vmatpush1.msra.mxu0 %v2610
    %3200 = vmatprep.subr.mxu0 0.0
    %3201 = vmatpush1.msra.mxu0 %v2611
    %3202 = vmatprep.subr.mxu0 0.0
    %3203 = vmatpush1.msra.mxu0 %v2612
    %3204 = vmatprep.subr.mxu0 0.0
    %3205 = vmatpush1.msra.mxu0 %v2613
    %3206 = vmatprep.subr.mxu0 0.0
    %3207 = vmatpush1.msra.mxu0 %v2614
    %3208 = vmatprep.subr.mxu0 0.0
    %3209 = vmatpush1.msra.mxu0 %v2615
    %3210 = vmatprep.subr.mxu0 0.0
    %3211 = vmatpush1.msra.mxu0 %v2616
    %3212 = vmatprep.subr.mxu0 0.0
    %3213 = vmatpush1.msra.mxu0 %v2617
    %3214 = vmatprep.subr.mxu0 0.0
    %3215 = vmatpush1.msra.mxu0 %v2618
    %3216 = vmatprep.subr.mxu0 0.0
    %3217 = vmatpush1.msra.mxu0 %v2619
    %3218 = vmatprep.subr.mxu0 0.0
    %3219 = vmatpush1.msra.mxu0 %v2620
    %3220 = vmatprep.subr.mxu0 0.0
    %3221 = vmatpush1.msra.mxu0 %v2621
    %3222 = vmatprep.subr.mxu0 0.0
    %3223 = vmatpush1.msra.mxu0 %v2622
    %3224 = vmatprep.subr.mxu0 0.0
    %3225 = vmatpush1.msra.mxu0 %v2623
    %3226 = vmatprep.subr.mxu0 0.0
    %3227 = vmatpush1.msra.mxu0 %v2624
    %3228 = vmatprep.subr.mxu0 0.0
    %3229 = vmatpush1.msra.mxu0 %v2625
    %3230 = vmatprep.subr.mxu0 0.0
    %3231 = vmatpush1.msra.mxu0 %v2626
    %3232 = vmatprep.subr.mxu0 0.0
    %3233 = vmatpush1.msra.mxu0 %v2627
    %3234 = vmatprep.subr.mxu0 0.0
    %3235 = vmatpush1.msra.mxu0 %v2628
    %3236 = vmatprep.subr.mxu0 0.0
    %3237 = vmatpush1.msra.mxu0 %v2629
    %3238 = vmatprep.subr.mxu0 0.0
    %3239 = vmatpush1.msra.mxu0 %v2630
    %3240 = vmatprep.subr.mxu0 0.0
    %3241 = vmatpush1.msra.mxu0 %v2631
    %3242 = vmatprep.subr.mxu0 0.0
    %3243 = vmatpush1.msra.mxu0 %v2632
    %3244 = vmatprep.mubr.f32.mxu0 %v3036
    %3245 = vmatmul.mubr.f32.gmra.mrb[0].mxu0 %v3035
    %v3246 = vpop.f32.mrb[0].mxu0
    %v3247 = vadd.f32 %v3177, %v3246
    %v3248 = vpop.f32.mrb[0].mxu0
    %3249 = vdwg.mxu0
    %3250 = vmatprep.subr.mxu0 0.0
    %3251 = vmatpush1.msra.mxu0 %v2633
    %3252 = vmatprep.subr.mxu0 0.0
    %3253 = vmatpush1.msra.mxu0 %v2634
    %3254 = vmatprep.subr.mxu0 0.0
    %3255 = vmatpush1.msra.mxu0 %v2635
    %3256 = vmatprep.subr.mxu0 0.0
    %3257 = vmatpush1.msra.mxu0 %v2636
    %3258 = vmatprep.subr.mxu0 0.0
    %3259 = vmatpush1.msra.mxu0 %v2637
    %3260 = vmatprep.subr.mxu0 0.0
    %3261 = vmatpush1.msra.mxu0 %v2638
    %3262 = vmatprep.subr.mxu0 0.0
    %3263 = vmatpush1.msra.mxu0 %v2639
    %3264 = vmatprep.subr.mxu0 0.0
    %3265 = vmatpush1.msra.mxu0 %v2640
    %3266 = vmatprep.subr.mxu0 0.0
    %3267 = vmatpush1.msra.mxu0 %v2641
    %3268 = vmatprep.subr.mxu0 0.0
    %3269 = vmatpush1.msra.mxu0 %v2642
    %3270 = vmatprep.subr.mxu0 0.0
    %3271 = vmatpush1.msra.mxu0 %v2643
    %3272 = vmatprep.subr.mxu0 0.0
    %3273 = vmatpush1.msra.mxu0 %v2644
    %3274 = vmatprep.subr.mxu0 0.0
    %3275 = vmatpush1.msra.mxu0 %v2645
    %3276 = vmatprep.subr.mxu0 0.0
    %3277 = vmatpush1.msra.mxu0 %v2646
    %3278 = vmatprep.subr.mxu0 0.0
    %3279 = vmatpush1.msra.mxu0 %v2647
    %3280 = vmatprep.subr.mxu0 0.0
    %3281 = vmatpush1.msra.mxu0 %v2648
    %3282 = vmatprep.subr.mxu0 0.0
    %3283 = vmatpush1.msra.mxu0 %v2649
    %3284 = vmatprep.subr.mxu0 0.0
    %3285 = vmatpush1.msra.mxu0 %v2650
    %3286 = vmatprep.subr.mxu0 0.0
    %3287 = vmatpush1.msra.mxu0 %v2651
    %3288 = vmatprep.subr.mxu0 0.0
    %3289 = vmatpush1.msra.mxu0 %v2652
    %3290 = vmatprep.subr.mxu0 0.0
    %3291 = vmatpush1.msra.mxu0 %v2653
    %3292 = vmatprep.subr.mxu0 0.0
    %3293 = vmatpush1.msra.mxu0 %v2654
    %3294 = vmatprep.subr.mxu0 0.0
    %3295 = vmatpush1.msra.mxu0 %v2655
    %3296 = vmatprep.subr.mxu0 0.0
    %3297 = vmatpush1.msra.mxu0 %v2656
    %3298 = vmatprep.subr.mxu0 0.0
    %3299 = vmatpush1.msra.mxu0 %v2657
    %3300 = vmatprep.subr.mxu0 0.0
    %3301 = vmatpush1.msra.mxu0 %v2658
    %3302 = vmatprep.subr.mxu0 0.0
    %3303 = vmatpush1.msra.mxu0 %v2659
    %3304 = vmatprep.subr.mxu0 0.0
    %3305 = vmatpush1.msra.mxu0 %v2660
    %3306 = vmatprep.subr.mxu0 0.0
    %3307 = vmatpush1.msra.mxu0 %v2661
    %3308 = vmatprep.subr.mxu0 0.0
    %3309 = vmatpush1.msra.mxu0 %v2662
    %3310 = vmatprep.subr.mxu0 0.0
    %3311 = vmatpush1.msra.mxu0 %v2663
    %3312 = vmatprep.subr.mxu0 0.0
    %3313 = vmatpush1.msra.mxu0 %v2664
    %3314 = vmatprep.mubr.f32.mxu0 %v3038
    %3315 = vmatmul.mubr.f32.gmra.mrb[0].mxu0 %v3037
    %v3316 = vpop.f32.mrb[0].mxu0
    %v3317 = vadd.f32 %v3247, %v3316
    %v3318 = vpop.f32.mrb[0].mxu0
    %3319 = vdwg.mxu0
    %3320 = vmatprep.subr.mxu0 0.0
    %3321 = vmatpush1.msra.mxu0 %v2665
    %3322 = vmatprep.subr.mxu0 0.0
    %3323 = vmatpush1.msra.mxu0 %v2666
    %3324 = vmatprep.subr.mxu0 0.0
    %3325 = vmatpush1.msra.mxu0 %v2667
    %3326 = vmatprep.subr.mxu0 0.0
    %3327 = vmatpush1.msra.mxu0 %v2668
    %3328 = vmatprep.subr.mxu0 0.0
    %3329 = vmatpush1.msra.mxu0 %v2669
    %3330 = vmatprep.subr.mxu0 0.0
    %3331 = vmatpush1.msra.mxu0 %v2670
    %3332 = vmatprep.subr.mxu0 0.0
    %3333 = vmatpush1.msra.mxu0 %v2671
    %3334 = vmatprep.subr.mxu0 0.0
    %3335 = vmatpush1.msra.mxu0 %v2672
    %3336 = vmatprep.subr.mxu0 0.0
    %3337 = vmatpush1.msra.mxu0 %v2673
    %3338 = vmatprep.subr.mxu0 0.0
    %3339 = vmatpush1.msra.mxu0 %v2674
    %3340 = vmatprep.subr.mxu0 0.0
    %3341 = vmatpush1.msra.mxu0 %v2675
    %3342 = vmatprep.subr.mxu0 0.0
    %3343 = vmatpush1.msra.mxu0 %v2676
    %3344 = vmatprep.subr.mxu0 0.0
    %3345 = vmatpush1.msra.mxu0 %v2677
    %3346 = vmatprep.subr.mxu0 0.0
    %3347 = vmatpush1.msra.mxu0 %v2678
    %3348 = vmatprep.subr.mxu0 0.0
    %3349 = vmatpush1.msra.mxu0 %v2679
    %3350 = vmatprep.subr.mxu0 0.0
    %3351 = vmatpush1.msra.mxu0 %v2680
    %3352 = vmatprep.subr.mxu0 0.0
    %3353 = vmatpush1.msra.mxu0 0.0
    %3354 = vmatprep.subr.mxu0 0.0
    %3355 = vmatpush1.msra.mxu0 0.0
    %3356 = vmatprep.subr.mxu0 0.0
    %3357 = vmatpush1.msra.mxu0 0.0
    %3358 = vmatprep.subr.mxu0 0.0
    %3359 = vmatpush1.msra.mxu0 0.0
    %3360 = vmatprep.subr.mxu0 0.0
    %3361 = vmatpush1.msra.mxu0 0.0
    %3362 = vmatprep.subr.mxu0 0.0
    %3363 = vmatpush1.msra.mxu0 0.0
    %3364 = vmatprep.subr.mxu0 0.0
    %3365 = vmatpush1.msra.mxu0 0.0
    %3366 = vmatprep.subr.mxu0 0.0
    %3367 = vmatpush1.msra.mxu0 0.0
    %3368 = vmatprep.subr.mxu0 0.0
    %3369 = vmatpush1.msra.mxu0 0.0
    %3370 = vmatprep.subr.mxu0 0.0
    %3371 = vmatpush1.msra.mxu0 0.0
    %3372 = vmatprep.subr.mxu0 0.0
    %3373 = vmatpush1.msra.mxu0 0.0
    %3374 = vmatprep.subr.mxu0 0.0
    %3375 = vmatpush1.msra.mxu0 0.0
    %3376 = vmatprep.subr.mxu0 0.0
    %3377 = vmatpush1.msra.mxu0 0.0
    %3378 = vmatprep.subr.mxu0 0.0
    %3379 = vmatpush1.msra.mxu0 0.0
    %3380 = vmatprep.subr.mxu0 0.0
    %3381 = vmatpush1.msra.mxu0 0.0
    %3382 = vmatprep.subr.mxu0 0.0
    %3383 = vmatpush1.msra.mxu0 0.0
    %3384 = vmatprep.mubr.f32.mxu0 0.0
    %3385 = vmatmul.mubr.f32.gmra.mrb[0].mxu0 %v3039
    %v3386 = vpop.f32.mrb[0].mxu0
    %v3387 = vadd.f32 %v3317, %v3386
    %v3388 = vpop.f32.mrb[0].mxu0
    %3389 = vdwg.mxu0
    %v3390 = vmul.f32 %v3028, %v3028
    %v3391 = vsub.f32 %v3387, %v3390
    %v3392 = vmax.f32 %v3391, 0.0
    %v3393 = vadd.f32 %v3392, 1e-05
    %v3394 = vrsqrt.pop %v3393
    %v3395 = vld [vmem:[%s9] sm:$0xff]
    %v3396 = vld [vmem:[%s9 + $0x8] sm:$0xff]
    %v3397 = vld [vmem:[%s9 + $0x10] sm:$0xff]
    %v3398 = vld [vmem:[%s9 + $0x18] sm:$0xff]
    %v3399 = vld [vmem:[%s9 + $0x20] sm:$0xff]
    %v3400 = vld [vmem:[%s9 + $0x28] sm:$0xff]
    %v3401 = vld [vmem:[%s9 + $0x30] sm:$0xff]
    %v3402 = vld [vmem:[%s9 + $0x38] sm:$0xff]
    %v3403 = vld [vmem:[%s9 + $0x40] sm:$0xff]
    %v3404 = vld [vmem:[%s9 + $0x48] sm:$0xff]
    %v3405 = vld [vmem:[%s9 + $0x50] sm:$0xff]
    %v3406 = vld [vmem:[%s9 + $0x58] sm:$0xff]
    %v3407 = vld [vmem:[%s9 + $0x60] sm:$0xff]
    %v3408 = vld [vmem:[%s9 + $0x68] sm:$0xff]
    %v3409 = vld [vmem:[%s9 + $0x70] sm:$0xff]
    %v3410 = vld [vmem:[%s9 + $0x78] sm:$0xff]
    %v3411 = vld [vmem:[%s9 + $0x80] sm:$0xff]
    %v3412 = vld [vmem:[%s9 + $0x88] sm:$0xff]
    %v3413 = vld [vmem:[%s9 + $0x90] sm:$0xff]
    %v3414 = vld [vmem:[%s9 + $0x98] sm:$0xff]
    %v3415 = vld [vmem:[%s9 + $0xa0] sm:$0xff]
    %v3416 = vld [vmem:[%s9 + $0xa8] sm:$0xff]
    %v3417 = vld [vmem:[%s9 + $0xb0] sm:$0xff]
    %v3418 = vld [vmem:[%s9 + $0xb8] sm:$0xff]
    %v3419 = vld [vmem:[%s9 + $0xc0] sm:$0xff]
    %v3420 = vld [vmem:[%s9 + $0xc8] sm:$0xff]
    %v3421 = vld [vmem:[%s9 + $0xd0] sm:$0xff]
    %v3422 = vld [vmem:[%s9 + $0xd8] sm:$0xff]
    %v3423 = vld [vmem:[%s9 + $0xe0] sm:$0xff]
    %v3424 = vld [vmem:[%s9 + $0xe8] sm:$0xff]
    %v3425 = vld [vmem:[%s9 + $0xf0] sm:$0xff]
    %v3426 = vld [vmem:[%s9 + $0xf8] sm:$0xff]
    %v3427 = vld [vmem:[%s9 + $0x100] sm:$0xff]
    %v3428 = vld [vmem:[%s9 + $0x108] sm:$0xff]
    %v3429 = vld [vmem:[%s9 + $0x110] sm:$0xff]
    %v3430 = vld [vmem:[%s9 + $0x118] sm:$0xff]
    %vm3431 = vcmask 261120
    %v3433 = vsel %vm3431, %v3028, 0
    %3435 = vmatprep.subr.mxu0 %v3396
    %3436 = vmatpush1.msra.mxu0 %v3395
    %3437 = vmatprep.subr.mxu0 %v3405
    %3438 = vmatpush1.msra.mxu0 %v3404
    %3439 = vmatprep.subr.mxu0 %v3414
    %3440 = vmatpush1.msra.mxu0 %v3413
    %3441 = vmatprep.subr.mxu0 %v3423
    %3442 = vmatpush1.msra.mxu0 %v3422
    %3443 = vmatprep.subr.mxu0 0.0
    %3444 = vmatpush1.msra.mxu0 0.0
    %3445 = vmatprep.subr.mxu0 0.0
    %3446 = vmatpush1.msra.mxu0 0.0
    %3447 = vmatprep.subr.mxu0 0.0
    %3448 = vmatpush1.msra.mxu0 0.0
    %3449 = vmatprep.subr.mxu0 0.0
    %3450 = vmatpush1.msra.mxu0 0.0
    %3451 = vmatprep.subr.mxu0 0.0
    %3452 = vmatpush1.msra.mxu0 0.0
    %3453 = vmatprep.subr.mxu0 0.0
    %3454 = vmatpush1.msra.mxu0 0.0
    %3455 = vmatprep.subr.mxu0 0.0
    %3456 = vmatpush1.msra.mxu0 0.0
    %3457 = vmatprep.subr.mxu0 0.0
    %3458 = vmatpush1.msra.mxu0 0.0
    %3459 = vmatprep.subr.mxu0 0.0
    %3460 = vmatpush1.msra.mxu0 0.0
    %3461 = vmatprep.subr.mxu0 0.0
    %3462 = vmatpush1.msra.mxu0 0.0
    %3463 = vmatprep.subr.mxu0 0.0
    %3464 = vmatpush1.msra.mxu0 0.0
    %3465 = vmatprep.subr.mxu0 0.0
    %3466 = vmatpush1.msra.mxu0 0.0
    %3467 = vmatprep.subr.mxu0 0.0
    %3468 = vmatpush1.msra.mxu0 0.0
    %3469 = vmatprep.subr.mxu0 0.0
    %3470 = vmatpush1.msra.mxu0 0.0
    %3471 = vmatprep.subr.mxu0 0.0
    %3472 = vmatpush1.msra.mxu0 0.0
    %3473 = vmatprep.subr.mxu0 0.0
    %3474 = vmatpush1.msra.mxu0 0.0
    %3475 = vmatprep.subr.mxu0 0.0
    %3476 = vmatpush1.msra.mxu0 0.0
    %3477 = vmatprep.subr.mxu0 0.0
    %3478 = vmatpush1.msra.mxu0 0.0
    %3479 = vmatprep.subr.mxu0 0.0
    %3480 = vmatpush1.msra.mxu0 0.0
    %3481 = vmatprep.subr.mxu0 0.0
    %3482 = vmatpush1.msra.mxu0 0.0
    %3483 = vmatprep.subr.mxu0 0.0
    %3484 = vmatpush1.msra.mxu0 0.0
    %3485 = vmatprep.subr.mxu0 0.0
    %3486 = vmatpush1.msra.mxu0 0.0
    %3487 = vmatprep.subr.mxu0 0.0
    %3488 = vmatpush1.msra.mxu0 0.0
    %3489 = vmatprep.subr.mxu0 0.0
    %3490 = vmatpush1.msra.mxu0 0.0
    %3491 = vmatprep.subr.mxu0 0.0
    %3492 = vmatpush1.msra.mxu0 0.0
    %3493 = vmatprep.subr.mxu0 0.0
    %3494 = vmatpush1.msra.mxu0 0.0
    %3495 = vmatprep.subr.mxu0 0.0
    %3496 = vmatpush1.msra.mxu0 0.0
    %3497 = vmatprep.subr.mxu0 0.0
    %3498 = vmatpush1.msra.mxu0 0.0
    %3499 = vmatprep.mubr.f32.mxu0 0.0
    %3500 = vmatmul.mubr.f32.gmra.mrb[0].mxu0 %v3433
    %v3501 = vpop.f32.mrb[0].mxu0
    %v3502 = vadd.f32 0.0, %v3501
    %v3503 = vpop.f32.mrb[0].mxu0
    %v3504 = vadd.f32 0.0, %v3503
    %3505 = vdwg.mxu0
    %3506 = vmatprep.subr.mxu0 %v3398
    %3507 = vmatpush1.msra.mxu0 %v3397
    %3508 = vmatprep.subr.mxu0 %v3407
    %3509 = vmatpush1.msra.mxu0 %v3406
    %3510 = vmatprep.subr.mxu0 %v3416
    %3511 = vmatpush1.msra.mxu0 %v3415
    %3512 = vmatprep.subr.mxu0 %v3425
    %3513 = vmatpush1.msra.mxu0 %v3424
    %3514 = vmatprep.subr.mxu0 0.0
    %3515 = vmatpush1.msra.mxu0 0.0
    %3516 = vmatprep.subr.mxu0 0.0
    %3517 = vmatpush1.msra.mxu0 0.0
    %3518 = vmatprep.subr.mxu0 0.0
    %3519 = vmatpush1.msra.mxu0 0.0
    %3520 = vmatprep.subr.mxu0 0.0
    %3521 = vmatpush1.msra.mxu0 0.0
    %3522 = vmatprep.subr.mxu0 0.0
    %3523 = vmatpush1.msra.mxu0 0.0
    %3524 = vmatprep.subr.mxu0 0.0
    %3525 = vmatpush1.msra.mxu0 0.0
    %3526 = vmatprep.subr.mxu0 0.0
    %3527 = vmatpush1.msra.mxu0 0.0
    %3528 = vmatprep.subr.mxu0 0.0
    %3529 = vmatpush1.msra.mxu0 0.0
    %3530 = vmatprep.subr.mxu0 0.0
    %3531 = vmatpush1.msra.mxu0 0.0
    %3532 = vmatprep.subr.mxu0 0.0
    %3533 = vmatpush1.msra.mxu0 0.0
    %3534 = vmatprep.subr.mxu0 0.0
    %3535 = vmatpush1.msra.mxu0 0.0
    %3536 = vmatprep.subr.mxu0 0.0
    %3537 = vmatpush1.msra.mxu0 0.0
    %3538 = vmatprep.subr.mxu0 0.0
    %3539 = vmatpush1.msra.mxu0 0.0
    %3540 = vmatprep.subr.mxu0 0.0
    %3541 = vmatpush1.msra.mxu0 0.0
    %3542 = vmatprep.subr.mxu0 0.0
    %3543 = vmatpush1.msra.mxu0 0.0
    %3544 = vmatprep.subr.mxu0 0.0
    %3545 = vmatpush1.msra.mxu0 0.0
    %3546 = vmatprep.subr.mxu0 0.0
    %3547 = vmatpush1.msra.mxu0 0.0
    %3548 = vmatprep.subr.mxu0 0.0
    %3549 = vmatpush1.msra.mxu0 0.0
    %3550 = vmatprep.subr.mxu0 0.0
    %3551 = vmatpush1.msra.mxu0 0.0
    %3552 = vmatprep.subr.mxu0 0.0
    %3553 = vmatpush1.msra.mxu0 0.0
    %3554 = vmatprep.subr.mxu0 0.0
    %3555 = vmatpush1.msra.mxu0 0.0
    %3556 = vmatprep.subr.mxu0 0.0
    %3557 = vmatpush1.msra.mxu0 0.0
    %3558 = vmatprep.subr.mxu0 0.0
    %3559 = vmatpush1.msra.mxu0 0.0
    %3560 = vmatprep.subr.mxu0 0.0
    %3561 = vmatpush1.msra.mxu0 0.0
    %3562 = vmatprep.subr.mxu0 0.0
    %3563 = vmatpush1.msra.mxu0 0.0
    %3564 = vmatprep.subr.mxu0 0.0
    %3565 = vmatpush1.msra.mxu0 0.0
    %3566 = vmatprep.subr.mxu0 0.0
    %3567 = vmatpush1.msra.mxu0 0.0
    %3568 = vmatprep.subr.mxu0 0.0
    %3569 = vmatpush1.msra.mxu0 0.0
    %3570 = vmatprep.mubr.f32.mxu0 0.0
    %3571 = vmatmul.mubr.f32.gmra.mrb[0].mxu0 %v3433
    %v3572 = vpop.f32.mrb[0].mxu0
    %v3573 = vadd.f32 0.0, %v3572
    %v3574 = vpop.f32.mrb[0].mxu0
    %v3575 = vadd.f32 0.0, %v3574
    %3576 = vdwg.mxu0
    %3577 = vmatprep.subr.mxu0 %v3400
    %3578 = vmatpush1.msra.mxu0 %v3399
    %3579 = vmatprep.subr.mxu0 %v3409
    %3580 = vmatpush1.msra.mxu0 %v3408
    %3581 = vmatprep.subr.mxu0 %v3418
    %3582 = vmatpush1.msra.mxu0 %v3417
    %3583 = vmatprep.subr.mxu0 %v3427
    %3584 = vmatpush1.msra.mxu0 %v3426
    %3585 = vmatprep.subr.mxu0 0.0
    %3586 = vmatpush1.msra.mxu0 0.0
    %3587 = vmatprep.subr.mxu0 0.0
    %3588 = vmatpush1.msra.mxu0 0.0
    %3589 = vmatprep.subr.mxu0 0.0
    %3590 = vmatpush1.msra.mxu0 0.0
    %3591 = vmatprep.subr.mxu0 0.0
    %3592 = vmatpush1.msra.mxu0 0.0
    %3593 = vmatprep.subr.mxu0 0.0
    %3594 = vmatpush1.msra.mxu0 0.0
    %3595 = vmatprep.subr.mxu0 0.0
    %3596 = vmatpush1.msra.mxu0 0.0
    %3597 = vmatprep.subr.mxu0 0.0
    %3598 = vmatpush1.msra.mxu0 0.0
    %3599 = vmatprep.subr.mxu0 0.0
    %3600 = vmatpush1.msra.mxu0 0.0
    %3601 = vmatprep.subr.mxu0 0.0
    %3602 = vmatpush1.msra.mxu0 0.0
    %3603 = vmatprep.subr.mxu0 0.0
    %3604 = vmatpush1.msra.mxu0 0.0
    %3605 = vmatprep.subr.mxu0 0.0
    %3606 = vmatpush1.msra.mxu0 0.0
    %3607 = vmatprep.subr.mxu0 0.0
    %3608 = vmatpush1.msra.mxu0 0.0
    %3609 = vmatprep.subr.mxu0 0.0
    %3610 = vmatpush1.msra.mxu0 0.0
    %3611 = vmatprep.subr.mxu0 0.0
    %3612 = vmatpush1.msra.mxu0 0.0
    %3613 = vmatprep.subr.mxu0 0.0
    %3614 = vmatpush1.msra.mxu0 0.0
    %3615 = vmatprep.subr.mxu0 0.0
    %3616 = vmatpush1.msra.mxu0 0.0
    %3617 = vmatprep.subr.mxu0 0.0
    %3618 = vmatpush1.msra.mxu0 0.0
    %3619 = vmatprep.subr.mxu0 0.0
    %3620 = vmatpush1.msra.mxu0 0.0
    %3621 = vmatprep.subr.mxu0 0.0
    %3622 = vmatpush1.msra.mxu0 0.0
    %3623 = vmatprep.subr.mxu0 0.0
    %3624 = vmatpush1.msra.mxu0 0.0
    %3625 = vmatprep.subr.mxu0 0.0
    %3626 = vmatpush1.msra.mxu0 0.0
    %3627 = vmatprep.subr.mxu0 0.0
    %3628 = vmatpush1.msra.mxu0 0.0
    %3629 = vmatprep.subr.mxu0 0.0
    %3630 = vmatpush1.msra.mxu0 0.0
    %3631 = vmatprep.subr.mxu0 0.0
    %3632 = vmatpush1.msra.mxu0 0.0
    %3633 = vmatprep.subr.mxu0 0.0
    %3634 = vmatpush1.msra.mxu0 0.0
    %3635 = vmatprep.subr.mxu0 0.0
    %3636 = vmatpush1.msra.mxu0 0.0
    %3637 = vmatprep.subr.mxu0 0.0
    %3638 = vmatpush1.msra.mxu0 0.0
    %3639 = vmatprep.subr.mxu0 0.0
    %3640 = vmatpush1.msra.mxu0 0.0
    %3641 = vmatprep.mubr.f32.mxu0 0.0
    %3642 = vmatmul.mubr.f32.gmra.mrb[0].mxu0 %v3433
    %v3643 = vpop.f32.mrb[0].mxu0
    %v3644 = vadd.f32 0.0, %v3643
    %v3645 = vpop.f32.mrb[0].mxu0
    %v3646 = vadd.f32 0.0, %v3645
    %3647 = vdwg.mxu0
    %3648 = vmatprep.subr.mxu0 %v3402
    %3649 = vmatpush1.msra.mxu0 %v3401
    %3650 = vmatprep.subr.mxu0 %v3411
    %3651 = vmatpush1.msra.mxu0 %v3410
    %3652 = vmatprep.subr.mxu0 %v3420
    %3653 = vmatpush1.msra.mxu0 %v3419
    %3654 = vmatprep.subr.mxu0 %v3429
    %3655 = vmatpush1.msra.mxu0 %v3428
    %3656 = vmatprep.subr.mxu0 0.0
    %3657 = vmatpush1.msra.mxu0 0.0
    %3658 = vmatprep.subr.mxu0 0.0
    %3659 = vmatpush1.msra.mxu0 0.0
    %3660 = vmatprep.subr.mxu0 0.0
    %3661 = vmatpush1.msra.mxu0 0.0
    %3662 = vmatprep.subr.mxu0 0.0
    %3663 = vmatpush1.msra.mxu0 0.0
    %3664 = vmatprep.subr.mxu0 0.0
    %3665 = vmatpush1.msra.mxu0 0.0
    %3666 = vmatprep.subr.mxu0 0.0
    %3667 = vmatpush1.msra.mxu0 0.0
    %3668 = vmatprep.subr.mxu0 0.0
    %3669 = vmatpush1.msra.mxu0 0.0
    %3670 = vmatprep.subr.mxu0 0.0
    %3671 = vmatpush1.msra.mxu0 0.0
    %3672 = vmatprep.subr.mxu0 0.0
    %3673 = vmatpush1.msra.mxu0 0.0
    %3674 = vmatprep.subr.mxu0 0.0
    %3675 = vmatpush1.msra.mxu0 0.0
    %3676 = vmatprep.subr.mxu0 0.0
    %3677 = vmatpush1.msra.mxu0 0.0
    %3678 = vmatprep.subr.mxu0 0.0
    %3679 = vmatpush1.msra.mxu0 0.0
    %3680 = vmatprep.subr.mxu0 0.0
    %3681 = vmatpush1.msra.mxu0 0.0
    %3682 = vmatprep.subr.mxu0 0.0
    %3683 = vmatpush1.msra.mxu0 0.0
    %3684 = vmatprep.subr.mxu0 0.0
    %3685 = vmatpush1.msra.mxu0 0.0
    %3686 = vmatprep.subr.mxu0 0.0
    %3687 = vmatpush1.msra.mxu0 0.0
    %3688 = vmatprep.subr.mxu0 0.0
    %3689 = vmatpush1.msra.mxu0 0.0
    %3690 = vmatprep.subr.mxu0 0.0
    %3691 = vmatpush1.msra.mxu0 0.0
    %3692 = vmatprep.subr.mxu0 0.0
    %3693 = vmatpush1.msra.mxu0 0.0
    %3694 = vmatprep.subr.mxu0 0.0
    %3695 = vmatpush1.msra.mxu0 0.0
    %3696 = vmatprep.subr.mxu0 0.0
    %3697 = vmatpush1.msra.mxu0 0.0
    %3698 = vmatprep.subr.mxu0 0.0
    %3699 = vmatpush1.msra.mxu0 0.0
    %3700 = vmatprep.subr.mxu0 0.0
    %3701 = vmatpush1.msra.mxu0 0.0
    %3702 = vmatprep.subr.mxu0 0.0
    %3703 = vmatpush1.msra.mxu0 0.0
    %3704 = vmatprep.subr.mxu0 0.0
    %3705 = vmatpush1.msra.mxu0 0.0
    %3706 = vmatprep.subr.mxu0 0.0
    %3707 = vmatpush1.msra.mxu0 0.0
    %3708 = vmatprep.subr.mxu0 0.0
    %3709 = vmatpush1.msra.mxu0 0.0
    %3710 = vmatprep.subr.mxu0 0.0
    %3711 = vmatpush1.msra.mxu0 0.0
    %3712 = vmatprep.mubr.f32.mxu0 0.0
    %3713 = vmatmul.mubr.f32.gmra.mrb[0].mxu0 %v3433
    %v3714 = vpop.f32.mrb[0].mxu0
    %v3715 = vadd.f32 0.0, %v3714
    %v3716 = vpop.f32.mrb[0].mxu0
    %v3717 = vadd.f32 0.0, %v3716
    %3718 = vdwg.mxu0
    %3719 = vmatprep.subr.mxu0 0.0
    %3720 = vmatpush1.msra.mxu0 %v3403
    %3721 = vmatprep.subr.mxu0 0.0
    %3722 = vmatpush1.msra.mxu0 %v3412
    %3723 = vmatprep.subr.mxu0 0.0
    %3724 = vmatpush1.msra.mxu0 %v3421
    %3725 = vmatprep.subr.mxu0 0.0
    %3726 = vmatpush1.msra.mxu0 %v3430
    %3727 = vmatprep.subr.mxu0 0.0
    %3728 = vmatpush1.msra.mxu0 0.0
    %3729 = vmatprep.subr.mxu0 0.0
    %3730 = vmatpush1.msra.mxu0 0.0
    %3731 = vmatprep.subr.mxu0 0.0
    %3732 = vmatpush1.msra.mxu0 0.0
    %3733 = vmatprep.subr.mxu0 0.0
    %3734 = vmatpush1.msra.mxu0 0.0
    %3735 = vmatprep.subr.mxu0 0.0
    %3736 = vmatpush1.msra.mxu0 0.0
    %3737 = vmatprep.subr.mxu0 0.0
    %3738 = vmatpush1.msra.mxu0 0.0
    %3739 = vmatprep.subr.mxu0 0.0
    %3740 = vmatpush1.msra.mxu0 0.0
    %3741 = vmatprep.subr.mxu0 0.0
    %3742 = vmatpush1.msra.mxu0 0.0
    %3743 = vmatprep.subr.mxu0 0.0
    %3744 = vmatpush1.msra.mxu0 0.0
    %3745 = vmatprep.subr.mxu0 0.0
    %3746 = vmatpush1.msra.mxu0 0.0
    %3747 = vmatprep.subr.mxu0 0.0
    %3748 = vmatpush1.msra.mxu0 0.0
    %3749 = vmatprep.subr.mxu0 0.0
    %3750 = vmatpush1.msra.mxu0 0.0
    %3751 = vmatprep.subr.mxu0 0.0
    %3752 = vmatpush1.msra.mxu0 0.0
    %3753 = vmatprep.subr.mxu0 0.0
    %3754 = vmatpush1.msra.mxu0 0.0
    %3755 = vmatprep.subr.mxu0 0.0
    %3756 = vmatpush1.msra.mxu0 0.0
    %3757 = vmatprep.subr.mxu0 0.0
    %3758 = vmatpush1.msra.mxu0 0.0
    %3759 = vmatprep.subr.mxu0 0.0
    %3760 = vmatpush1.msra.mxu0 0.0
    %3761 = vmatprep.subr.mxu0 0.0
    %3762 = vmatpush1.msra.mxu0 0.0
    %3763 = vmatprep.subr.mxu0 0.0
    %3764 = vmatpush1.msra.mxu0 0.0
    %3765 = vmatprep.subr.mxu0 0.0
    %3766 = vmatpush1.msra.mxu0 0.0
    %3767 = vmatprep.subr.mxu0 0.0
    %3768 = vmatpush1.msra.mxu0 0.0
    %3769 = vmatprep.subr.mxu0 0.0
    %3770 = vmatpush1.msra.mxu0 0.0
    %3771 = vmatprep.subr.mxu0 0.0
    %3772 = vmatpush1.msra.mxu0 0.0
    %3773 = vmatprep.subr.mxu0 0.0
    %3774 = vmatpush1.msra.mxu0 0.0
    %3775 = vmatprep.subr.mxu0 0.0
    %3776 = vmatpush1.msra.mxu0 0.0
    %3777 = vmatprep.subr.mxu0 0.0
    %3778 = vmatpush1.msra.mxu0 0.0
    %3779 = vmatprep.subr.mxu0 0.0
    %3780 = vmatpush1.msra.mxu0 0.0
    %3781 = vmatprep.subr.mxu0 0.0
    %3782 = vmatpush1.msra.mxu0 0.0
    %3783 = vmatprep.mubr.f32.mxu0 0.0
    %3784 = vmatmul.mubr.f32.gmra.mrb[0].mxu0 %v3433
    %v3785 = vpop.f32.mrb[0].mxu0
    %v3786 = vadd.f32 0.0, %v3785
    %v3787 = vpop.f32.mrb[0].mxu0
    %3788 = vdwg.mxu0
    %v3790 = vsel %vm3431, %v3394, 0
    %3792 = vmatprep.subr.mxu0 %v3396
    %3793 = vmatpush1.msra.mxu0 %v3395
    %3794 = vmatprep.subr.mxu0 %v3405
    %3795 = vmatpush1.msra.mxu0 %v3404
    %3796 = vmatprep.subr.mxu0 %v3414
    %3797 = vmatpush1.msra.mxu0 %v3413
    %3798 = vmatprep.subr.mxu0 %v3423
    %3799 = vmatpush1.msra.mxu0 %v3422
    %3800 = vmatprep.subr.mxu0 0.0
    %3801 = vmatpush1.msra.mxu0 0.0
    %3802 = vmatprep.subr.mxu0 0.0
    %3803 = vmatpush1.msra.mxu0 0.0
    %3804 = vmatprep.subr.mxu0 0.0
    %3805 = vmatpush1.msra.mxu0 0.0
    %3806 = vmatprep.subr.mxu0 0.0
    %3807 = vmatpush1.msra.mxu0 0.0
    %3808 = vmatprep.subr.mxu0 0.0
    %3809 = vmatpush1.msra.mxu0 0.0
    %3810 = vmatprep.subr.mxu0 0.0
    %3811 = vmatpush1.msra.mxu0 0.0
    %3812 = vmatprep.subr.mxu0 0.0
    %3813 = vmatpush1.msra.mxu0 0.0
    %3814 = vmatprep.subr.mxu0 0.0
    %3815 = vmatpush1.msra.mxu0 0.0
    %3816 = vmatprep.subr.mxu0 0.0
    %3817 = vmatpush1.msra.mxu0 0.0
    %3818 = vmatprep.subr.mxu0 0.0
    %3819 = vmatpush1.msra.mxu0 0.0
    %3820 = vmatprep.subr.mxu0 0.0
    %3821 = vmatpush1.msra.mxu0 0.0
    %3822 = vmatprep.subr.mxu0 0.0
    %3823 = vmatpush1.msra.mxu0 0.0
    %3824 = vmatprep.subr.mxu0 0.0
    %3825 = vmatpush1.msra.mxu0 0.0
    %3826 = vmatprep.subr.mxu0 0.0
    %3827 = vmatpush1.msra.mxu0 0.0
    %3828 = vmatprep.subr.mxu0 0.0
    %3829 = vmatpush1.msra.mxu0 0.0
    %3830 = vmatprep.subr.mxu0 0.0
    %3831 = vmatpush1.msra.mxu0 0.0
    %3832 = vmatprep.subr.mxu0 0.0
    %3833 = vmatpush1.msra.mxu0 0.0
    %3834 = vmatprep.subr.mxu0 0.0
    %3835 = vmatpush1.msra.mxu0 0.0
    %3836 = vmatprep.subr.mxu0 0.0
    %3837 = vmatpush1.msra.mxu0 0.0
    %3838 = vmatprep.subr.mxu0 0.0
    %3839 = vmatpush1.msra.mxu0 0.0
    %3840 = vmatprep.subr.mxu0 0.0
    %3841 = vmatpush1.msra.mxu0 0.0
    %3842 = vmatprep.subr.mxu0 0.0
    %3843 = vmatpush1.msra.mxu0 0.0
    %3844 = vmatprep.subr.mxu0 0.0
    %3845 = vmatpush1.msra.mxu0 0.0
    %3846 = vmatprep.subr.mxu0 0.0
    %3847 = vmatpush1.msra.mxu0 0.0
    %3848 = vmatprep.subr.mxu0 0.0
    %3849 = vmatpush1.msra.mxu0 0.0
    %3850 = vmatprep.subr.mxu0 0.0
    %3851 = vmatpush1.msra.mxu0 0.0
    %3852 = vmatprep.subr.mxu0 0.0
    %3853 = vmatpush1.msra.mxu0 0.0
    %3854 = vmatprep.subr.mxu0 0.0
    %3855 = vmatpush1.msra.mxu0 0.0
    %3856 = vmatprep.mubr.f32.mxu0 0.0
    %3857 = vmatmul.mubr.f32.gmra.mrb[0].mxu0 %v3790
    %v3858 = vpop.f32.mrb[0].mxu0
    %v3859 = vadd.f32 0.0, %v3858
    %v3860 = vpop.f32.mrb[0].mxu0
    %v3861 = vadd.f32 0.0, %v3860
    %3862 = vdwg.mxu0
    %3863 = vmatprep.subr.mxu0 %v3398
    %3864 = vmatpush1.msra.mxu0 %v3397
    %3865 = vmatprep.subr.mxu0 %v3407
    %3866 = vmatpush1.msra.mxu0 %v3406
    %3867 = vmatprep.subr.mxu0 %v3416
    %3868 = vmatpush1.msra.mxu0 %v3415
    %3869 = vmatprep.subr.mxu0 %v3425
    %3870 = vmatpush1.msra.mxu0 %v3424
    %3871 = vmatprep.subr.mxu0 0.0
    %3872 = vmatpush1.msra.mxu0 0.0
    %3873 = vmatprep.subr.mxu0 0.0
    %3874 = vmatpush1.msra.mxu0 0.0
    %3875 = vmatprep.subr.mxu0 0.0
    %3876 = vmatpush1.msra.mxu0 0.0
    %3877 = vmatprep.subr.mxu0 0.0
    %3878 = vmatpush1.msra.mxu0 0.0
    %3879 = vmatprep.subr.mxu0 0.0
    %3880 = vmatpush1.msra.mxu0 0.0
    %3881 = vmatprep.subr.mxu0 0.0
    %3882 = vmatpush1.msra.mxu0 0.0
    %3883 = vmatprep.subr.mxu0 0.0
    %3884 = vmatpush1.msra.mxu0 0.0
    %3885 = vmatprep.subr.mxu0 0.0
    %3886 = vmatpush1.msra.mxu0 0.0
    %3887 = vmatprep.subr.mxu0 0.0
    %3888 = vmatpush1.msra.mxu0 0.0
    %3889 = vmatprep.subr.mxu0 0.0
    %3890 = vmatpush1.msra.mxu0 0.0
    %3891 = vmatprep.subr.mxu0 0.0
    %3892 = vmatpush1.msra.mxu0 0.0
    %3893 = vmatprep.subr.mxu0 0.0
    %3894 = vmatpush1.msra.mxu0 0.0
    %3895 = vmatprep.subr.mxu0 0.0
    %3896 = vmatpush1.msra.mxu0 0.0
    %3897 = vmatprep.subr.mxu0 0.0
    %3898 = vmatpush1.msra.mxu0 0.0
    %3899 = vmatprep.subr.mxu0 0.0
    %3900 = vmatpush1.msra.mxu0 0.0
    %3901 = vmatprep.subr.mxu0 0.0
    %3902 = vmatpush1.msra.mxu0 0.0
    %3903 = vmatprep.subr.mxu0 0.0
    %3904 = vmatpush1.msra.mxu0 0.0
    %3905 = vmatprep.subr.mxu0 0.0
    %3906 = vmatpush1.msra.mxu0 0.0
    %3907 = vmatprep.subr.mxu0 0.0
    %3908 = vmatpush1.msra.mxu0 0.0
    %3909 = vmatprep.subr.mxu0 0.0
    %3910 = vmatpush1.msra.mxu0 0.0
    %3911 = vmatprep.subr.mxu0 0.0
    %3912 = vmatpush1.msra.mxu0 0.0
    %3913 = vmatprep.subr.mxu0 0.0
    %3914 = vmatpush1.msra.mxu0 0.0
    %3915 = vmatprep.subr.mxu0 0.0
    %3916 = vmatpush1.msra.mxu0 0.0
    %3917 = vmatprep.subr.mxu0 0.0
    %3918 = vmatpush1.msra.mxu0 0.0
    %3919 = vmatprep.subr.mxu0 0.0
    %3920 = vmatpush1.msra.mxu0 0.0
    %3921 = vmatprep.subr.mxu0 0.0
    %3922 = vmatpush1.msra.mxu0 0.0
    %3923 = vmatprep.subr.mxu0 0.0
    %3924 = vmatpush1.msra.mxu0 0.0
    %3925 = vmatprep.subr.mxu0 0.0
    %3926 = vmatpush1.msra.mxu0 0.0
    %3927 = vmatprep.mubr.f32.mxu0 0.0
    %3928 = vmatmul.mubr.f32.gmra.mrb[0].mxu0 %v3790
    %v3929 = vpop.f32.mrb[0].mxu0
    %v3930 = vadd.f32 0.0, %v3929
    %v3931 = vpop.f32.mrb[0].mxu0
    %v3932 = vadd.f32 0.0, %v3931
    %3933 = vdwg.mxu0
    %3934 = vmatprep.subr.mxu0 %v3400
    %3935 = vmatpush1.msra.mxu0 %v3399
    %3936 = vmatprep.subr.mxu0 %v3409
    %3937 = vmatpush1.msra.mxu0 %v3408
    %3938 = vmatprep.subr.mxu0 %v3418
    %3939 = vmatpush1.msra.mxu0 %v3417
    %3940 = vmatprep.subr.mxu0 %v3427
    %3941 = vmatpush1.msra.mxu0 %v3426
    %3942 = vmatprep.subr.mxu0 0.0
    %3943 = vmatpush1.msra.mxu0 0.0
    %3944 = vmatprep.subr.mxu0 0.0
    %3945 = vmatpush1.msra.mxu0 0.0
    %3946 = vmatprep.subr.mxu0 0.0
    %3947 = vmatpush1.msra.mxu0 0.0
    %3948 = vmatprep.subr.mxu0 0.0
    %3949 = vmatpush1.msra.mxu0 0.0
    %3950 = vmatprep.subr.mxu0 0.0
    %3951 = vmatpush1.msra.mxu0 0.0
    %3952 = vmatprep.subr.mxu0 0.0
    %3953 = vmatpush1.msra.mxu0 0.0
    %3954 = vmatprep.subr.mxu0 0.0
    %3955 = vmatpush1.msra.mxu0 0.0
    %3956 = vmatprep.subr.mxu0 0.0
    %3957 = vmatpush1.msra.mxu0 0.0
    %3958 = vmatprep.subr.mxu0 0.0
    %3959 = vmatpush1.msra.mxu0 0.0
    %3960 = vmatprep.subr.mxu0 0.0
    %3961 = vmatpush1.msra.mxu0 0.0
    %3962 = vmatprep.subr.mxu0 0.0
    %3963 = vmatpush1.msra.mxu0 0.0
    %3964 = vmatprep.subr.mxu0 0.0
    %3965 = vmatpush1.msra.mxu0 0.0
    %3966 = vmatprep.subr.mxu0 0.0
    %3967 = vmatpush1.msra.mxu0 0.0
    %3968 = vmatprep.subr.mxu0 0.0
    %3969 = vmatpush1.msra.mxu0 0.0
    %3970 = vmatprep.subr.mxu0 0.0
    %3971 = vmatpush1.msra.mxu0 0.0
    %3972 = vmatprep.subr.mxu0 0.0
    %3973 = vmatpush1.msra.mxu0 0.0
    %3974 = vmatprep.subr.mxu0 0.0
    %3975 = vmatpush1.msra.mxu0 0.0
    %3976 = vmatprep.subr.mxu0 0.0
    %3977 = vmatpush1.msra.mxu0 0.0
    %3978 = vmatprep.subr.mxu0 0.0
    %3979 = vmatpush1.msra.mxu0 0.0
    %3980 = vmatprep.subr.mxu0 0.0
    %3981 = vmatpush1.msra.mxu0 0.0
    %3982 = vmatprep.subr.mxu0 0.0
    %3983 = vmatpush1.msra.mxu0 0.0
    %3984 = vmatprep.subr.mxu0 0.0
    %3985 = vmatpush1.msra.mxu0 0.0
    %3986 = vmatprep.subr.mxu0 0.0
    %3987 = vmatpush1.msra.mxu0 0.0
    %3988 = vmatprep.subr.mxu0 0.0
    %3989 = vmatpush1.msra.mxu0 0.0
    %3990 = vmatprep.subr.mxu0 0.0
    %3991 = vmatpush1.msra.mxu0 0.0
    %3992 = vmatprep.subr.mxu0 0.0
    %3993 = vmatpush1.msra.mxu0 0.0
    %3994 = vmatprep.subr.mxu0 0.0
    %3995 = vmatpush1.msra.mxu0 0.0
    %3996 = vmatprep.subr.mxu0 0.0
    %3997 = vmatpush1.msra.mxu0 0.0
    %3998 = vmatprep.mubr.f32.mxu0 0.0
    %3999 = vmatmul.mubr.f32.gmra.mrb[0].mxu0 %v3790
    %v4000 = vpop.f32.mrb[0].mxu0
    %v4001 = vadd.f32 0.0, %v4000
    %v4002 = vpop.f32.mrb[0].mxu0
    %v4003 = vadd.f32 0.0, %v4002
    %4004 = vdwg.mxu0
    %4005 = vmatprep.subr.mxu0 %v3402
    %4006 = vmatpush1.msra.mxu0 %v3401
    %4007 = vmatprep.subr.mxu0 %v3411
    %4008 = vmatpush1.msra.mxu0 %v3410
    %4009 = vmatprep.subr.mxu0 %v3420
    %4010 = vmatpush1.msra.mxu0 %v3419
    %4011 = vmatprep.subr.mxu0 %v3429
    %4012 = vmatpush1.msra.mxu0 %v3428
    %4013 = vmatprep.subr.mxu0 0.0
    %4014 = vmatpush1.msra.mxu0 0.0
    %4015 = vmatprep.subr.mxu0 0.0
    %4016 = vmatpush1.msra.mxu0 0.0
    %4017 = vmatprep.subr.mxu0 0.0
    %4018 = vmatpush1.msra.mxu0 0.0
    %4019 = vmatprep.subr.mxu0 0.0
    %4020 = vmatpush1.msra.mxu0 0.0
    %4021 = vmatprep.subr.mxu0 0.0
    %4022 = vmatpush1.msra.mxu0 0.0
    %4023 = vmatprep.subr.mxu0 0.0
    %4024 = vmatpush1.msra.mxu0 0.0
    %4025 = vmatprep.subr.mxu0 0.0
    %4026 = vmatpush1.msra.mxu0 0.0
    %4027 = vmatprep.subr.mxu0 0.0
    %4028 = vmatpush1.msra.mxu0 0.0
    %4029 = vmatprep.subr.mxu0 0.0
    %4030 = vmatpush1.msra.mxu0 0.0
    %4031 = vmatprep.subr.mxu0 0.0
    %4032 = vmatpush1.msra.mxu0 0.0
    %4033 = vmatprep.subr.mxu0 0.0
    %4034 = vmatpush1.msra.mxu0 0.0
    %4035 = vmatprep.subr.mxu0 0.0
    %4036 = vmatpush1.msra.mxu0 0.0
    %4037 = vmatprep.subr.mxu0 0.0
    %4038 = vmatpush1.msra.mxu0 0.0
    %4039 = vmatprep.subr.mxu0 0.0
    %4040 = vmatpush1.msra.mxu0 0.0
    %4041 = vmatprep.subr.mxu0 0.0
    %4042 = vmatpush1.msra.mxu0 0.0
    %4043 = vmatprep.subr.mxu0 0.0
    %4044 = vmatpush1.msra.mxu0 0.0
    %4045 = vmatprep.subr.mxu0 0.0
    %4046 = vmatpush1.msra.mxu0 0.0
    %4047 = vmatprep.subr.mxu0 0.0
    %4048 = vmatpush1.msra.mxu0 0.0
    %4049 = vmatprep.subr.mxu0 0.0
    %4050 = vmatpush1.msra.mxu0 0.0
    %4051 = vmatprep.subr.mxu0 0.0
    %4052 = vmatpush1.msra.mxu0 0.0
    %4053 = vmatprep.subr.mxu0 0.0
    %4054 = vmatpush1.msra.mxu0 0.0
    %4055 = vmatprep.subr.mxu0 0.0
    %4056 = vmatpush1.msra.mxu0 0.0
    %4057 = vmatprep.subr.mxu0 0.0
    %4058 = vmatpush1.msra.mxu0 0.0
    %4059 = vmatprep.subr.mxu0 0.0
    %4060 = vmatpush1.msra.mxu0 0.0
    %4061 = vmatprep.subr.mxu0 0.0
    %4062 = vmatpush1.msra.mxu0 0.0
    %4063 = vmatprep.subr.mxu0 0.0
    %4064 = vmatpush1.msra.mxu0 0.0
    %4065 = vmatprep.subr.mxu0 0.0
    %4066 = vmatpush1.msra.mxu0 0.0
    %4067 = vmatprep.subr.mxu0 0.0
    %4068 = vmatpush1.msra.mxu0 0.0
    %4069 = vmatprep.mubr.f32.mxu0 0.0
    %4070 = vmatmul.mubr.f32.gmra.mrb[0].mxu0 %v3790
    %v4071 = vpop.f32.mrb[0].mxu0
    %v4072 = vadd.f32 0.0, %v4071
    %v4073 = vpop.f32.mrb[0].mxu0
    %v4074 = vadd.f32 0.0, %v4073
    %4075 = vdwg.mxu0
    %4076 = vmatprep.subr.mxu0 0.0
    %4077 = vmatpush1.msra.mxu0 %v3403
    %4078 = vmatprep.subr.mxu0 0.0
    %4079 = vmatpush1.msra.mxu0 %v3412
    %4080 = vmatprep.subr.mxu0 0.0
    %4081 = vmatpush1.msra.mxu0 %v3421
    %4082 = vmatprep.subr.mxu0 0.0
    %4083 = vmatpush1.msra.mxu0 %v3430
    %4084 = vmatprep.subr.mxu0 0.0
    %4085 = vmatpush1.msra.mxu0 0.0
    %4086 = vmatprep.subr.mxu0 0.0
    %4087 = vmatpush1.msra.mxu0 0.0
    %4088 = vmatprep.subr.mxu0 0.0
    %4089 = vmatpush1.msra.mxu0 0.0
    %4090 = vmatprep.subr.mxu0 0.0
    %4091 = vmatpush1.msra.mxu0 0.0
    %4092 = vmatprep.subr.mxu0 0.0
    %4093 = vmatpush1.msra.mxu0 0.0
    %4094 = vmatprep.subr.mxu0 0.0
    %4095 = vmatpush1.msra.mxu0 0.0
    %4096 = vmatprep.subr.mxu0 0.0
    %4097 = vmatpush1.msra.mxu0 0.0
    %4098 = vmatprep.subr.mxu0 0.0
    %4099 = vmatpush1.msra.mxu0 0.0
    %4100 = vmatprep.subr.mxu0 0.0
    %4101 = vmatpush1.msra.mxu0 0.0
    %4102 = vmatprep.subr.mxu0 0.0
    %4103 = vmatpush1.msra.mxu0 0.0
    %4104 = vmatprep.subr.mxu0 0.0
    %4105 = vmatpush1.msra.mxu0 0.0
    %4106 = vmatprep.subr.mxu0 0.0
    %4107 = vmatpush1.msra.mxu0 0.0
    %4108 = vmatprep.subr.mxu0 0.0
    %4109 = vmatpush1.msra.mxu0 0.0
    %4110 = vmatprep.subr.mxu0 0.0
    %4111 = vmatpush1.msra.mxu0 0.0
    %4112 = vmatprep.subr.mxu0 0.0
    %4113 = vmatpush1.msra.mxu0 0.0
    %4114 = vmatprep.subr.mxu0 0.0
    %4115 = vmatpush1.msra.mxu0 0.0
    %4116 = vmatprep.subr.mxu0 0.0
    %4117 = vmatpush1.msra.mxu0 0.0
    %4118 = vmatprep.subr.mxu0 0.0
    %4119 = vmatpush1.msra.mxu0 0.0
    %4120 = vmatprep.subr.mxu0 0.0
    %4121 = vmatpush1.msra.mxu0 0.0
    %4122 = vmatprep.subr.mxu0 0.0
    %4123 = vmatpush1.msra.mxu0 0.0
    %4124 = vmatprep.subr.mxu0 0.0
    %4125 = vmatpush1.msra.mxu0 0.0
    %4126 = vmatprep.subr.mxu0 0.0
    %4127 = vmatpush1.msra.mxu0 0.0
    %4128 = vmatprep.subr.mxu0 0.0
    %4129 = vmatpush1.msra.mxu0 0.0
    %4130 = vmatprep.subr.mxu0 0.0
    %4131 = vmatpush1.msra.mxu0 0.0
    %4132 = vmatprep.subr.mxu0 0.0
    %4133 = vmatpush1.msra.mxu0 0.0
    %4134 = vmatprep.subr.mxu0 0.0
    %4135 = vmatpush1.msra.mxu0 0.0
    %4136 = vmatprep.subr.mxu0 0.0
    %4137 = vmatpush1.msra.mxu0 0.0
    %4138 = vmatprep.subr.mxu0 0.0
    %4139 = vmatpush1.msra.mxu0 0.0
    %4140 = vmatprep.mubr.f32.mxu0 0.0
    %4141 = vmatmul.mubr.f32.gmra.mrb[0].mxu0 %v3790
    %v4142 = vpop.f32.mrb[0].mxu0
    %v4143 = vadd.f32 0.0, %v4142
    %v4144 = vpop.f32.mrb[0].mxu0
    %4145 = vdwg.mxu0
    %v4146 = vsub.f32 %v2368, %v3502
    %v4147 = vsub.f32 %v2370, %v3504
    %v4148 = vsub.f32 %v2409, %v3573
    %v4149 = vsub.f32 %v2411, %v3575
    %v4150 = vsub.f32 %v2450, %v3644
    %v4151 = vsub.f32 %v2452, %v3646
    %v4152 = vsub.f32 %v2491, %v3715
    %v4153 = vsub.f32 %v2493, %v3717
    %v4154 = vsub.f32 %v2532, %v3786
    %v4155 = vmul.f32 %v4146, %v3859
    %v4156 = vmul.f32 %v4147, %v3861
    %v4157 = vmul.f32 %v4148, %v3930
    %v4158 = vmul.f32 %v4149, %v3932
    %v4159 = vmul.f32 %v4150, %v4001
    %v4160 = vmul.f32 %v4151, %v4003
    %v4161 = vmul.f32 %v4152, %v4072
    %v4162 = vmul.f32 %v4153, %v4074
    %v4163 = vmul.f32 %v4154, %v4143
    %vm4164 = vcmp.ge.f32.partialorder %v4155, 0.0
    %vm4165 = vcmp.ge.f32.partialorder %v4156, 0.0
    %vm4166 = vcmp.ge.f32.partialorder %v4157, 0.0
    %vm4167 = vcmp.ge.f32.partialorder %v4158, 0.0
    %vm4168 = vcmp.ge.f32.partialorder %v4159, 0.0
    %vm4169 = vcmp.ge.f32.partialorder %v4160, 0.0
    %vm4170 = vcmp.ge.f32.partialorder %v4161, 0.0
    %vm4171 = vcmp.ge.f32.partialorder %v4162, 0.0
    %vm4172 = vcmp.ge.f32.partialorder %v4163, 0.0
    %v4173 = vmul.f32 %v4155, 0.2
    %v4174 = vmul.f32 %v4156, 0.2
    %v4175 = vmul.f32 %v4157, 0.2
    %v4176 = vmul.f32 %v4158, 0.2
    %v4177 = vmul.f32 %v4159, 0.2
    %v4178 = vmul.f32 %v4160, 0.2
    %v4179 = vmul.f32 %v4161, 0.2
    %v4180 = vmul.f32 %v4162, 0.2
    %v4181 = vmul.f32 %v4163, 0.2
    %v4182 = vsel %vm4164, %v4155, %v4173
    %v4183 = vsel %vm4165, %v4156, %v4174
    %v4184 = vsel %vm4166, %v4157, %v4175
    %v4185 = vsel %vm4167, %v4158, %v4176
    %v4186 = vsel %vm4168, %v4159, %v4177
    %v4187 = vsel %vm4169, %v4160, %v4178
    %v4188 = vsel %vm4170, %v4161, %v4179
    %v4189 = vsel %vm4171, %v4162, %v4180
    %v4190 = vsel %vm4172, %v4163, %v4181
    %v4191 = vpack.c.bf16 %v4182, %v4182
    %v4192 = vpack.c.bf16 %v4183, %v4183
    %v4193 = vpack.c.bf16 %v4184, %v4184
    %v4194 = vpack.c.bf16 %v4185, %v4185
    %v4195 = vpack.c.bf16 %v4186, %v4186
    %v4196 = vpack.c.bf16 %v4187, %v4187
    %v4197 = vpack.c.bf16 %v4188, %v4188
    %v4198 = vpack.c.bf16 %v4189, %v4189
    %v4199 = vpack.c.bf16 %v4190, %v4190
    %v4209 = vcombine.low %v4191, %v4192
    %v4210 = vcombine.low %v4193, %v4194
    %v4211 = vcombine.low %v4195, %v4196
    %v4212 = vcombine.low %v4197, %v4198
    %v4214 = vunpack.c.l.s4 1966171168
    %v4215 = vunpack.c.0.s8 %v4214
    %v4216 = vlaneseq
    %v4217 = vshrl.u32 %v4216, 7
    %v4218 = vsub.s32 %v4215, %v4217
    %v4219 = vrot.slane %v4209, %v4218
    %v4221 = vunpack.c.l.s4 1966171168
    %v4222 = vunpack.c.0.s8 %v4221
    %v4223 = vlaneseq
    %v4224 = vshrl.u32 %v4223, 7
    %v4225 = vsub.s32 %v4222, %v4224
    %v4226 = vrot.slane %v4210, %v4225
    %v4228 = vunpack.c.l.s4 1966171168
    %v4229 = vunpack.c.0.s8 %v4228
    %v4230 = vlaneseq
    %v4231 = vshrl.u32 %v4230, 7
    %v4232 = vsub.s32 %v4229, %v4231
    %v4233 = vrot.slane %v4211, %v4232
    %v4235 = vunpack.c.l.s4 1966171168
    %v4236 = vunpack.c.0.s8 %v4235
    %v4237 = vlaneseq
    %v4238 = vshrl.u32 %v4237, 7
    %v4239 = vsub.s32 %v4236, %v4238
    %v4240 = vrot.slane %v4212, %v4239
    %v4241 = vcombine.low %v4219, %v4226
    %v4242 = vcombine.low %v4233, %v4240
    %v4244 = vunpack.c.l.s4 1966171168
    %v4245 = vunpack.c.0.s8 %v4244
    %v4246 = vlaneseq
    %v4247 = vshrl.u32 %v4246, 7
    %v4248 = vsub.s32 %v4245, %v4247
    %v4249 = vrot.slane %v4241, %v4248
    %v4251 = vunpack.c.l.s4 1966171168
    %v4252 = vunpack.c.0.s8 %v4251
    %v4253 = vlaneseq
    %v4254 = vshrl.u32 %v4253, 7
    %v4255 = vsub.s32 %v4252, %v4254
    %v4256 = vrot.slane %v4242, %v4255
    %v4257 = vcombine.low %v4249, %v4256
    %v4259 = vunpack.c.l.s4 1966171168
    %v4260 = vunpack.c.0.s8 %v4259
    %v4261 = vlaneseq
    %v4262 = vshrl.u32 %v4261, 7
    %v4263 = vsub.s32 %v4260, %v4262
    %v4264 = vrot.slane %v4199, %v4263
    %v4266 = vunpack.c.l.s4 1966171168
    %v4267 = vunpack.c.0.s8 %v4266
    %v4268 = vlaneseq
    %v4269 = vshrl.u32 %v4268, 7
    %v4270 = vsub.s32 %v4267, %v4269
    %v4271 = vrot.slane %v4264, %v4270
    %4274 = vst [vmem:[%s10] sm:$0xff] %v4257
    %4275 = vst [vmem:[%s10 + $0x8] sm:$0x1] %v4271
    // Predicated region
    $region66: #{reconstructor_forward.4} parent=1 // pred_check
      _
    $region67: #{reconstructor_forward.4} parent=1 // pred_check_branch
      %4277 = sbr.rel (0) target = $region69
    $region68: #{reconstructor_forward.4} parent=1 // pred_region
      _
    $region69: #{reconstructor_forward.4} parent=1 // pred_fallthru
      _
    // Predicated region
    $region70: #{reconstructor_forward.4} parent=1 // pred_check
      _
    $region71: #{reconstructor_forward.4} parent=1 // pred_check_branch
      %4279 = sbr.rel (0) target = $region73
    $region72: #{reconstructor_forward.4} parent=1 // pred_region
      _
    $region73: #{reconstructor_forward.4} parent=1 // pred_fallthru
      _
    %4280 = vsyncpa [#allocation3], 1
    %4281 = vsyncpa [#allocation5], 1
    %4282 = vsyncpa [#allocation8], 1
    %4283 = vsyncpa [#allocation11], 1

// kernel: reconstructor_forward.5
$region0: #{reconstructor_forward.5}
  #allocation0 [shape = 'u32[]', space=smem, size = 0x4, offset = 0x4, fixed_abs, tag = 'smem constant byte address 0x4 - core index']
  #allocation1 [shape = 'u32[144,128]{1,0:T(1,128)}', space=vmem, size = 0x12000, scoped, tag = 'internal scratch']
  %s0 = inlined_call_operand.vmem [shape: bf16[2,128,128], index: 0, kind: input, shape index: {}]
  %s1 = inlined_call_operand.vmem [shape: bf16[64,128], index: 1, kind: input, shape index: {}]
  %s2 = inlined_call_operand.vmem [shape: bf16[2,64,128], index: 2, kind: output, shape index: {}]
  %s3 = sld [smem:[#allocation0]]
  $region41: #{reconstructor_forward.5} parent=0
    _
  %s5 = ssub.s32 1, %s3
  %s6 = scalar_select 0, %s5, %s3
  loop: start=0, step=1, limit=4
  $region2: #{reconstructor_forward.5} parent=0 // loop_pre_header
    _
  $region3: #{reconstructor_forward.5} parent=0 // loop_header
    %s8 = sphi 0, %s12
    %p9 = scmp.ge.s32.totalorder %s8, 4
    %s18 = sphi 0, %s20
    %s21 = sphi 0, %s18
    %s22 = sphi 0, %s21
    %s38 = sphi 0, %s22
    %s42 = sphi 0, %s42
    %s44 = sphi 0, %s42
    %s45 = sphi 0, %s44
    %s59 = sphi 0, %s45
    %s65 = sphi 0, %s67
    %s68 = sphi 0, %s65
    %s69 = sphi 0, %s68
    %s85 = sphi 0, %s69
  $region4: #{reconstructor_forward.5} parent=0 // loop_header_branch
    %11 = sbr.rel (%p9) target = $region8
  $region5: #{reconstructor_forward.5} parent=0 // loop_body
    %s13 = ssub.s32 %s8, 1
    %s14 = ssub.s32 %s8, 2
    %s15 = sadd.s32 %s8, 1
    %s16 = ssub.s32 %s8, %s15
    %p17 = scmp.eq.s32.totalorder %s16, 0
    %s19 = sadd.s32 %s18, 1
    %s20 = scalar_select %p17, %s18, %s19
    %p23 = pneg %p17
    %p24 = scmp.eq.s32.totalorder %s8, 1
    %p25 = por %p23, %p24
    %p26 = scmp.ne.s32.totalorder %s18, %s21
    %p27 = scmp.eq.s32.totalorder %s8, 0
    %p28 = por %p26, %p27
    %p29 = scmp.ne.s32.totalorder %s18, %s21
    %p30 = scmp.eq.s32.totalorder %s13, 1
    %p31 = por %p29, %p30
    %p32 = scmp.ne.s32.totalorder %s21, %s22
    %p33 = scmp.eq.s32.totalorder %s13, 0
    %p34 = por %p32, %p33
    %p35 = scmp.ne.s32.totalorder %s21, %s22
    %p36 = scmp.eq.s32.totalorder %s14, 1
    %p37 = por %p35, %p36
    %p39 = scmp.ne.s32.totalorder %s22, %s38
    %p40 = scmp.eq.s32.totalorder %s14, 0
    %p41 = por %p39, %p40
    %s43 = sadd.s32 %s42, 1
    %p46 = scmp.eq.s32.totalorder %s8, 1
    %p47 = scmp.ne.s32.totalorder %s42, %s44
    %p48 = scmp.eq.s32.totalorder %s8, 0
    %p49 = por %p47, %p48
    %p50 = scmp.ne.s32.totalorder %s42, %s44
    %p51 = scmp.eq.s32.totalorder %s13, 1
    %p52 = por %p50, %p51
    %p53 = scmp.ne.s32.totalorder %s44, %s45
    %p54 = scmp.eq.s32.totalorder %s13, 0
    %p55 = por %p53, %p54
    %p56 = scmp.ne.s32.totalorder %s44, %s45
    %p57 = scmp.eq.s32.totalorder %s14, 1
    %p58 = por %p56, %p57
    %p60 = scmp.ne.s32.totalorder %s45, %s59
    %p61 = scmp.eq.s32.totalorder %s14, 0
    %p62 = por %p60, %p61
    %s63 = ssub.s32 %s8, %s15
    %p64 = scmp.eq.s32.totalorder %s63, 0
    %s66 = sadd.s32 %s65, 1
    %s67 = scalar_select %p64, %s65, %s66
    %p70 = pneg %p64
    %p71 = scmp.eq.s32.totalorder %s8, 1
    %p72 = por %p70, %p71
    %p73 = scmp.ne.s32.totalorder %s65, %s68
    %p74 = scmp.eq.s32.totalorder %s8, 0
    %p75 = por %p73, %p74
    %p76 = scmp.ne.s32.totalorder %s65, %s68
    %p77 = scmp.eq.s32.totalorder %s13, 1
    %p78 = por %p76, %p77
    %p79 = scmp.ne.s32.totalorder %s68, %s69
    %p80 = scmp.eq.s32.totalorder %s13, 0
    %p81 = por %p79, %p80
    %p82 = scmp.ne.s32.totalorder %s68, %s69
    %p83 = scmp.eq.s32.totalorder %s14, 1
    %p84 = por %p82, %p83
    %p86 = scmp.ne.s32.totalorder %s69, %s85
    %p87 = scmp.eq.s32.totalorder %s14, 0
    %p88 = por %p86, %p87
    %p89 = scmp.le.s32.totalorder 1, %s8
    %p90 = scmp.lt.s32.totalorder %s8, 3
    %p91 = pnand %p89, %p90
    %p92 = pneg %p91
    // Predicated region
    $region9: #{reconstructor_forward.5} parent=5 // pred_check
      _
    $region10: #{reconstructor_forward.5} parent=5 // pred_check_branch
      %94 = sbr.rel (%p91) target = $region12
    $region11: #{reconstructor_forward.5} parent=5 // pred_region
      %s95 = ssub.s32 %s8, 1
      // Predicated region
      $region13: #{reconstructor_forward.5} parent=11 // pred_check
        %p96 = pneg %p55
      $region14: #{reconstructor_forward.5} parent=11 // pred_check_branch
        %98 = sbr.rel (%p96) target = $region16
      $region15: #{reconstructor_forward.5} parent=11 // pred_region
        _
      $region16: #{reconstructor_forward.5} parent=11 // pred_fallthru
        _
    $region12: #{reconstructor_forward.5} parent=5 // pred_fallthru
      _
    %p99 = scmp.lt.s32.totalorder %s8, 2
    // Predicated region
    $region17: #{reconstructor_forward.5} parent=5 // pred_check
      %p100 = pneg %p99
    $region18: #{reconstructor_forward.5} parent=5 // pred_check_branch
      %102 = sbr.rel (%p100) target = $region20
    $region19: #{reconstructor_forward.5} parent=5 // pred_region
      // Predicated region
      $region21: #{reconstructor_forward.5} parent=19 // pred_check
        %p103 = pneg %p28
      $region22: #{reconstructor_forward.5} parent=19 // pred_check_branch
        %105 = sbr.rel (%p103) target = $region24
      $region23: #{reconstructor_forward.5} parent=19 // pred_region
        %p106 = scmp.lt.s32.totalorder %s8, 1
        %s107 = scalar_select %p106, %s8, 1
        %s108 = smul.addr %s107, 16
        %s109 = smul.addr %s108, 4
        %s110 = scalar_lea.vmem %s0, %s109
      $region24: #{reconstructor_forward.5} parent=19 // pred_fallthru
        _
    $region20: #{reconstructor_forward.5} parent=5 // pred_fallthru
      _
    %p111 = scmp.le.s32.totalorder 1, %s8
    %p112 = scmp.lt.s32.totalorder %s8, 3
    %p113 = pnand %p111, %p112
    %p114 = pneg %p113
    // Predicated region
    $region25: #{reconstructor_forward.5} parent=5 // pred_check
      _
    $region26: #{reconstructor_forward.5} parent=5 // pred_check_branch
      %116 = sbr.rel (%p113) target = $region28
    $region27: #{reconstructor_forward.5} parent=5 // pred_region
      %s117 = ssub.s32 %s8, 1
      %p118 = scmp.lt.s32.totalorder %s13, 1
      %s119 = scalar_select %p118, %s13, 1
      %s120 = smul.addr %s119, 16
      %s121 = smul.addr %s120, 4
      %s122 = scalar_lea.vmem %s0, %s121
      %p123 = pneg %p34
      %p124 = pneg %p31
      %p125 = pneg %p55
      %p126 = pneg %p52
      %p127 = pneg %p81
      %p128 = pneg %p78
      %p129 = scmp.lt.s32.totalorder %s13, 1
      %s130 = scalar_select %p129, %s13, 1
      %s131 = smul.addr %s130, 8
      %s132 = smul.addr %s131, 4
      %s133 = scalar_lea.vmem %s2, %s132
      %p134 = scmp.lt.s32.totalorder %s13, 1
      %s135 = scalar_select %p134, %s13, 1
      %s136 = smul.addr %s135, 16
      %s137 = smul.addr %s136, 4
      %s138 = scalar_lea.vmem %s0, %s137
      %p139 = scmp.lt.s32.totalorder %s13, 1
      %s140 = scalar_select %p139, %s13, 1
      %s141 = smul.addr %s140, 8
      %s142 = smul.addr %s141, 4
      %s143 = scalar_lea.vmem %s2, %s142
      %v145 = vld [vmem:[%s1] sm:$0xf]
      %v146 = vld [vmem:[%s1 + $0x4] sm:$0xf]
      %v147 = vld [vmem:[%s1 + $0x8] sm:$0xf]
      %v148 = vld [vmem:[%s1 + $0xc] sm:$0xf]
      %v149 = vld [vmem:[%s1 + $0x10] sm:$0xf]
      %v150 = vld [vmem:[%s1 + $0x14] sm:$0xf]
      %v151 = vld [vmem:[%s1 + $0x18] sm:$0xf]
      %v152 = vld [vmem:[%s1 + $0x1c] sm:$0xf]
      %v153 = vld [vmem:[%s138] sm:$0xf]
      %v154 = vld [vmem:[%s138 + $0x4] sm:$0xf]
      %v155 = vld [vmem:[%s138 + $0x8] sm:$0xf]
      %v156 = vld [vmem:[%s138 + $0xc] sm:$0xf]
      %v157 = vld [vmem:[%s138 + $0x10] sm:$0xf]
      %v158 = vld [vmem:[%s138 + $0x14] sm:$0xf]
      %v159 = vld [vmem:[%s138 + $0x18] sm:$0xf]
      %v160 = vld [vmem:[%s138 + $0x1c] sm:$0xf]
      %v161 = vld [vmem:[%s138 + $0x20] sm:$0xf]
      %v162 = vld [vmem:[%s138 + $0x24] sm:$0xf]
      %v163 = vld [vmem:[%s138 + $0x28] sm:$0xf]
      %v164 = vld [vmem:[%s138 + $0x2c] sm:$0xf]
      %v165 = vld [vmem:[%s138 + $0x30] sm:$0xf]
      %v166 = vld [vmem:[%s138 + $0x34] sm:$0xf]
      %v167 = vld [vmem:[%s138 + $0x38] sm:$0xf]
      %v168 = vld [vmem:[%s138 + $0x3c] sm:$0xf]
      %v177 = vunpack.c.l.b16 %v145
      %v178 = vunpack.c.l.b16 %v146
      %v179 = vunpack.c.l.b16 %v147
      %v180 = vunpack.c.l.b16 %v148
      %v181 = vunpack.c.l.b16 %v149
      %v182 = vunpack.c.l.b16 %v150
      %v183 = vunpack.c.l.b16 %v151
      %v184 = vunpack.c.l.b16 %v152
      %v185 = vpack.c.b16 %v178, %v177
      %v186 = vpack.c.b16 %v180, %v179
      %v187 = vpack.c.b16 %v182, %v181
      %v188 = vpack.c.b16 %v184, %v183
      %v209 = vunpack.c.l.b16 %v153
      %v210 = vunpack.c.l.b16 %v154
      %v211 = vunpack.c.l.b16 %v155
      %v212 = vunpack.c.l.b16 %v156
      %v213 = vunpack.c.l.b16 %v157
      %v214 = vunpack.c.l.b16 %v158
      %v215 = vunpack.c.l.b16 %v159
      %v216 = vunpack.c.l.b16 %v160
      %v217 = vunpack.c.l.b16 %v161
      %v218 = vunpack.c.l.b16 %v162
      %v219 = vunpack.c.l.b16 %v163
      %v220 = vunpack.c.l.b16 %v164
      %v221 = vunpack.c.l.b16 %v165
      %v222 = vunpack.c.l.b16 %v166
      %v223 = vunpack.c.l.b16 %v167
      %v224 = vunpack.c.l.b16 %v168
      %v225 = vpack.c.b16 %v210, %v209
      %v226 = vpack.c.b16 %v212, %v211
      %v227 = vpack.c.b16 %v214, %v213
      %v228 = vpack.c.b16 %v216, %v215
      %v229 = vpack.c.b16 %v218, %v217
      %v230 = vpack.c.b16 %v220, %v219
      %v231 = vpack.c.b16 %v222, %v221
      %v232 = vpack.c.b16 %v224, %v223
      %241 = vmatprep.subr.bf16.mxu0 0
      %242 = vmatpush1.bf16.msra.mxu0 %v225
      %243 = vmatprep.subr.bf16.mxu0 0
      %244 = vmatpush1.bf16.msra.mxu0 %v226
      %245 = vmatprep.subr.bf16.mxu0 0
      %246 = vmatpush1.bf16.msra.mxu0 %v227
      %247 = vmatprep.subr.bf16.mxu0 0
      %248 = vmatpush1.bf16.msra.mxu0 %v228
      %249 = vmatprep.subr.bf16.mxu0 0
      %250 = vmatpush1.bf16.msra.mxu0 %v229
      %251 = vmatprep.subr.bf16.mxu0 0
      %252 = vmatpush1.bf16.msra.mxu0 %v230
      %253 = vmatprep.subr.bf16.mxu0 0
      %254 = vmatpush1.bf16.msra.mxu0 %v231
      %255 = vmatprep.subr.bf16.mxu0 0
      %256 = vmatpush1.bf16.msra.mxu0 %v232
      %257 = vmatprep.subr.bf16.mxu0 0
      %258 = vmatpush1.bf16.msra.mxu0 0
      %259 = vmatprep.subr.bf16.mxu0 0
      %260 = vmatpush1.bf16.msra.mxu0 0
      %261 = vmatprep.subr.bf16.mxu0 0
      %262 = vmatpush1.bf16.msra.mxu0 0
      %263 = vmatprep.subr.bf16.mxu0 0
      %264 = vmatpush1.bf16.msra.mxu0 0
      %265 = vmatprep.subr.bf16.mxu0 0
      %266 = vmatpush1.bf16.msra.mxu0 0
      %267 = vmatprep.subr.bf16.mxu0 0
      %268 = vmatpush1.bf16.msra.mxu0 0
      %269 = vmatprep.subr.bf16.mxu0 0
      %270 = vmatpush1.bf16.msra.mxu0 0
      %271 = vmatprep.subr.bf16.mxu0 0
      %272 = vmatpush1.bf16.msra.mxu0 0
      %273 = vmatprep.mubr.bf16.mxu0 0
      %274 = vmatmul.mubr.bf16.gmra.mrb[0].mxu0 %v185
      %v275 = vpop.f32.mrb[0].mxu0
      %v276 = vadd.f32 0.0, %v275
      %v277 = vpop.f32.mrb[0].mxu0
      %v278 = vpop.f32.mrb[0].mxu0
      %v279 = vadd.f32 0.0, %v278
      %v280 = vpop.f32.mrb[0].mxu0
      %281 = vmatprep.mubr.bf16.mxu0 0
      %282 = vmatmul.mubr.bf16.gmra.mrb[0].mxu0 %v186
      %v283 = vpop.f32.mrb[0].mxu0
      %v284 = vadd.f32 0.0, %v283
      %v285 = vpop.f32.mrb[0].mxu0
      %v286 = vpop.f32.mrb[0].mxu0
      %v287 = vadd.f32 0.0, %v286
      %v288 = vpop.f32.mrb[0].mxu0
      %289 = vmatprep.mubr.bf16.mxu0 0
      %290 = vmatmul.mubr.bf16.gmra.mrb[0].mxu0 %v187
      %v291 = vpop.f32.mrb[0].mxu0
      %v292 = vadd.f32 0.0, %v291
      %v293 = vpop.f32.mrb[0].mxu0
      %v294 = vpop.f32.mrb[0].mxu0
      %v295 = vadd.f32 0.0, %v294
      %v296 = vpop.f32.mrb[0].mxu0
      %297 = vmatprep.mubr.bf16.mxu0 0
      %298 = vmatmul.mubr.bf16.gmra.mrb[0].mxu0 %v188
      %v299 = vpop.f32.mrb[0].mxu0
      %v300 = vadd.f32 0.0, %v299
      %v301 = vpop.f32.mrb[0].mxu0
      %v302 = vpop.f32.mrb[0].mxu0
      %v303 = vadd.f32 0.0, %v302
      %v304 = vpop.f32.mrb[0].mxu0
      %305 = vdwg.mxu0
      %306 = vadd.xlane.f32.xlu0 %v276
      %v307 = vpop.xlane.xlu0 %306
      %308 = vadd.xlane.f32.xlu0 %v279
      %v309 = vpop.xlane.xlu0 %308
      %v310 = vadd.f32 %v307, 0.0
      %v311 = vadd.f32 %v309, 0.0
      %312 = vadd.xlane.f32.xlu0 %v284
      %v313 = vpop.xlane.xlu0 %312
      %314 = vadd.xlane.f32.xlu0 %v287
      %v315 = vpop.xlane.xlu0 %314
      %v316 = vadd.f32 %v310, %v313
      %v317 = vadd.f32 %v311, %v315
      %318 = vadd.xlane.f32.xlu0 %v292
      %v319 = vpop.xlane.xlu0 %318
      %320 = vadd.xlane.f32.xlu0 %v295
      %v321 = vpop.xlane.xlu0 %320
      %v322 = vadd.f32 %v316, %v319
      %v323 = vadd.f32 %v317, %v321
      %324 = vadd.xlane.f32.xlu0 %v300
      %v325 = vpop.xlane.xlu0 %324
      %326 = vadd.xlane.f32.xlu0 %v303
      %v327 = vpop.xlane.xlu0 %326
      %v328 = vadd.f32 %v322, %v325
      %v329 = vadd.f32 %v323, %v327
      %v330 = vmul.f32 %v276, %v276
      %v331 = vmul.f32 %v279, %v279
      %332 = vadd.xlane.f32.xlu0 %v330
      %v333 = vpop.xlane.xlu0 %332
      %334 = vadd.xlane.f32.xlu0 %v331
      %v335 = vpop.xlane.xlu0 %334
      %v336 = vadd.f32 %v333, 0.0
      %v337 = vadd.f32 %v335, 0.0
      %v338 = vmul.f32 %v284, %v284
      %v339 = vmul.f32 %v287, %v287
      %340 = vadd.xlane.f32.xlu0 %v338
      %v341 = vpop.xlane.xlu0 %340
      %342 = vadd.xlane.f32.xlu0 %v339
      %v343 = vpop.xlane.xlu0 %342
      %v344 = vadd.f32 %v336, %v341
      %v345 = vadd.f32 %v337, %v343
      %v346 = vmul.f32 %v292, %v292
      %v347 = vmul.f32 %v295, %v295
      %348 = vadd.xlane.f32.xlu0 %v346
      %v349 = vpop.xlane.xlu0 %348
      %350 = vadd.xlane.f32.xlu0 %v347
      %v351 = vpop.xlane.xlu0 %350
      %v352 = vadd.f32 %v344, %v349
      %v353 = vadd.f32 %v345, %v351
      %v354 = vmul.f32 %v300, %v300
      %v355 = vmul.f32 %v303, %v303
      %356 = vadd.xlane.f32.xlu0 %v354
      %v357 = vpop.xlane.xlu0 %356
      %358 = vadd.xlane.f32.xlu0 %v355
      %v359 = vpop.xlane.xlu0 %358
      %v360 = vadd.f32 %v352, %v357
      %v361 = vadd.f32 %v353, %v359
      %v362 = vmul.f32 %v328, 0.0051020407
      %v363 = vmul.f32 %v329, 0.0051020407
      %v364 = vmul.f32 %v360, 0.0051020407
      %v365 = vmul.f32 %v361, 0.0051020407
      %v366 = vmul.f32 %v362, %v362
      %v367 = vmul.f32 %v363, %v363
      %v368 = vsub.f32 %v364, %v366
      %v369 = vsub.f32 %v365, %v367
      %v370 = vmax.f32 %v368, 0.0
      %v371 = vmax.f32 %v369, 0.0
      %v372 = vadd.f32 %v370, 1e-05
      %v373 = vadd.f32 %v371, 1e-05
      %v374 = vrsqrt.pop %v372
      %v375 = vrsqrt.pop %v373
      %v376 = vsub.f32 %v276, %v362
      %v377 = vsub.f32 %v279, %v363
      %v378 = vmul.f32 %v376, %v374
      %v379 = vmul.f32 %v377, %v375
      %vm380 = vcmp.ge.f32.partialorder %v378, 0.0
      %vm381 = vcmp.ge.f32.partialorder %v379, 0.0
      %v382 = vmul.f32 %v378, 0.2
      %v383 = vmul.f32 %v379, 0.2
      %v384 = vsel %vm380, %v378, %v382
      %v385 = vsel %vm381, %v379, %v383
      %v386 = vsub.f32 %v284, %v362
      %v387 = vsub.f32 %v287, %v363
      %v388 = vmul.f32 %v386, %v374
      %v389 = vmul.f32 %v387, %v375
      %vm390 = vcmp.ge.f32.partialorder %v388, 0.0
      %vm391 = vcmp.ge.f32.partialorder %v389, 0.0
      %v392 = vmul.f32 %v388, 0.2
      %v393 = vmul.f32 %v389, 0.2
      %v394 = vsel %vm390, %v388, %v392
      %v395 = vsel %vm391, %v389, %v393
      %v396 = vsub.f32 %v292, %v362
      %v397 = vsub.f32 %v295, %v363
      %v398 = vmul.f32 %v396, %v374
      %v399 = vmul.f32 %v397, %v375
      %vm400 = vcmp.ge.f32.partialorder %v398, 0.0
      %vm401 = vcmp.ge.f32.partialorder %v399, 0.0
      %v402 = vmul.f32 %v398, 0.2
      %v403 = vmul.f32 %v399, 0.2
      %v404 = vsel %vm400, %v398, %v402
      %v405 = vsel %vm401, %v399, %v403
      %v406 = vsub.f32 %v300, %v362
      %v407 = vsub.f32 %v303, %v363
      %v408 = vmul.f32 %v406, %v374
      %v409 = vmul.f32 %v407, %v375
      %vm410 = vcmp.ge.f32.partialorder %v408, 0.0
      %vm411 = vcmp.ge.f32.partialorder %v409, 0.0
      %v412 = vmul.f32 %v408, 0.2
      %v413 = vmul.f32 %v409, 0.2
      %v414 = vsel %vm410, %v408, %v412
      %v415 = vsel %vm411, %v409, %v413
      %v416 = vpack.c.bf16 %v385, %v384
      %v417 = vpack.c.bf16 %v395, %v394
      %v418 = vpack.c.bf16 %v405, %v404
      %v419 = vpack.c.bf16 %v415, %v414
      %v424 = vunpack.c.l.b16 %v416
      %v425 = vunpack.c.h.b16 %v416
      %v426 = vunpack.c.l.b16 %v417
      %v427 = vunpack.c.h.b16 %v417
      %v428 = vunpack.c.l.b16 %v418
      %v429 = vunpack.c.h.b16 %v418
      %v430 = vunpack.c.l.b16 %v419
      %v431 = vunpack.c.h.b16 %v419
      %v432 = vpack.c.b16 %v424, %v424
      %v433 = vpack.c.b16 %v425, %v425
      %v434 = vpack.c.b16 %v426, %v426
      %v435 = vpack.c.b16 %v427, %v427
      %v436 = vpack.c.b16 %v428, %v428
      %v437 = vpack.c.b16 %v429, %v429
      %v438 = vpack.c.b16 %v430, %v430
      %v439 = vpack.c.b16 %v431, %v431
      %448 = vst [vmem:[%s143] sm:$0xf] %v432
      %449 = vst [vmem:[%s143 + $0x4] sm:$0xf] %v433
      %450 = vst [vmem:[%s143 + $0x8] sm:$0xf] %v434
      %451 = vst [vmem:[%s143 + $0xc] sm:$0xf] %v435
      %452 = vst [vmem:[%s143 + $0x10] sm:$0xf] %v436
      %453 = vst [vmem:[%s143 + $0x14] sm:$0xf] %v437
      %454 = vst [vmem:[%s143 + $0x18] sm:$0xf] %v438
      %455 = vst [vmem:[%s143 + $0x1c] sm:$0xf] %v439
      %p456 = scmp.lt.s32.totalorder %s13, 1
      %s457 = scalar_select %p456, %s13, 1
      %s458 = smul.addr %s457, 8
      %s459 = smul.addr %s458, 4
      %s460 = scalar_lea.vmem %s2, %s459
      // Predicated region
      $region29: #{reconstructor_forward.5} parent=27 // pred_check
        %p461 = pneg %p78
      $region30: #{reconstructor_forward.5} parent=27 // pred_check_branch
        %463 = sbr.rel (%p461) target = $region32
      $region31: #{reconstructor_forward.5} parent=27 // pred_region
        _
      $region32: #{reconstructor_forward.5} parent=27 // pred_fallthru
        _
    $region28: #{reconstructor_forward.5} parent=5 // pred_fallthru
      _
    %p464 = scmp.le.s32.totalorder 2, %s8
    // Predicated region
    $region33: #{reconstructor_forward.5} parent=5 // pred_check
      %p465 = pneg %p464
    $region34: #{reconstructor_forward.5} parent=5 // pred_check_branch
      %467 = sbr.rel (%p465) target = $region36
    $region35: #{reconstructor_forward.5} parent=5 // pred_region
      %s468 = ssub.s32 %s8, 2
      // Predicated region
      $region37: #{reconstructor_forward.5} parent=35 // pred_check
        %p469 = pneg %p84
      $region38: #{reconstructor_forward.5} parent=35 // pred_check_branch
        %471 = sbr.rel (%p469) target = $region40
      $region39: #{reconstructor_forward.5} parent=35 // pred_region
        %p472 = scmp.lt.s32.totalorder %s14, 1
        %s473 = scalar_select %p472, %s14, 1
        %s474 = smul.addr %s473, 8
        %s475 = smul.addr %s474, 4
        %s476 = scalar_lea.vmem %s2, %s475
      $region40: #{reconstructor_forward.5} parent=35 // pred_fallthru
        _
    $region36: #{reconstructor_forward.5} parent=5 // pred_fallthru
      _
  $region6: #{reconstructor_forward.5} parent=0 // loop_footer
    %s12 = sadd.s32 1, %s8
  $region7: #{reconstructor_forward.5} parent=0 // loop_footer_branch
    %7 = sbr.rel target = $region3
  $region8: #{reconstructor_forward.5} parent=0 // loop_exit
    _

// kernel: reconstructor_forward.6
$region0: #{reconstructor_forward.6}
  #allocation0 [shape = 'u32[]', space=smem, size = 0x4, offset = 0x4, fixed_abs, tag = 'smem constant byte address 0x4 - core index']
  #allocation1 [shape = 'u32[144,128]{1,0:T(1,128)}', space=vmem, size = 0x12000, scoped, tag = 'internal scratch']
  %s0 = inlined_call_operand.vmem [shape: bf16[2,64,256], index: 0, kind: input, shape index: {}]
  %s1 = inlined_call_operand.vmem [shape: bf16[32,64], index: 1, kind: input, shape index: {}]
  %s2 = inlined_call_operand.vmem [shape: bf16[2,32,256], index: 2, kind: output, shape index: {}]
  %s3 = sld [smem:[#allocation0]]
  $region41: #{reconstructor_forward.6} parent=0
    _
  %s5 = ssub.s32 1, %s3
  %s6 = scalar_select 0, %s5, %s3
  loop: start=0, step=1, limit=4
  $region2: #{reconstructor_forward.6} parent=0 // loop_pre_header
    _
  $region3: #{reconstructor_forward.6} parent=0 // loop_header
    %s8 = sphi 0, %s12
    %p9 = scmp.ge.s32.totalorder %s8, 4
    %s18 = sphi 0, %s20
    %s21 = sphi 0, %s18
    %s22 = sphi 0, %s21
    %s38 = sphi 0, %s22
    %s42 = sphi 0, %s42
    %s44 = sphi 0, %s42
    %s45 = sphi 0, %s44
    %s59 = sphi 0, %s45
    %s65 = sphi 0, %s67
    %s68 = sphi 0, %s65
    %s69 = sphi 0, %s68
    %s85 = sphi 0, %s69
  $region4: #{reconstructor_forward.6} parent=0 // loop_header_branch
    %11 = sbr.rel (%p9) target = $region8
  $region5: #{reconstructor_forward.6} parent=0 // loop_body
    %s13 = ssub.s32 %s8, 1
    %s14 = ssub.s32 %s8, 2
    %s15 = sadd.s32 %s8, 1
    %s16 = ssub.s32 %s8, %s15
    %p17 = scmp.eq.s32.totalorder %s16, 0
    %s19 = sadd.s32 %s18, 1
    %s20 = scalar_select %p17, %s18, %s19
    %p23 = pneg %p17
    %p24 = scmp.eq.s32.totalorder %s8, 1
    %p25 = por %p23, %p24
    %p26 = scmp.ne.s32.totalorder %s18, %s21
    %p27 = scmp.eq.s32.totalorder %s8, 0
    %p28 = por %p26, %p27
    %p29 = scmp.ne.s32.totalorder %s18, %s21
    %p30 = scmp.eq.s32.totalorder %s13, 1
    %p31 = por %p29, %p30
    %p32 = scmp.ne.s32.totalorder %s21, %s22
    %p33 = scmp.eq.s32.totalorder %s13, 0
    %p34 = por %p32, %p33
    %p35 = scmp.ne.s32.totalorder %s21, %s22
    %p36 = scmp.eq.s32.totalorder %s14, 1
    %p37 = por %p35, %p36
    %p39 = scmp.ne.s32.totalorder %s22, %s38
    %p40 = scmp.eq.s32.totalorder %s14, 0
    %p41 = por %p39, %p40
    %s43 = sadd.s32 %s42, 1
    %p46 = scmp.eq.s32.totalorder %s8, 1
    %p47 = scmp.ne.s32.totalorder %s42, %s44
    %p48 = scmp.eq.s32.totalorder %s8, 0
    %p49 = por %p47, %p48
    %p50 = scmp.ne.s32.totalorder %s42, %s44
    %p51 = scmp.eq.s32.totalorder %s13, 1
    %p52 = por %p50, %p51
    %p53 = scmp.ne.s32.totalorder %s44, %s45
    %p54 = scmp.eq.s32.totalorder %s13, 0
    %p55 = por %p53, %p54
    %p56 = scmp.ne.s32.totalorder %s44, %s45
    %p57 = scmp.eq.s32.totalorder %s14, 1
    %p58 = por %p56, %p57
    %p60 = scmp.ne.s32.totalorder %s45, %s59
    %p61 = scmp.eq.s32.totalorder %s14, 0
    %p62 = por %p60, %p61
    %s63 = ssub.s32 %s8, %s15
    %p64 = scmp.eq.s32.totalorder %s63, 0
    %s66 = sadd.s32 %s65, 1
    %s67 = scalar_select %p64, %s65, %s66
    %p70 = pneg %p64
    %p71 = scmp.eq.s32.totalorder %s8, 1
    %p72 = por %p70, %p71
    %p73 = scmp.ne.s32.totalorder %s65, %s68
    %p74 = scmp.eq.s32.totalorder %s8, 0
    %p75 = por %p73, %p74
    %p76 = scmp.ne.s32.totalorder %s65, %s68
    %p77 = scmp.eq.s32.totalorder %s13, 1
    %p78 = por %p76, %p77
    %p79 = scmp.ne.s32.totalorder %s68, %s69
    %p80 = scmp.eq.s32.totalorder %s13, 0
    %p81 = por %p79, %p80
    %p82 = scmp.ne.s32.totalorder %s68, %s69
    %p83 = scmp.eq.s32.totalorder %s14, 1
    %p84 = por %p82, %p83
    %p86 = scmp.ne.s32.totalorder %s69, %s85
    %p87 = scmp.eq.s32.totalorder %s14, 0
    %p88 = por %p86, %p87
    %p89 = scmp.le.s32.totalorder 1, %s8
    %p90 = scmp.lt.s32.totalorder %s8, 3
    %p91 = pnand %p89, %p90
    %p92 = pneg %p91
    // Predicated region
    $region9: #{reconstructor_forward.6} parent=5 // pred_check
      _
    $region10: #{reconstructor_forward.6} parent=5 // pred_check_branch
      %94 = sbr.rel (%p91) target = $region12
    $region11: #{reconstructor_forward.6} parent=5 // pred_region
      %s95 = ssub.s32 %s8, 1
      // Predicated region
      $region13: #{reconstructor_forward.6} parent=11 // pred_check
        %p96 = pneg %p55
      $region14: #{reconstructor_forward.6} parent=11 // pred_check_branch
        %98 = sbr.rel (%p96) target = $region16
      $region15: #{reconstructor_forward.6} parent=11 // pred_region
        _
      $region16: #{reconstructor_forward.6} parent=11 // pred_fallthru
        _
    $region12: #{reconstructor_forward.6} parent=5 // pred_fallthru
      _
    %p99 = scmp.lt.s32.totalorder %s8, 2
    // Predicated region
    $region17: #{reconstructor_forward.6} parent=5 // pred_check
      %p100 = pneg %p99
    $region18: #{reconstructor_forward.6} parent=5 // pred_check_branch
      %102 = sbr.rel (%p100) target = $region20
    $region19: #{reconstructor_forward.6} parent=5 // pred_region
      // Predicated region
      $region21: #{reconstructor_forward.6} parent=19 // pred_check
        %p103 = pneg %p28
      $region22: #{reconstructor_forward.6} parent=19 // pred_check_branch
        %105 = sbr.rel (%p103) target = $region24
      $region23: #{reconstructor_forward.6} parent=19 // pred_region
        %p106 = scmp.lt.s32.totalorder %s8, 1
        %s107 = scalar_select %p106, %s8, 1
        %s108 = smul.addr %s107, 16
        %s109 = smul.addr %s108, 4
        %s110 = scalar_lea.vmem %s0, %s109
      $region24: #{reconstructor_forward.6} parent=19 // pred_fallthru
        _
    $region20: #{reconstructor_forward.6} parent=5 // pred_fallthru
      _
    %p111 = scmp.le.s32.totalorder 1, %s8
    %p112 = scmp.lt.s32.totalorder %s8, 3
    %p113 = pnand %p111, %p112
    %p114 = pneg %p113
    // Predicated region
    $region25: #{reconstructor_forward.6} parent=5 // pred_check
      _
    $region26: #{reconstructor_forward.6} parent=5 // pred_check_branch
      %116 = sbr.rel (%p113) target = $region28
    $region27: #{reconstructor_forward.6} parent=5 // pred_region
      %s117 = ssub.s32 %s8, 1
      %p118 = scmp.lt.s32.totalorder %s13, 1
      %s119 = scalar_select %p118, %s13, 1
      %s120 = smul.addr %s119, 16
      %s121 = smul.addr %s120, 4
      %s122 = scalar_lea.vmem %s0, %s121
      %p123 = pneg %p34
      %p124 = pneg %p31
      %p125 = pneg %p55
      %p126 = pneg %p52
      %p127 = pneg %p81
      %p128 = pneg %p78
      %p129 = scmp.lt.s32.totalorder %s13, 1
      %s130 = scalar_select %p129, %s13, 1
      %s131 = smul.addr %s130, 8
      %s132 = smul.addr %s131, 4
      %s133 = scalar_lea.vmem %s2, %s132
      %p134 = scmp.lt.s32.totalorder %s13, 1
      %s135 = scalar_select %p134, %s13, 1
      %s136 = smul.addr %s135, 16
      %s137 = smul.addr %s136, 4
      %s138 = scalar_lea.vmem %s0, %s137
      %p139 = scmp.lt.s32.totalorder %s13, 1
      %s140 = scalar_select %p139, %s13, 1
      %s141 = smul.addr %s140, 8
      %s142 = smul.addr %s141, 4
      %s143 = scalar_lea.vmem %s2, %s142
      %v145 = vld [vmem:[%s1] sm:$0xf]
      %v146 = vld [vmem:[%s1 + $0x4] sm:$0xf]
      %v147 = vld [vmem:[%s1 + $0x8] sm:$0xf]
      %v148 = vld [vmem:[%s1 + $0xc] sm:$0xf]
      %v149 = vld [vmem:[%s138] sm:$0xff]
      %v150 = vld [vmem:[%s138 + $0x8] sm:$0xff]
      %v151 = vld [vmem:[%s138 + $0x10] sm:$0xff]
      %v152 = vld [vmem:[%s138 + $0x18] sm:$0xff]
      %v153 = vld [vmem:[%s138 + $0x20] sm:$0xff]
      %v154 = vld [vmem:[%s138 + $0x28] sm:$0xff]
      %v155 = vld [vmem:[%s138 + $0x30] sm:$0xff]
      %v156 = vld [vmem:[%s138 + $0x38] sm:$0xff]
      %v161 = vunpack.c.l.b16 %v145
      %v162 = vunpack.c.l.b16 %v146
      %v163 = vunpack.c.l.b16 %v147
      %v164 = vunpack.c.l.b16 %v148
      %v165 = vpack.c.b16 %v162, %v161
      %v166 = vpack.c.b16 %v164, %v163
      %v175 = vunpack.c.l.b16 %v149
      %v176 = vunpack.c.h.b16 %v149
      %v177 = vunpack.c.l.b16 %v150
      %v178 = vunpack.c.h.b16 %v150
      %v179 = vunpack.c.l.b16 %v151
      %v180 = vunpack.c.h.b16 %v151
      %v181 = vunpack.c.l.b16 %v152
      %v182 = vunpack.c.h.b16 %v152
      %v183 = vunpack.c.l.b16 %v153
      %v184 = vunpack.c.h.b16 %v153
      %v185 = vunpack.c.l.b16 %v154
      %v186 = vunpack.c.h.b16 %v154
      %v187 = vunpack.c.l.b16 %v155
      %v188 = vunpack.c.h.b16 %v155
      %v189 = vunpack.c.l.b16 %v156
      %v190 = vunpack.c.h.b16 %v156
      %v191 = vpack.c.b16 %v177, %v175
      %v192 = vpack.c.b16 %v178, %v176
      %v193 = vpack.c.b16 %v181, %v179
      %v194 = vpack.c.b16 %v182, %v180
      %v195 = vpack.c.b16 %v185, %v183
      %v196 = vpack.c.b16 %v186, %v184
      %v197 = vpack.c.b16 %v189, %v187
      %v198 = vpack.c.b16 %v190, %v188
      %vm207 = vcmask 523264
      %v209 = vsel %vm207, %v165, 0
      %v212 = vsel %vm207, %v166, 0
      %214 = vmatprep.subr.bf16.mxu0 %v192
      %215 = vmatpush1.bf16.msra.mxu0 %v191
      %216 = vmatprep.subr.bf16.mxu0 %v194
      %217 = vmatpush1.bf16.msra.mxu0 %v193
      %218 = vmatprep.subr.bf16.mxu0 %v196
      %219 = vmatpush1.bf16.msra.mxu0 %v195
      %220 = vmatprep.subr.bf16.mxu0 %v198
      %221 = vmatpush1.bf16.msra.mxu0 %v197
      %222 = vmatprep.subr.bf16.mxu0 0
      %223 = vmatpush1.bf16.msra.mxu0 0
      %224 = vmatprep.subr.bf16.mxu0 0
      %225 = vmatpush1.bf16.msra.mxu0 0
      %226 = vmatprep.subr.bf16.mxu0 0
      %227 = vmatpush1.bf16.msra.mxu0 0
      %228 = vmatprep.subr.bf16.mxu0 0
      %229 = vmatpush1.bf16.msra.mxu0 0
      %230 = vmatprep.subr.bf16.mxu0 0
      %231 = vmatpush1.bf16.msra.mxu0 0
      %232 = vmatprep.subr.bf16.mxu0 0
      %233 = vmatpush1.bf16.msra.mxu0 0
      %234 = vmatprep.subr.bf16.mxu0 0
      %235 = vmatpush1.bf16.msra.mxu0 0
      %236 = vmatprep.subr.bf16.mxu0 0
      %237 = vmatpush1.bf16.msra.mxu0 0
      %238 = vmatprep.subr.bf16.mxu0 0
      %239 = vmatpush1.bf16.msra.mxu0 0
      %240 = vmatprep.subr.bf16.mxu0 0
      %241 = vmatpush1.bf16.msra.mxu0 0
      %242 = vmatprep.subr.bf16.mxu0 0
      %243 = vmatpush1.bf16.msra.mxu0 0
      %244 = vmatprep.subr.bf16.mxu0 0
      %245 = vmatpush1.bf16.msra.mxu0 0
      %246 = vmatprep.mubr.bf16.mxu0 0
      %247 = vmatmul.mubr.bf16.gmra.mrb[0].mxu0 %v209
      %v248 = vpop.f32.mrb[0].mxu0
      %v249 = vadd.f32 0.0, %v248
      %v250 = vpop.f32.mrb[0].mxu0
      %v251 = vadd.f32 0.0, %v250
      %v252 = vpop.f32.mrb[0].mxu0
      %v253 = vadd.f32 0.0, %v252
      %v254 = vpop.f32.mrb[0].mxu0
      %v255 = vadd.f32 0.0, %v254
      %256 = vmatprep.mubr.bf16.mxu0 0
      %257 = vmatmul.mubr.bf16.gmra.mrb[0].mxu0 %v212
      %v258 = vpop.f32.mrb[0].mxu0
      %v259 = vadd.f32 0.0, %v258
      %v260 = vpop.f32.mrb[0].mxu0
      %v261 = vadd.f32 0.0, %v260
      %v262 = vpop.f32.mrb[0].mxu0
      %v263 = vadd.f32 0.0, %v262
      %v264 = vpop.f32.mrb[0].mxu0
      %v265 = vadd.f32 0.0, %v264
      %266 = vdwg.mxu0
      %v267 = vadd.f32 %v249, %v251
      %268 = vadd.xlane.f32.xlu0 %v267
      %v269 = vpop.xlane.xlu0 %268
      %v270 = vadd.f32 %v269, 0.0
      %v271 = vadd.f32 %v253, %v255
      %272 = vadd.xlane.f32.xlu0 %v271
      %v273 = vpop.xlane.xlu0 %272
      %v274 = vadd.f32 %v270, %v273
      %v275 = vadd.f32 %v259, %v261
      %276 = vadd.xlane.f32.xlu0 %v275
      %v277 = vpop.xlane.xlu0 %276
      %v278 = vadd.f32 %v274, %v277
      %v279 = vadd.f32 %v263, %v265
      %280 = vadd.xlane.f32.xlu0 %v279
      %v281 = vpop.xlane.xlu0 %280
      %v282 = vadd.f32 %v278, %v281
      %v283 = vmul.f32 %v249, %v249
      %v284 = vmul.f32 %v251, %v251
      %v285 = vadd.f32 %v283, %v284
      %286 = vadd.xlane.f32.xlu0 %v285
      %v287 = vpop.xlane.xlu0 %286
      %v288 = vadd.f32 %v287, 0.0
      %v289 = vmul.f32 %v253, %v253
      %v290 = vmul.f32 %v255, %v255
      %v291 = vadd.f32 %v289, %v290
      %292 = vadd.xlane.f32.xlu0 %v291
      %v293 = vpop.xlane.xlu0 %292
      %v294 = vadd.f32 %v288, %v293
      %v295 = vmul.f32 %v259, %v259
      %v296 = vmul.f32 %v261, %v261
      %v297 = vadd.f32 %v295, %v296
      %298 = vadd.xlane.f32.xlu0 %v297
      %v299 = vpop.xlane.xlu0 %298
      %v300 = vadd.f32 %v294, %v299
      %v301 = vmul.f32 %v263, %v263
      %v302 = vmul.f32 %v265, %v265
      %v303 = vadd.f32 %v301, %v302
      %304 = vadd.xlane.f32.xlu0 %v303
      %v305 = vpop.xlane.xlu0 %304
      %v306 = vadd.f32 %v300, %v305
      %v307 = vmul.f32 %v282, 0.0011111111
      %v308 = vmul.f32 %v306, 0.0011111111
      %v309 = vmul.f32 %v307, %v307
      %v310 = vsub.f32 %v308, %v309
      %v311 = vmax.f32 %v310, 0.0
      %v312 = vadd.f32 %v311, 1e-05
      %v313 = vrsqrt.pop %v312
      %v314 = vsub.f32 %v249, %v307
      %v315 = vsub.f32 %v251, %v307
      %v316 = vmul.f32 %v314, %v313
      %v317 = vmul.f32 %v315, %v313
      %vm318 = vcmp.ge.f32.partialorder %v316, 0.0
      %vm319 = vcmp.ge.f32.partialorder %v317, 0.0
      %v320 = vmul.f32 %v316, 0.2
      %v321 = vmul.f32 %v317, 0.2
      %v322 = vsel %vm318, %v316, %v320
      %v323 = vsel %vm319, %v317, %v321
      %v324 = vsub.f32 %v253, %v307
      %v325 = vsub.f32 %v255, %v307
      %v326 = vmul.f32 %v324, %v313
      %v327 = vmul.f32 %v325, %v313
      %vm328 = vcmp.ge.f32.partialorder %v326, 0.0
      %vm329 = vcmp.ge.f32.partialorder %v327, 0.0
      %v330 = vmul.f32 %v326, 0.2
      %v331 = vmul.f32 %v327, 0.2
      %v332 = vsel %vm328, %v326, %v330
      %v333 = vsel %vm329, %v327, %v331
      %v334 = vsub.f32 %v259, %v307
      %v335 = vsub.f32 %v261, %v307
      %v336 = vmul.f32 %v334, %v313
      %v337 = vmul.f32 %v335, %v313
      %vm338 = vcmp.ge.f32.partialorder %v336, 0.0
      %vm339 = vcmp.ge.f32.partialorder %v337, 0.0
      %v340 = vmul.f32 %v336, 0.2
      %v341 = vmul.f32 %v337, 0.2
      %v342 = vsel %vm338, %v336, %v340
      %v343 = vsel %vm339, %v337, %v341
      %v344 = vsub.f32 %v263, %v307
      %v345 = vsub.f32 %v265, %v307
      %v346 = vmul.f32 %v344, %v313
      %v347 = vmul.f32 %v345, %v313
      %vm348 = vcmp.ge.f32.partialorder %v346, 0.0
      %vm349 = vcmp.ge.f32.partialorder %v347, 0.0
      %v350 = vmul.f32 %v346, 0.2
      %v351 = vmul.f32 %v347, 0.2
      %v352 = vsel %vm348, %v346, %v350
      %v353 = vsel %vm349, %v347, %v351
      %v354 = vpack.c.bf16 %v332, %v322
      %v355 = vpack.c.bf16 %v333, %v323
      %v356 = vpack.c.bf16 %v352, %v342
      %v357 = vpack.c.bf16 %v353, %v343
      %v362 = vunpack.c.l.b16 %v354
      %v363 = vunpack.c.l.b16 %v355
      %v364 = vunpack.c.h.b16 %v354
      %v365 = vunpack.c.h.b16 %v355
      %v366 = vunpack.c.l.b16 %v356
      %v367 = vunpack.c.l.b16 %v357
      %v368 = vunpack.c.h.b16 %v356
      %v369 = vunpack.c.h.b16 %v357
      %v370 = vpack.c.b16 %v363, %v362
      %v371 = vpack.c.b16 %v365, %v364
      %v372 = vpack.c.b16 %v367, %v366
      %v373 = vpack.c.b16 %v369, %v368
      %378 = vst [vmem:[%s143] sm:$0xff] %v370
      %379 = vst [vmem:[%s143 + $0x8] sm:$0xff] %v371
      %380 = vst [vmem:[%s143 + $0x10] sm:$0xff] %v372
      %381 = vst [vmem:[%s143 + $0x18] sm:$0xff] %v373
      %p382 = scmp.lt.s32.totalorder %s13, 1
      %s383 = scalar_select %p382, %s13, 1
      %s384 = smul.addr %s383, 8
      %s385 = smul.addr %s384, 4
      %s386 = scalar_lea.vmem %s2, %s385
      // Predicated region
      $region29: #{reconstructor_forward.6} parent=27 // pred_check
        %p387 = pneg %p78
      $region30: #{reconstructor_forward.6} parent=27 // pred_check_branch
        %389 = sbr.rel (%p387) target = $region32
      $region31: #{reconstructor_forward.6} parent=27 // pred_region
        _
      $region32: #{reconstructor_forward.6} parent=27 // pred_fallthru
        _
    $region28: #{reconstructor_forward.6} parent=5 // pred_fallthru
      _
    %p390 = scmp.le.s32.totalorder 2, %s8
    // Predicated region
    $region33: #{reconstructor_forward.6} parent=5 // pred_check
      %p391 = pneg %p390
    $region34: #{reconstructor_forward.6} parent=5 // pred_check_branch
      %393 = sbr.rel (%p391) target = $region36
    $region35: #{reconstructor_forward.6} parent=5 // pred_region
      %s394 = ssub.s32 %s8, 2
      // Predicated region
      $region37: #{reconstructor_forward.6} parent=35 // pred_check
        %p395 = pneg %p84
      $region38: #{reconstructor_forward.6} parent=35 // pred_check_branch
        %397 = sbr.rel (%p395) target = $region40
      $region39: #{reconstructor_forward.6} parent=35 // pred_region
        %p398 = scmp.lt.s32.totalorder %s14, 1
        %s399 = scalar_select %p398, %s14, 1
        %s400 = smul.addr %s399, 8
        %s401 = smul.addr %s400, 4
        %s402 = scalar_lea.vmem %s2, %s401
      $region40: #{reconstructor_forward.6} parent=35 // pred_fallthru
        _
    $region36: #{reconstructor_forward.6} parent=5 // pred_fallthru
      _
  $region6: #{reconstructor_forward.6} parent=0 // loop_footer
    %s12 = sadd.s32 1, %s8
  $region7: #{reconstructor_forward.6} parent=0 // loop_footer_branch
    %7 = sbr.rel target = $region3
  $region8: #{reconstructor_forward.6} parent=0 // loop_exit
    _

// kernel: tile.8
$region0: #{tile.8}
  #allocation0 [shape = 's32[1]{0}', space=sflag, size = 0x4, scoped, tag = 'scoped memory for tile.8']
  %s0 = inlined_call_operand.vmem [shape: f32[3], index: 0, kind: input, shape index: {}]
  %s1 = inlined_call_operand.vmem [shape: f32[4,3], index: 1, kind: output, shape index: {}]
  // Predicated region
  $region2: #{tile.8} parent=0 // pred_check
    _
  $region3: #{tile.8} parent=0 // pred_check_branch
    %3 = sbr.rel (0) target = $region5
  $region4: #{tile.8} parent=0 // pred_region
    _
  $region5: #{tile.8} parent=0 // pred_fallthru
    _
  %v4 = vld [vmem:[%s0] ss:$0 sm:$0xff]
  %5 = vst [vmem:[%s1] sm:$0xf] %v4

// kernel: tile.0
$region0: #{tile.0}
  %s0 = inlined_call_operand.vmem [shape: f32[4,3], index: 0, kind: input, shape index: {}]
  %s1 = inlined_call_operand.vmem [shape: f32[12,1], index: 1, kind: output, shape index: {}]
  $region1: #{tile.0} parent=0
    #allocation0 [shape = 'u8[4096]{0}', space=vmem, size = 0x1000, scoped, tag = 'scoped mem for input reshape']
    %s3 = sshllo.u32 0, 4
    %v4 = vld [vmem:[%s0] sm:%s3]
    %5 = vst [vmem:[#allocation0] sm:%s3] %v4
    %v6 = vld [vmem:[#allocation0] sm:$0xf]
    %vm7 = vcmask 7168
    %8 = vst.msk [vmem:[%s1] ss:$3 sm:$0xf] %vm7, %v6
    %v9 = vld [vmem:[#allocation0] sm:$0xf]
    %10 = vrot.lane.b32.xlu0 %v9, 127
    %v11 = vpop.permute.xlu0 %10
    %vm12 = vcmask 7168
    %s13 = scalar_lea.vmem %s1, 1
    %14 = vst.msk [vmem:[%s13] ss:$3 sm:$0xf] %vm12, %v11
    %v15 = vld [vmem:[#allocation0] sm:$0xf]
    %16 = vrot.lane.b32.xlu0 %v15, 126
    %v17 = vpop.permute.xlu0 %16
    %vm18 = vcmask 7168
    %s19 = scalar_lea.vmem %s1, 2
    %20 = vst.msk [vmem:[%s19] ss:$3 sm:$0xf] %vm18, %v17

// kernel: reconstructor_forward.7
$region0: #{reconstructor_forward.7}
  #allocation0 [shape = 'u32[]', space=smem, size = 0x4, offset = 0x4, fixed_abs, tag = 'smem constant byte address 0x4 - core index']
  #allocation1 [shape = 'u32[144,128]{1,0:T(1,128)}', space=vmem, size = 0x12000, scoped, tag = 'internal scratch']
  %s0 = inlined_call_operand.vmem [shape: bf16[2,32,1024], index: 0, kind: input, shape index: {}]
  %s1 = inlined_call_operand.vmem [shape: bf16[12,32], index: 1, kind: input, shape index: {}]
  %s2 = inlined_call_operand.vmem [shape: f32[12,1], index: 2, kind: input, shape index: {}]
  %s3 = inlined_call_operand.vmem [shape: f32[2,12,1024], index: 3, kind: output, shape index: {}]
  %s4 = sld [smem:[#allocation0]]
  $region45: #{reconstructor_forward.7} parent=0
    _
  %s6 = ssub.s32 1, %s4
  %s7 = scalar_select 0, %s6, %s4
  loop: start=0, step=1, limit=4
  $region2: #{reconstructor_forward.7} parent=0 // loop_pre_header
    _
  $region3: #{reconstructor_forward.7} parent=0 // loop_header
    %s9 = sphi 0, %s13
    %p10 = scmp.ge.s32.totalorder %s9, 4
    %s19 = sphi 0, %s21
    %s22 = sphi 0, %s19
    %s23 = sphi 0, %s22
    %s39 = sphi 0, %s23
    %s43 = sphi 0, %s43
    %s45 = sphi 0, %s43
    %s46 = sphi 0, %s45
    %s60 = sphi 0, %s46
    %s64 = sphi 0, %s64
    %s66 = sphi 0, %s64
    %s67 = sphi 0, %s66
    %s81 = sphi 0, %s67
    %s87 = sphi 0, %s89
    %s90 = sphi 0, %s87
    %s91 = sphi 0, %s90
    %s107 = sphi 0, %s91
  $region4: #{reconstructor_forward.7} parent=0 // loop_header_branch
    %12 = sbr.rel (%p10) target = $region8
  $region5: #{reconstructor_forward.7} parent=0 // loop_body
    %s14 = ssub.s32 %s9, 1
    %s15 = ssub.s32 %s9, 2
    %s16 = sadd.s32 %s9, 1
    %s17 = ssub.s32 %s9, %s16
    %p18 = scmp.eq.s32.totalorder %s17, 0
    %s20 = sadd.s32 %s19, 1
    %s21 = scalar_select %p18, %s19, %s20
    %p24 = pneg %p18
    %p25 = scmp.eq.s32.totalorder %s9, 1
    %p26 = por %p24, %p25
    %p27 = scmp.ne.s32.totalorder %s19, %s22
    %p28 = scmp.eq.s32.totalorder %s9, 0
    %p29 = por %p27, %p28
    %p30 = scmp.ne.s32.totalorder %s19, %s22
    %p31 = scmp.eq.s32.totalorder %s14, 1
    %p32 = por %p30, %p31
    %p33 = scmp.ne.s32.totalorder %s22, %s23
    %p34 = scmp.eq.s32.totalorder %s14, 0
    %p35 = por %p33, %p34
    %p36 = scmp.ne.s32.totalorder %s22, %s23
    %p37 = scmp.eq.s32.totalorder %s15, 1
    %p38 = por %p36, %p37
    %p40 = scmp.ne.s32.totalorder %s23, %s39
    %p41 = scmp.eq.s32.totalorder %s15, 0
    %p42 = por %p40, %p41
    %s44 = sadd.s32 %s43, 1
    %p47 = scmp.eq.s32.totalorder %s9, 1
    %p48 = scmp.ne.s32.totalorder %s43, %s45
    %p49 = scmp.eq.s32.totalorder %s9, 0
    %p50 = por %p48, %p49
    %p51 = scmp.ne.s32.totalorder %s43, %s45
    %p52 = scmp.eq.s32.totalorder %s14, 1
    %p53 = por %p51, %p52
    %p54 = scmp.ne.s32.totalorder %s45, %s46
    %p55 = scmp.eq.s32.totalorder %s14, 0
    %p56 = por %p54, %p55
    %p57 = scmp.ne.s32.totalorder %s45, %s46
    %p58 = scmp.eq.s32.totalorder %s15, 1
    %p59 = por %p57, %p58
    %p61 = scmp.ne.s32.totalorder %s46, %s60
    %p62 = scmp.eq.s32.totalorder %s15, 0
    %p63 = por %p61, %p62
    %s65 = sadd.s32 %s64, 1
    %p68 = scmp.eq.s32.totalorder %s9, 1
    %p69 = scmp.ne.s32.totalorder %s64, %s66
    %p70 = scmp.eq.s32.totalorder %s9, 0
    %p71 = por %p69, %p70
    %p72 = scmp.ne.s32.totalorder %s64, %s66
    %p73 = scmp.eq.s32.totalorder %s14, 1
    %p74 = por %p72, %p73
    %p75 = scmp.ne.s32.totalorder %s66, %s67
    %p76 = scmp.eq.s32.totalorder %s14, 0
    %p77 = por %p75, %p76
    %p78 = scmp.ne.s32.totalorder %s66, %s67
    %p79 = scmp.eq.s32.totalorder %s15, 1
    %p80 = por %p78, %p79
    %p82 = scmp.ne.s32.totalorder %s67, %s81
    %p83 = scmp.eq.s32.totalorder %s15, 0
    %p84 = por %p82, %p83
    %s85 = ssub.s32 %s9, %s16
    %p86 = scmp.eq.s32.totalorder %s85, 0
    %s88 = sadd.s32 %s87, 1
    %s89 = scalar_select %p86, %s87, %s88
    %p92 = pneg %p86
    %p93 = scmp.eq.s32.totalorder %s9, 1
    %p94 = por %p92, %p93
    %p95 = scmp.ne.s32.totalorder %s87, %s90
    %p96 = scmp.eq.s32.totalorder %s9, 0
    %p97 = por %p95, %p96
    %p98 = scmp.ne.s32.totalorder %s87, %s90
    %p99 = scmp.eq.s32.totalorder %s14, 1
    %p100 = por %p98, %p99
    %p101 = scmp.ne.s32.totalorder %s90, %s91
    %p102 = scmp.eq.s32.totalorder %s14, 0
    %p103 = por %p101, %p102
    %p104 = scmp.ne.s32.totalorder %s90, %s91
    %p105 = scmp.eq.s32.totalorder %s15, 1
    %p106 = por %p104, %p105
    %p108 = scmp.ne.s32.totalorder %s91, %s107
    %p109 = scmp.eq.s32.totalorder %s15, 0
    %p110 = por %p108, %p109
    %p111 = scmp.le.s32.totalorder 1, %s9
    %p112 = scmp.lt.s32.totalorder %s9, 3
    %p113 = pnand %p111, %p112
    %p114 = pneg %p113
    // Predicated region
    $region9: #{reconstructor_forward.7} parent=5 // pred_check
      _
    $region10: #{reconstructor_forward.7} parent=5 // pred_check_branch
      %116 = sbr.rel (%p113) target = $region12
    $region11: #{reconstructor_forward.7} parent=5 // pred_region
      %s117 = ssub.s32 %s9, 1
      // Predicated region
      $region13: #{reconstructor_forward.7} parent=11 // pred_check
        %p118 = pneg %p56
      $region14: #{reconstructor_forward.7} parent=11 // pred_check_branch
        %120 = sbr.rel (%p118) target = $region16
      $region15: #{reconstructor_forward.7} parent=11 // pred_region
        _
      $region16: #{reconstructor_forward.7} parent=11 // pred_fallthru
        _
      // Predicated region
      $region17: #{reconstructor_forward.7} parent=11 // pred_check
        %p121 = pneg %p77
      $region18: #{reconstructor_forward.7} parent=11 // pred_check_branch
        %123 = sbr.rel (%p121) target = $region20
      $region19: #{reconstructor_forward.7} parent=11 // pred_region
        _
      $region20: #{reconstructor_forward.7} parent=11 // pred_fallthru
        _
    $region12: #{reconstructor_forward.7} parent=5 // pred_fallthru
      _
    %p124 = scmp.lt.s32.totalorder %s9, 2
    // Predicated region
    $region21: #{reconstructor_forward.7} parent=5 // pred_check
      %p125 = pneg %p124
    $region22: #{reconstructor_forward.7} parent=5 // pred_check_branch
      %127 = sbr.rel (%p125) target = $region24
    $region23: #{reconstructor_forward.7} parent=5 // pred_region
      // Predicated region
      $region25: #{reconstructor_forward.7} parent=23 // pred_check
        %p128 = pneg %p29
      $region26: #{reconstructor_forward.7} parent=23 // pred_check_branch
        %130 = sbr.rel (%p128) target = $region28
      $region27: #{reconstructor_forward.7} parent=23 // pred_region
        %p131 = scmp.lt.s32.totalorder %s9, 1
        %s132 = scalar_select %p131, %s9, 1
        %s133 = smul.addr %s132, 32
        %s134 = smul.addr %s133, 4
        %s135 = scalar_lea.vmem %s0, %s134
      $region28: #{reconstructor_forward.7} parent=23 // pred_fallthru
        _
    $region24: #{reconstructor_forward.7} parent=5 // pred_fallthru
      _
    %p136 = scmp.le.s32.totalorder 1, %s9
    %p137 = scmp.lt.s32.totalorder %s9, 3
    %p138 = pnand %p136, %p137
    %p139 = pneg %p138
    // Predicated region
    $region29: #{reconstructor_forward.7} parent=5 // pred_check
      _
    $region30: #{reconstructor_forward.7} parent=5 // pred_check_branch
      %141 = sbr.rel (%p138) target = $region32
    $region31: #{reconstructor_forward.7} parent=5 // pred_region
      %s142 = ssub.s32 %s9, 1
      %p143 = scmp.lt.s32.totalorder %s14, 1
      %s144 = scalar_select %p143, %s14, 1
      %s145 = smul.addr %s144, 32
      %s146 = smul.addr %s145, 4
      %s147 = scalar_lea.vmem %s0, %s146
      %p148 = pneg %p35
      %p149 = pneg %p32
      %p150 = pneg %p56
      %p151 = pneg %p53
      %p152 = pneg %p77
      %p153 = pneg %p74
      %p154 = pneg %p103
      %p155 = pneg %p100
      %p156 = scmp.lt.s32.totalorder %s14, 1
      %s157 = scalar_select %p156, %s14, 1
      %s158 = smul.addr %s157, 16
      %s159 = smul.addr %s158, 8
      %s160 = scalar_lea.vmem %s3, %s159
      %p161 = scmp.lt.s32.totalorder %s14, 1
      %s162 = scalar_select %p161, %s14, 1
      %s163 = smul.addr %s162, 32
      %s164 = smul.addr %s163, 4
      %s165 = scalar_lea.vmem %s0, %s164
      %p166 = scmp.lt.s32.totalorder %s14, 1
      %s167 = scalar_select %p166, %s14, 1
      %s168 = smul.addr %s167, 16
      %s169 = smul.addr %s168, 8
      %s170 = scalar_lea.vmem %s3, %s169
      %v172 = vld [vmem:[%s1] sm:$0xf]
      %v173 = vld [vmem:[%s1 + $0x4] sm:$0x3]
      %v174 = vld [vmem:[%s165] sm:$0xff]
      %v175 = vld [vmem:[%s165 + $0x8] sm:$0xff]
      %v176 = vld [vmem:[%s165 + $0x10] sm:$0xff]
      %v177 = vld [vmem:[%s165 + $0x18] sm:$0xff]
      %v178 = vld [vmem:[%s165 + $0x20] sm:$0xff]
      %v179 = vld [vmem:[%s165 + $0x28] sm:$0xff]
      %v180 = vld [vmem:[%s165 + $0x30] sm:$0xff]
      %v181 = vld [vmem:[%s165 + $0x38] sm:$0xff]
      %v182 = vld [vmem:[%s165 + $0x40] sm:$0xff]
      %v183 = vld [vmem:[%s165 + $0x48] sm:$0xff]
      %v184 = vld [vmem:[%s165 + $0x50] sm:$0xff]
      %v185 = vld [vmem:[%s165 + $0x58] sm:$0xff]
      %v186 = vld [vmem:[%s165 + $0x60] sm:$0xff]
      %v187 = vld [vmem:[%s165 + $0x68] sm:$0xff]
      %v188 = vld [vmem:[%s165 + $0x70] sm:$0xff]
      %v189 = vld [vmem:[%s165 + $0x78] sm:$0xff]
      %v190 = vld [vmem:[%s2] sm:$0xff]
      %v191 = vld [vmem:[%s2 + $0x8] sm:$0xf]
      %193 = vset.pattern.permute.xlu0 0
      %194 = vperm.xlu0 %193, %v190
      %v195 = vpop.permute.xlu0 %194
      %198 = vset.pattern.permute.xlu0 0
      %199 = vperm.xlu0 %198, %v191
      %v200 = vpop.permute.xlu0 %199
      %v204 = vunpack.c.l.b16 %v172
      %v205 = vunpack.c.l.b16 %v173
      %v206 = vpack.c.b16 %v205, %v204
      %v223 = vunpack.c.l.b16 %v174
      %v224 = vunpack.c.h.b16 %v174
      %v225 = vunpack.c.l.b16 %v175
      %v226 = vunpack.c.h.b16 %v175
      %v227 = vunpack.c.l.b16 %v176
      %v228 = vunpack.c.h.b16 %v176
      %v229 = vunpack.c.l.b16 %v177
      %v230 = vunpack.c.h.b16 %v177
      %v231 = vunpack.c.l.b16 %v178
      %v232 = vunpack.c.h.b16 %v178
      %v233 = vunpack.c.l.b16 %v179
      %v234 = vunpack.c.h.b16 %v179
      %v235 = vunpack.c.l.b16 %v180
      %v236 = vunpack.c.h.b16 %v180
      %v237 = vunpack.c.l.b16 %v181
      %v238 = vunpack.c.h.b16 %v181
      %v239 = vunpack.c.l.b16 %v182
      %v240 = vunpack.c.h.b16 %v182
      %v241 = vunpack.c.l.b16 %v183
      %v242 = vunpack.c.h.b16 %v183
      %v243 = vunpack.c.l.b16 %v184
      %v244 = vunpack.c.h.b16 %v184
      %v245 = vunpack.c.l.b16 %v185
      %v246 = vunpack.c.h.b16 %v185
      %v247 = vunpack.c.l.b16 %v186
      %v248 = vunpack.c.h.b16 %v186
      %v249 = vunpack.c.l.b16 %v187
      %v250 = vunpack.c.h.b16 %v187
      %v251 = vunpack.c.l.b16 %v188
      %v252 = vunpack.c.h.b16 %v188
      %v253 = vunpack.c.l.b16 %v189
      %v254 = vunpack.c.h.b16 %v189
      %v255 = vpack.c.b16 %v231, %v223
      %v256 = vpack.c.b16 %v232, %v224
      %v257 = vpack.c.b16 %v233, %v225
      %v258 = vpack.c.b16 %v234, %v226
      %v259 = vpack.c.b16 %v235, %v227
      %v260 = vpack.c.b16 %v236, %v228
      %v261 = vpack.c.b16 %v237, %v229
      %v262 = vpack.c.b16 %v238, %v230
      %v263 = vpack.c.b16 %v247, %v239
      %v264 = vpack.c.b16 %v248, %v240
      %v265 = vpack.c.b16 %v249, %v241
      %v266 = vpack.c.b16 %v250, %v242
      %v267 = vpack.c.b16 %v251, %v243
      %v268 = vpack.c.b16 %v252, %v244
      %v269 = vpack.c.b16 %v253, %v245
      %v270 = vpack.c.b16 %v254, %v246
      %vm287 = vcmask 261120
      %v289 = vsel %vm287, %v206, 0
      %291 = vmatprep.subr.bf16.mxu0 %v256
      %292 = vmatpush1.bf16.msra.mxu0 %v255
      %293 = vmatprep.subr.bf16.mxu0 %v264
      %294 = vmatpush1.bf16.msra.mxu0 %v263
      %295 = vmatprep.subr.bf16.mxu0 0
      %296 = vmatpush1.bf16.msra.mxu0 0
      %297 = vmatprep.subr.bf16.mxu0 0
      %298 = vmatpush1.bf16.msra.mxu0 0
      %299 = vmatprep.subr.bf16.mxu0 0
      %300 = vmatpush1.bf16.msra.mxu0 0
      %301 = vmatprep.subr.bf16.mxu0 0
      %302 = vmatpush1.bf16.msra.mxu0 0
      %303 = vmatprep.subr.bf16.mxu0 0
      %304 = vmatpush1.bf16.msra.mxu0 0
      %305 = vmatprep.subr.bf16.mxu0 0
      %306 = vmatpush1.bf16.msra.mxu0 0
      %307 = vmatprep.subr.bf16.mxu0 0
      %308 = vmatpush1.bf16.msra.mxu0 0
      %309 = vmatprep.subr.bf16.mxu0 0
      %310 = vmatpush1.bf16.msra.mxu0 0
      %311 = vmatprep.subr.bf16.mxu0 0
      %312 = vmatpush1.bf16.msra.mxu0 0
      %313 = vmatprep.subr.bf16.mxu0 0
      %314 = vmatpush1.bf16.msra.mxu0 0
      %315 = vmatprep.subr.bf16.mxu0 0
      %316 = vmatpush1.bf16.msra.mxu0 0
      %317 = vmatprep.subr.bf16.mxu0 0
      %318 = vmatpush1.bf16.msra.mxu0 0
      %319 = vmatprep.subr.bf16.mxu0 0
      %320 = vmatpush1.bf16.msra.mxu0 0
      %321 = vmatprep.subr.bf16.mxu0 0
      %322 = vmatpush1.bf16.msra.mxu0 0
      %323 = vmatprep.mubr.bf16.mxu0 0
      %324 = vmatmul.mubr.bf16.gmra.mrb[0].mxu0 %v289
      %v325 = vpop.f32.mrb[0].mxu0
      %v326 = vadd.f32 %v195, %v325
      %v327 = vpop.f32.mrb[0].mxu0
      %v328 = vadd.f32 %v195, %v327
      %v329 = vpop.f32.mrb[0].mxu0
      %v330 = vadd.f32 %v200, %v329
      %v331 = vpop.f32.mrb[0].mxu0
      %v332 = vadd.f32 %v200, %v331
      %333 = vdwg.mxu0
      %334 = vmatprep.subr.bf16.mxu0 %v258
      %335 = vmatpush1.bf16.msra.mxu0 %v257
      %336 = vmatprep.subr.bf16.mxu0 %v266
      %337 = vmatpush1.bf16.msra.mxu0 %v265
      %338 = vmatprep.subr.bf16.mxu0 0
      %339 = vmatpush1.bf16.msra.mxu0 0
      %340 = vmatprep.subr.bf16.mxu0 0
      %341 = vmatpush1.bf16.msra.mxu0 0
      %342 = vmatprep.subr.bf16.mxu0 0
      %343 = vmatpush1.bf16.msra.mxu0 0
      %344 = vmatprep.subr.bf16.mxu0 0
      %345 = vmatpush1.bf16.msra.mxu0 0
      %346 = vmatprep.subr.bf16.mxu0 0
      %347 = vmatpush1.bf16.msra.mxu0 0
      %348 = vmatprep.subr.bf16.mxu0 0
      %349 = vmatpush1.bf16.msra.mxu0 0
      %350 = vmatprep.subr.bf16.mxu0 0
      %351 = vmatpush1.bf16.msra.mxu0 0
      %352 = vmatprep.subr.bf16.mxu0 0
      %353 = vmatpush1.bf16.msra.mxu0 0
      %354 = vmatprep.subr.bf16.mxu0 0
      %355 = vmatpush1.bf16.msra.mxu0 0
      %356 = vmatprep.subr.bf16.mxu0 0
      %357 = vmatpush1.bf16.msra.mxu0 0
      %358 = vmatprep.subr.bf16.mxu0 0
      %359 = vmatpush1.bf16.msra.mxu0 0
      %360 = vmatprep.subr.bf16.mxu0 0
      %361 = vmatpush1.bf16.msra.mxu0 0
      %362 = vmatprep.subr.bf16.mxu0 0
      %363 = vmatpush1.bf16.msra.mxu0 0
      %364 = vmatprep.subr.bf16.mxu0 0
      %365 = vmatpush1.bf16.msra.mxu0 0
      %366 = vmatprep.mubr.bf16.mxu0 0
      %367 = vmatmul.mubr.bf16.gmra.mrb[0].mxu0 %v289
      %v368 = vpop.f32.mrb[0].mxu0
      %v369 = vadd.f32 %v195, %v368
      %v370 = vpop.f32.mrb[0].mxu0
      %v371 = vadd.f32 %v195, %v370
      %v372 = vpop.f32.mrb[0].mxu0
      %v373 = vadd.f32 %v200, %v372
      %v374 = vpop.f32.mrb[0].mxu0
      %v375 = vadd.f32 %v200, %v374
      %376 = vdwg.mxu0
      %377 = vmatprep.subr.bf16.mxu0 %v260
      %378 = vmatpush1.bf16.msra.mxu0 %v259
      %379 = vmatprep.subr.bf16.mxu0 %v268
      %380 = vmatpush1.bf16.msra.mxu0 %v267
      %381 = vmatprep.subr.bf16.mxu0 0
      %382 = vmatpush1.bf16.msra.mxu0 0
      %383 = vmatprep.subr.bf16.mxu0 0
      %384 = vmatpush1.bf16.msra.mxu0 0
      %385 = vmatprep.subr.bf16.mxu0 0
      %386 = vmatpush1.bf16.msra.mxu0 0
      %387 = vmatprep.subr.bf16.mxu0 0
      %388 = vmatpush1.bf16.msra.mxu0 0
      %389 = vmatprep.subr.bf16.mxu0 0
      %390 = vmatpush1.bf16.msra.mxu0 0
      %391 = vmatprep.subr.bf16.mxu0 0
      %392 = vmatpush1.bf16.msra.mxu0 0
      %393 = vmatprep.subr.bf16.mxu0 0
      %394 = vmatpush1.bf16.msra.mxu0 0
      %395 = vmatprep.subr.bf16.mxu0 0
      %396 = vmatpush1.bf16.msra.mxu0 0
      %397 = vmatprep.subr.bf16.mxu0 0
      %398 = vmatpush1.bf16.msra.mxu0 0
      %399 = vmatprep.subr.bf16.mxu0 0
      %400 = vmatpush1.bf16.msra.mxu0 0
      %401 = vmatprep.subr.bf16.mxu0 0
      %402 = vmatpush1.bf16.msra.mxu0 0
      %403 = vmatprep.subr.bf16.mxu0 0
      %404 = vmatpush1.bf16.msra.mxu0 0
      %405 = vmatprep.subr.bf16.mxu0 0
      %406 = vmatpush1.bf16.msra.mxu0 0
      %407 = vmatprep.subr.bf16.mxu0 0
      %408 = vmatpush1.bf16.msra.mxu0 0
      %409 = vmatprep.mubr.bf16.mxu0 0
      %410 = vmatmul.mubr.bf16.gmra.mrb[0].mxu0 %v289
      %v411 = vpop.f32.mrb[0].mxu0
      %v412 = vadd.f32 %v195, %v411
      %v413 = vpop.f32.mrb[0].mxu0
      %v414 = vadd.f32 %v195, %v413
      %v415 = vpop.f32.mrb[0].mxu0
      %v416 = vadd.f32 %v200, %v415
      %v417 = vpop.f32.mrb[0].mxu0
      %v418 = vadd.f32 %v200, %v417
      %419 = vdwg.mxu0
      %420 = vmatprep.subr.bf16.mxu0 %v262
      %421 = vmatpush1.bf16.msra.mxu0 %v261
      %422 = vmatprep.subr.bf16.mxu0 %v270
      %423 = vmatpush1.bf16.msra.mxu0 %v269
      %424 = vmatprep.subr.bf16.mxu0 0
      %425 = vmatpush1.bf16.msra.mxu0 0
      %426 = vmatprep.subr.bf16.mxu0 0
      %427 = vmatpush1.bf16.msra.mxu0 0
      %428 = vmatprep.subr.bf16.mxu0 0
      %429 = vmatpush1.bf16.msra.mxu0 0
      %430 = vmatprep.subr.bf16.mxu0 0
      %431 = vmatpush1.bf16.msra.mxu0 0
      %432 = vmatprep.subr.bf16.mxu0 0
      %433 = vmatpush1.bf16.msra.mxu0 0
      %434 = vmatprep.subr.bf16.mxu0 0
      %435 = vmatpush1.bf16.msra.mxu0 0
      %436 = vmatprep.subr.bf16.mxu0 0
      %437 = vmatpush1.bf16.msra.mxu0 0
      %438 = vmatprep.subr.bf16.mxu0 0
      %439 = vmatpush1.bf16.msra.mxu0 0
      %440 = vmatprep.subr.bf16.mxu0 0
      %441 = vmatpush1.bf16.msra.mxu0 0
      %442 = vmatprep.subr.bf16.mxu0 0
      %443 = vmatpush1.bf16.msra.mxu0 0
      %444 = vmatprep.subr.bf16.mxu0 0
      %445 = vmatpush1.bf16.msra.mxu0 0
      %446 = vmatprep.subr.bf16.mxu0 0
      %447 = vmatpush1.bf16.msra.mxu0 0
      %448 = vmatprep.subr.bf16.mxu0 0
      %449 = vmatpush1.bf16.msra.mxu0 0
      %450 = vmatprep.subr.bf16.mxu0 0
      %451 = vmatpush1.bf16.msra.mxu0 0
      %452 = vmatprep.mubr.bf16.mxu0 0
      %453 = vmatmul.mubr.bf16.gmra.mrb[0].mxu0 %v289
      %v454 = vpop.f32.mrb[0].mxu0
      %v455 = vadd.f32 %v195, %v454
      %v456 = vpop.f32.mrb[0].mxu0
      %v457 = vadd.f32 %v195, %v456
      %v458 = vpop.f32.mrb[0].mxu0
      %v459 = vadd.f32 %v200, %v458
      %v460 = vpop.f32.mrb[0].mxu0
      %v461 = vadd.f32 %v200, %v460
      %462 = vdwg.mxu0
      %v463 = vsub.f32 0.0, %v326
      %v464 = vsub.f32 0.0, %v328
      %v465 = vsub.f32 0.0, %v369
      %v466 = vsub.f32 0.0, %v371
      %v467 = vsub.f32 0.0, %v412
      %v468 = vsub.f32 0.0, %v414
      %v469 = vsub.f32 0.0, %v455
      %v470 = vsub.f32 0.0, %v457
      %v471 = vsub.f32 0.0, %v330
      %v472 = vsub.f32 0.0, %v332
      %v473 = vsub.f32 0.0, %v373
      %v474 = vsub.f32 0.0, %v375
      %v475 = vsub.f32 0.0, %v416
      %v476 = vsub.f32 0.0, %v418
      %v477 = vsub.f32 0.0, %v459
      %v478 = vsub.f32 0.0, %v461
      %v479 = vmul.f32 %v463, 1.442695
      %v480 = vpow.pop %v479
      %v481 = vmul.f32 %v464, 1.442695
      %v482 = vpow.pop %v481
      %v483 = vmul.f32 %v465, 1.442695
      %v484 = vpow.pop %v483
      %v485 = vmul.f32 %v466, 1.442695
      %v486 = vpow.pop %v485
      %v487 = vmul.f32 %v467, 1.442695
      %v488 = vpow.pop %v487
      %v489 = vmul.f32 %v468, 1.442695
      %v490 = vpow.pop %v489
      %v491 = vmul.f32 %v469, 1.442695
      %v492 = vpow.pop %v491
      %v493 = vmul.f32 %v470, 1.442695
      %v494 = vpow.pop %v493
      %v495 = vmul.f32 %v471, 1.442695
      %v496 = vpow.pop %v495
      %v497 = vmul.f32 %v472, 1.442695
      %v498 = vpow.pop %v497
      %v499 = vmul.f32 %v473, 1.442695
      %v500 = vpow.pop %v499
      %v501 = vmul.f32 %v474, 1.442695
      %v502 = vpow.pop %v501
      %v503 = vmul.f32 %v475, 1.442695
      %v504 = vpow.pop %v503
      %v505 = vmul.f32 %v476, 1.442695
      %v506 = vpow.pop %v505
      %v507 = vmul.f32 %v477, 1.442695
      %v508 = vpow.pop %v507
      %v509 = vmul.f32 %v478, 1.442695
      %v510 = vpow.pop %v509
      %v511 = vadd.f32 %v480, 1.0
      %v512 = vadd.f32 %v482, 1.0
      %v513 = vadd.f32 %v484, 1.0
      %v514 = vadd.f32 %v486, 1.0
      %v515 = vadd.f32 %v488, 1.0
      %v516 = vadd.f32 %v490, 1.0
      %v517 = vadd.f32 %v492, 1.0
      %v518 = vadd.f32 %v494, 1.0
      %v519 = vadd.f32 %v496, 1.0
      %v520 = vadd.f32 %v498, 1.0
      %v521 = vadd.f32 %v500, 1.0
      %v522 = vadd.f32 %v502, 1.0
      %v523 = vadd.f32 %v504, 1.0
      %v524 = vadd.f32 %v506, 1.0
      %v525 = vadd.f32 %v508, 1.0
      %v526 = vadd.f32 %v510, 1.0
      %v527 = vrcp.pop %v511
      %v528 = vrcp.pop %v512
      %v529 = vrcp.pop %v513
      %v530 = vrcp.pop %v514
      %v531 = vrcp.pop %v515
      %v532 = vrcp.pop %v516
      %v533 = vrcp.pop %v517
      %v534 = vrcp.pop %v518
      %v535 = vrcp.pop %v519
      %v536 = vrcp.pop %v520
      %v537 = vrcp.pop %v521
      %v538 = vrcp.pop %v522
      %v539 = vrcp.pop %v523
      %v540 = vrcp.pop %v524
      %v541 = vrcp.pop %v525
      %v542 = vrcp.pop %v526
      %543 = vst [vmem:[%s170] sm:$0xff] %v527
      %544 = vst [vmem:[%s170 + $0x8] sm:$0xff] %v528
      %545 = vst [vmem:[%s170 + $0x10] sm:$0xff] %v529
      %546 = vst [vmem:[%s170 + $0x18] sm:$0xff] %v530
      %547 = vst [vmem:[%s170 + $0x20] sm:$0xff] %v531
      %548 = vst [vmem:[%s170 + $0x28] sm:$0xff] %v532
      %549 = vst [vmem:[%s170 + $0x30] sm:$0xff] %v533
      %550 = vst [vmem:[%s170 + $0x38] sm:$0xff] %v534
      %551 = vst [vmem:[%s170 + $0x40] sm:$0xf] %v535
      %552 = vst [vmem:[%s170 + $0x48] sm:$0xf] %v536
      %553 = vst [vmem:[%s170 + $0x50] sm:$0xf] %v537
      %554 = vst [vmem:[%s170 + $0x58] sm:$0xf] %v538
      %555 = vst [vmem:[%s170 + $0x60] sm:$0xf] %v539
      %556 = vst [vmem:[%s170 + $0x68] sm:$0xf] %v540
      %557 = vst [vmem:[%s170 + $0x70] sm:$0xf] %v541
      %558 = vst [vmem:[%s170 + $0x78] sm:$0xf] %v542
      %p559 = scmp.lt.s32.totalorder %s14, 1
      %s560 = scalar_select %p559, %s14, 1
      %s561 = smul.addr %s560, 16
      %s562 = smul.addr %s561, 8
      %s563 = scalar_lea.vmem %s3, %s562
      // Predicated region
      $region33: #{reconstructor_forward.7} parent=31 // pred_check
        %p564 = pneg %p100
      $region34: #{reconstructor_forward.7} parent=31 // pred_check_branch
        %566 = sbr.rel (%p564) target = $region36
      $region35: #{reconstructor_forward.7} parent=31 // pred_region
        _
      $region36: #{reconstructor_forward.7} parent=31 // pred_fallthru
        _
    $region32: #{reconstructor_forward.7} parent=5 // pred_fallthru
      _
    %p567 = scmp.le.s32.totalorder 2, %s9
    // Predicated region
    $region37: #{reconstructor_forward.7} parent=5 // pred_check
      %p568 = pneg %p567
    $region38: #{reconstructor_forward.7} parent=5 // pred_check_branch
      %570 = sbr.rel (%p568) target = $region40
    $region39: #{reconstructor_forward.7} parent=5 // pred_region
      %s571 = ssub.s32 %s9, 2
      // Predicated region
      $region41: #{reconstructor_forward.7} parent=39 // pred_check
        %p572 = pneg %p106
      $region42: #{reconstructor_forward.7} parent=39 // pred_check_branch
        %574 = sbr.rel (%p572) target = $region44
      $region43: #{reconstructor_forward.7} parent=39 // pred_region
        %p575 = scmp.lt.s32.totalorder %s15, 1
        %s576 = scalar_select %p575, %s15, 1
        %s577 = smul.addr %s576, 16
        %s578 = smul.addr %s577, 8
        %s579 = scalar_lea.vmem %s3, %s578
      $region44: #{reconstructor_forward.7} parent=39 // pred_fallthru
        _
    $region40: #{reconstructor_forward.7} parent=5 // pred_fallthru
      _
  $region6: #{reconstructor_forward.7} parent=0 // loop_footer
    %s13 = sadd.s32 1, %s9
  $region7: #{reconstructor_forward.7} parent=0 // loop_footer_branch
    %8 = sbr.rel target = $region3
  $region8: #{reconstructor_forward.7} parent=0 // loop_exit
    _

</llo_original>
